<compile_context>
chip_gen: v6e
topology: v6e:2x2x1
jax: 0.10.0
libtpu: 0.0.40
codegen_flags: <defaults>
</compile_context>

<pallas_src>
import math

import numpy as np
import jax
import jax.numpy as jnp
from jax.experimental import pallas as pl
from jax.experimental.pallas import tpu as pltpu


# ---------------------------------------------------------------------------
# Host-side (trace-time, numpy) construction of the small fixed spatial operators.
# Orientation: applied as  act @ M  with act rows = (batch, chan) and act lanes =
# flattened h-major spatial positions.
# ---------------------------------------------------------------------------
def _conv_tap_matrices(h_in, w_in, stride, pad):
    """One-hot tap matrices of a 3x3 conv (replication pad); (9, P_in, P_out)."""
    h_out = (h_in + 2 * pad - 3) // stride + 1
    w_out = (w_in + 2 * pad - 3) // stride + 1
    taps = np.zeros((9, h_in * w_in, h_out * w_out), np.float32)
    for kh in range(3):
        for kw in range(3):
            t = kh * 3 + kw
            for i in range(h_out):
                si = min(max(i * stride + kh - pad, 0), h_in - 1)
                for j in range(w_out):
                    sj = min(max(j * stride + kw - pad, 0), w_in - 1)
                    taps[t, si * w_in + sj, i * w_out + j] = 1.0
    return taps


def _smooth_matrix(h, w):
    """Fixed [[1,2,1],[2,4,2],[1,2,1]]/16 blur with replication pad; S[out, in]."""
    k = np.array([[1., 2., 1.], [2., 4., 2.], [1., 2., 1.]], np.float32) / 16.0
    s = np.zeros((h * w, h * w), np.float32)
    for i in range(h):
        for j in range(w):
            for kh in range(3):
                for kw in range(3):
                    si = min(max(i + kh - 1, 0), h - 1)
                    sj = min(max(j + kw - 1, 0), w - 1)
                    s[i * w + j, si * w + sj] += k[kh, kw]
    return s


def _bicubic_half_matrix(n_in):
    """F.interpolate(size=n_in//2, mode='bicubic', align_corners=False), 1-D factor.

    Every output sits at fractional offset 0.5, so the 4-tap cubic (a=-0.75)
    weights are constant; edge taps are index-clamped.
    """
    n_out = n_in // 2
    wts = (-0.09375, 0.59375, 0.59375, -0.09375)
    d = np.zeros((n_out, n_in), np.float32)
    for i in range(n_out):
        for wt, off in zip(wts, (-1, 0, 1, 2)):
            d[i, min(max(2 * i + off, 0), n_in - 1)] += wt
    return d


def _adaptive_pool_matrix(n_in, n_out):
    """nn.AdaptiveAvgPool2d window rule: [floor(i*in/out), ceil((i+1)*in/out))."""
    p = np.zeros((n_out, n_in), np.float32)
    for i in range(n_out):
        s = (i * n_in) // n_out
        e = -((-(i + 1) * n_in) // n_out)
        p[i, s:e] = 1.0 / (e - s)
    return p


# ---------------------------------------------------------------------------
# Packed-operand layouts (review item: collapse ~29 operands to a handful).
# ---------------------------------------------------------------------------
_COLS = ("b1", "a1", "b2", "a2", "bd", "ad", "br",
         "bs1", "as1", "bs2", "as2", "bf1", "af1", "bfo")


def _weight_layout(batch, cin, cout):
    """Lane offsets of every channel-mix matrix inside the single weight slab."""
    ri, ro = batch * cin, batch * cout
    assert 9 * ri <= 128 and 256 + 9 * ro + ri + 2 * ro <= 512, "slab layout overflow"
    lay = {
        "wc1": (0, ri, 9 * ri),                 # block conv1 chanmix (taps on K)
        "wc2": (128, ro, 9 * ri),               # block conv2 chanmix
        "wcd": (256, ro, 9 * ro),               # down-sample conv chanmix
        "wcr": (256 + 9 * ro, ro, ri),          # residual 1x1 conv
        "wf1": (256 + 9 * ro + ri, ro, ro),     # SE linear 1
        "wfo": (256 + 9 * ro + ri + ro, ro, ro),  # SE linear out
        "ws1": (512, ro, 9 * ro),               # SE conv1 chanmix
        "ws2": (512 + 9 * ro, ro, 9 * ro),      # SE conv2: 9 blocks of `ro` lanes
    }
    total = -(-(512 + 18 * ro) // 128) * 128
    return lay, total


# ---------------------------------------------------------------------------
# The fused Pallas kernel (single invocation, everything resident in VMEM).
# ---------------------------------------------------------------------------
def _make_kernel(batch, cin, cout, h, w):
    ri, ro = batch * cin, batch * cout
    P, Pd = h * w, (h // 2) * (w // 2)
    wlay, _ = _weight_layout(batch, cin, cout)
    smooth_k = tuple(v / 16.0 for v in (1., 2., 1., 2., 4., 2., 1., 2., 1.))

    def kernel(x_ref, trsel_ref, tps1_ref, wmix_ref, cols_ref, o_ref):
        f32 = jnp.float32
        mm = lambda a, b: jnp.dot(a, b, preferred_element_type=f32)
        prelu = lambda v, a: jnp.where(v >= 0.0, v, v * a)

        def wmat(name):
            off, rr, nn = wlay[name]
            return wmix_ref[0:rr, off:off + nn]

        cols = cols_ref[...]                      # (ro, 16) biases / PReLU slopes

        def colv(name, rows=ro):
            i = _COLS.index(name)
            return cols[0:rows, i:i + 1]

        # -- replication-pad 3x3 tap shifts on the h-major P-lane axis (XLU/VPU) --
        lane = jax.lax.broadcasted_iota(jnp.int32, (1, P), 1)
        jc = lane % w
        j_lo, j_hi = jc == 0, jc == w - 1
        i_lo, i_hi = lane < w, lane >= P - w
        roll = lambda v, s: pltpu.roll(v, s % P, axis=1)

        def shifts9(v):
            """Tap t=kh*3+kw reads v at (clamp(i+kh-1), clamp(j+kw-1))."""
            c = (jnp.where(j_lo, v, roll(v, 1)),      # read j-1
                 v,                                   # read j
                 jnp.where(j_hi, v, roll(v, -1)))     # read j+1
            up = [jnp.where(i_lo, ci, roll(ci, w)) for ci in c]    # read i-1
            dn = [jnp.where(i_hi, ci, roll(ci, -w)) for ci in c]   # read i+1
            return up + list(c) + dn

        def conv3x3(v, wname, b):        # stride-1 replication-pad conv, ONE MXU dot
            return mm(wmat(wname), jnp.concatenate(shifts9(v), axis=0)) + b

        x = x_ref[...]                                              # (B*Cin, P)

        # residual = EqConv1x1(DownSample(x));  Smooth+bicubic/2 folded into TR
        tr, sel = trsel_ref[0:P, :], trsel_ref[P:2 * P, :]          # (P, Pd) each
        r = mm(wmat("wcr"), mm(x, tr)) + colv("br")                 # (B*Cout, Pd)

        # block: [EqConv3x3 pad=1 (replication) + PReLU] x 2
        hh = prelu(conv3x3(x, "wc1", colv("b1", ri)), colv("a1", ri))   # (B*Cin, P)
        hh = prelu(conv3x3(hh, "wc2", colv("b2")), colv("a2"))          # (B*Cout, P)

        # down_sample: Smooth (depthwise, VPU) -> stride-2 conv (= stride-1 roll-conv
        # then even-position pick via the one-hot SEL matrix) -> PReLU
        sm = None
        for kv, sh in zip(smooth_k, shifts9(hh)):
            sm = kv * sh if sm is None else sm + kv * sh                # (B*Cout, P)
        full = mm(wmat("wcd"), jnp.concatenate(shifts9(sm), axis=0))    # (B*Cout, P)
        y = prelu(mm(full, sel) + colv("bd"), colv("ad"))               # (B*Cout, Pd)

        # SEBlock_conv at natural width (AdaptiveAvgPool2d(5) folded into tps1 taps)
        s_taps = [mm(y, tps1_ref[t]) for t in range(9)]                 # 9 x (B*Cout, 9)
        s = mm(wmat("ws1"), jnp.concatenate(s_taps, axis=0)) + colv("bs1")
        s = prelu(s, colv("as1"))                                       # (B*Cout, 9)
        o2, rr2, _ = wlay["ws2"]
        acc = colv("bs2")
        for t in range(9):                       # 3x3 valid conv on 3x3 -> 1x1
            w_t = wmix_ref[0:rr2, o2 + ro * t:o2 + ro * (t + 1)]
            acc = acc + mm(w_t, s[:, t:t + 1])
        s = prelu(acc, colv("as2"))                                     # (B*Cout, 1)
        s = prelu(mm(wmat("wf1"), s) + colv("bf1"), colv("af1"))        # EqLinear+PReLU
        s = jax.nn.sigmoid(mm(wmat("wfo"), s) + colv("bfo"))            # EqLinear+Sigmoid

        # out = down * se + residual   (reference adds plainly; no 1/sqrt(2) scale)
        out = y * s + r                                                 # (B*Cout, Pd)
        # duplicate to 2*Pd lanes -> one full-lane unmasked store; sliced outside
        o_ref[...] = jnp.concatenate([out, out], axis=1)

    return kernel


# ---------------------------------------------------------------------------
# Parameter packing: fold equalized scales, batch-kron, fixed resamplers and
# pack everything into 4 operands (trsel, tps1, wmix, cols).
# ---------------------------------------------------------------------------
def pack_params(p, *, batch, cin, cout, img):
    H = W = img
    Hd, Wd = H // 2, W // 2
    P, Pd = H * W, Hd * Wd
    ri, ro = batch * cin, batch * cout

    # fixed spatial operators (all small) ------------------------------------
    S = _smooth_matrix(H, W)                                    # (P, P) [out, in]
    D = np.kron(_bicubic_half_matrix(H), _bicubic_half_matrix(W))
    TR = (D @ S).T                                              # (P, Pd) Smooth->bicubic/2
    SEL = np.zeros((P, Pd), np.float32)                         # even-row/even-col pick
    for i in range(Hd):
        for j in range(Wd):
            SEL[(2 * i) * W + (2 * j), i * Wd + j] = 1.0
    TP = np.kron(_adaptive_pool_matrix(Hd, 5), _adaptive_pool_matrix(Wd, 5)).T  # (Pd,25)
    TS1 = _conv_tap_matrices(5, 5, stride=1, pad=0)             # (9, 25, 9)
    TPS1 = np.stack([TP @ TS1[t] for t in range(9)])            # (9, Pd, 9)

    eye_b = np.eye(batch, dtype=np.float32)

    def conv_cat(wt, scale):       # (co,ci,3,3) -> (B*co, 9*B*ci); tap t = K block t
        wt = np.asarray(wt, np.float32) * scale
        return np.concatenate([np.kron(eye_b, wt[:, :, kh, kw])
                               for kh in range(3) for kw in range(3)], axis=1)

    def col(v):
        return np.tile(np.asarray(v, np.float32), batch).reshape(-1, 1)

    c3_in, c3_out = 1.0 / math.sqrt(cin * 9), 1.0 / math.sqrt(cout * 9)

    # one (B*Cout, 16) slab for every bias / PReLU slope ----------------------
    cols_slab = np.zeros((ro, 16), np.float32)
    col_src = dict(
        b1=(p["b1_b"], ri), a1=(p["b1_a"], ri),
        b2=(p["b2_b"], ro), a2=(p["b2_a"], ro),
        bd=(p["d_b"], ro), ad=(p["d_a"], ro), br=(p["res_b"], ro),
        bs1=(p["se_c1_b"], ro), as1=(p["se_c1_a"], ro),
        bs2=(p["se_c2_b"], ro), as2=(p["se_c2_a"], ro),
        bf1=(p["se_f1_b"], ro), af1=(p["se_f1_a"], ro), bfo=(p["se_fo_b"], ro),
    )
    for name, (v, rr) in col_src.items():
        idx = _COLS.index(name)
        cols_slab[0:rr, idx:idx + 1] = col(v)

    # one (B*Cout, ~896) slab for every channel-mix matrix --------------------
    wlay, w_lanes = _weight_layout(batch, cin, cout)
    w_slab = np.zeros((ro, w_lanes), np.float32)
    w_src = dict(
        wc1=conv_cat(p["b1_w"], c3_in),
        wc2=conv_cat(p["b2_w"], c3_in),
        wcd=conv_cat(p["d_w"], c3_out),
        wcr=np.kron(eye_b, np.asarray(p["res_w"], np.float32)[:, :, 0, 0] / math.sqrt(cin)),
        wf1=np.kron(eye_b, np.asarray(p["se_f1_w"], np.float32) / math.sqrt(cout)),
        wfo=np.kron(eye_b, np.asarray(p["se_fo_w"], np.float32) / math.sqrt(cout)),
        ws1=conv_cat(p["se_c1_w"], c3_out),
        ws2=conv_cat(p["se_c2_w"], c3_out),
    )
    for name, mat in w_src.items():
        off, rr, nn = wlay[name]
        assert mat.shape == (rr, nn), (name, mat.shape, (rr, nn))
        w_slab[0:rr, off:off + nn] = mat

    packed = dict(trsel=np.concatenate([TR, SEL], axis=0),      # (2P, Pd)
                  tps1=TPS1, wmix=w_slab, cols=cols_slab)
    return {k: jnp.asarray(v, jnp.float32) for k, v in packed.items()}


# ---------------------------------------------------------------------------
# Forward wrapper: one pallas_call, no grid, all operands resident in VMEM.
# ---------------------------------------------------------------------------
def discriminator_block_forward(x_nchw, kp):
    b, cin, h, w = x_nchw.shape
    hd, wd = h // 2, w // 2
    cout = kp["wmix"].shape[0] // b
    x2 = x_nchw.reshape(b * cin, h * w).astype(jnp.float32)     # lane-dense layout

    args = (x2, kp["trsel"], kp["tps1"], kp["wmix"], kp["cols"])
    in_bytes = sum(int(np.prod(a.shape)) * a.dtype.itemsize for a in args)
    out_rows, out_lanes = b * cout, 2 * hd * wd
    cost = pl.CostEstimate(flops=4_000_000, transcendentals=64,
                           bytes_accessed=in_bytes + out_rows * out_lanes * 4)

    out = pl.pallas_call(
        _make_kernel(b, cin, cout, h, w),
        out_shape=jax.ShapeDtypeStruct((out_rows, out_lanes), jnp.float32),
        cost_estimate=cost,
    )(*args)
    # TODO(synk): inside a full network, prefetch kp["wmix"]/kp["trsel"] with a
    # cross-pallas_call DMA future, and only add a 2-way "parallel" batch grid
    # (2nd TensorCore on v7x) once B*Cout is large enough to amortize the
    # duplicated parameter prologue.
    return out[:, :hd * wd].reshape(b, cout, hd, wd)            # NCHW


# ---------------------------------------------------------------------------
# Deterministic parameter init matching the module's __init__:
# normal(0,1) conv/linear weights, normal(0,1) conv biases, zero linear biases
# (bias=0.0 multiplier), PReLU slopes 0.25.
# ---------------------------------------------------------------------------
def init_params(key, cin, cout):
    ks = jax.random.split(key, 14)
    n = lambda k, s: jax.random.normal(k, s, jnp.float32)
    return {
        "b1_w": n(ks[0], (cin, cin, 3, 3)), "b1_b": n(ks[1], (cin,)),
        "b1_a": jnp.full((cin,), 0.25, jnp.float32),
        "b2_w": n(ks[2], (cout, cin, 3, 3)), "b2_b": n(ks[3], (cout,)),
        "b2_a": jnp.full((cout,), 0.25, jnp.float32),
        "res_w": n(ks[4], (cout, cin, 1, 1)), "res_b": n(ks[5], (cout,)),
        "d_w": n(ks[6], (cout, cout, 3, 3)), "d_b": n(ks[7], (cout,)),
        "d_a": jnp.full((cout,), 0.25, jnp.float32),
        "se_c1_w": n(ks[8], (cout, cout, 3, 3)), "se_c1_b": n(ks[9], (cout,)),
        "se_c1_a": jnp.full((cout,), 0.25, jnp.float32),
        "se_c2_w": n(ks[10], (cout, cout, 3, 3)), "se_c2_b": n(ks[11], (cout,)),
        "se_c2_a": jnp.full((cout,), 0.25, jnp.float32),
        "se_f1_w": n(ks[12], (cout, cout)), "se_f1_b": jnp.zeros((cout,), jnp.float32),
        "se_f1_a": jnp.full((cout,), 0.25, jnp.float32),
        "se_fo_w": n(ks[13], (cout, cout)), "se_fo_b": jnp.zeros((cout,), jnp.float32),
    }


if __name__ == "__main__":
    key = jax.random.PRNGKey(0)
    kx, kparam = jax.random.split(key)
    B, CIN, COUT, IMG = 2, 4, 8, 16
    x = jax.random.normal(kx, (B, CIN, IMG, IMG), jnp.float32)   # NCHW
    params = init_params(kparam, CIN, COUT)
    packed = pack_params(params, batch=B, cin=CIN, cout=COUT, img=IMG)

    fwd = jax.jit(discriminator_block_forward)
    out = fwd(x, packed)
    jax.block_until_ready(out)
    assert out.shape == (B, COUT, IMG // 2, IMG // 2)
    assert bool(jnp.all(jnp.isfinite(out)))
    print("KERNEL_OK")
</pallas_src>

<mosaic_0001>
module attributes {stable_mosaic.version = 11 : i64} {
  func.func @kernel(%arg0: memref<8x256xf32, #tpu.memory_space<vmem>>, %arg1: memref<512x64xf32, #tpu.memory_space<vmem>>, %arg2: memref<9x64x9xf32, #tpu.memory_space<vmem>>, %arg3: memref<16x896xf32, #tpu.memory_space<vmem>>, %arg4: memref<16x16xf32, #tpu.memory_space<vmem>>, %arg5: memref<16x128xf32, #tpu.memory_space<vmem>>) attributes {dimension_semantics = [], scalar_prefetch = 0 : i64, scratch_operands = 0 : i64, tpu.core_type = #tpu.core_type<tc>} {
    %c0 = arith.constant 0 : index
    %c0_0 = arith.constant 0 : index
    %0 = vector.load %arg4[%c0, %c0_0] : memref<16x16xf32, #tpu.memory_space<vmem>>, vector<16x16xf32>
    %1 = tpu.iota {dimensions = array<i32: 1>} : vector<1x256xi32>
    %c16_i32 = arith.constant 16 : i32
    %c0_i32 = arith.constant 0 : i32
    %2 = arith.cmpi eq, %c16_i32, %c0_i32 : i32
    %c1_i32 = arith.constant 1 : i32
    %3 = arith.select %2, %c1_i32, %c16_i32 : i32
    %4 = vector.broadcast %3 : i32 to vector<1x256xi32>
    %5 = arith.remsi %1, %4 : vector<1x256xi32>
    %c0_i32_1 = arith.constant 0 : i32
    %6 = vector.broadcast %c0_i32_1 : i32 to vector<1x256xi32>
    %7 = arith.cmpi ne, %5, %6 : vector<1x256xi32>
    %c0_i32_2 = arith.constant 0 : i32
    %8 = vector.broadcast %c0_i32_2 : i32 to vector<1x256xi32>
    %9 = arith.cmpi slt, %5, %8 : vector<1x256xi32>
    %c0_i32_3 = arith.constant 0 : i32
    %10 = arith.cmpi slt, %3, %c0_i32_3 : i32
    %11 = vector.broadcast %10 : i1 to vector<1x256xi1>
    %12 = vector.broadcast %11 : vector<1x256xi1> to vector<1x256xi1>
    %13 = arith.xori %9, %12 : vector<1x256xi1>
    %14 = arith.andi %13, %7 : vector<1x256xi1>
    %15 = vector.broadcast %3 : i32 to vector<1x256xi32>
    %16 = arith.addi %5, %15 : vector<1x256xi32>
    %17 = arith.select %14, %16, %5 : vector<1x256xi1>, vector<1x256xi32>
    %c0_i32_4 = arith.constant 0 : i32
    %18 = vector.broadcast %c0_i32_4 : i32 to vector<1x256xi32>
    %19 = arith.cmpi eq, %17, %18 : vector<1x256xi32>
    %c15_i32 = arith.constant 15 : i32
    %20 = vector.broadcast %c15_i32 : i32 to vector<1x256xi32>
    %21 = arith.cmpi eq, %17, %20 : vector<1x256xi32>
    %c16_i32_5 = arith.constant 16 : i32
    %22 = vector.broadcast %c16_i32_5 : i32 to vector<1x256xi32>
    %23 = arith.cmpi slt, %1, %22 : vector<1x256xi32>
    %c240_i32 = arith.constant 240 : i32
    %24 = vector.broadcast %c240_i32 : i32 to vector<1x256xi32>
    %25 = arith.cmpi sge, %1, %24 : vector<1x256xi32>
    %c0_6 = arith.constant 0 : index
    %c0_7 = arith.constant 0 : index
    %26 = vector.load %arg0[%c0_6, %c0_7] : memref<8x256xf32, #tpu.memory_space<vmem>>, vector<8x256xf32>
    %c0_8 = arith.constant 0 : index
    %c0_9 = arith.constant 0 : index
    %27 = vector.load %arg1[%c0_8, %c0_9] : memref<512x64xf32, #tpu.memory_space<vmem>>, vector<256x64xf32>
    %c256 = arith.constant 256 : index
    %c0_10 = arith.constant 0 : index
    %28 = vector.load %arg1[%c256, %c0_10] : memref<512x64xf32, #tpu.memory_space<vmem>>, vector<256x64xf32>
    %c0_11 = arith.constant 0 : index
    %c400 = arith.constant 400 : index
    %29 = vector.load %arg3[%c0_11, %c400] : memref<16x896xf32, #tpu.memory_space<vmem>>, vector<16x8xf32>
    %cst = arith.constant dense<0.000000e+00> : vector<8x64xf32>
    %30 = tpu.matmul %26, %27, %cst {dimension_numbers = #tpu.dot_dimension_numbers<[1], [0], [0], [1], [0, 0, 1, 1], [], []>} : vector<8x256xf32>, vector<256x64xf32>, vector<8x64xf32> -> vector<8x64xf32>
    %cst_12 = arith.constant dense<0.000000e+00> : vector<16x64xf32>
    %31 = tpu.matmul %29, %30, %cst_12 {dimension_numbers = #tpu.dot_dimension_numbers<[1], [0], [0], [1], [0, 0, 1, 1], [], []>} : vector<16x8xf32>, vector<8x64xf32>, vector<16x64xf32> -> vector<16x64xf32>
    %32 = vector.extract_strided_slice %0 {offsets = [0, 6], sizes = [16, 1], strides = [1, 1]} : vector<16x16xf32> to vector<16x1xf32>
    %33 = vector.broadcast %32 : vector<16x1xf32> to vector<16x64xf32>
    %34 = arith.addf %31, %33 : vector<16x64xf32>
    %35 = vector.extract_strided_slice %0 {offsets = [0, 0], sizes = [8, 1], strides = [1, 1]} : vector<16x16xf32> to vector<8x1xf32>
    %c0_13 = arith.constant 0 : index
    %c0_14 = arith.constant 0 : index
    %36 = vector.load %arg3[%c0_13, %c0_14] : memref<16x896xf32, #tpu.memory_space<vmem>>, vector<8x72xf32>
    %c1_i32_15 = arith.constant 1 : i32
    %37 = tpu.dynamic_rotate %26 by %c1_i32_15 dim 1 : vector<8x256xf32>, i32 -> vector<8x256xf32>
    %38 = vector.shape_cast %19 : vector<1x256xi1> to vector<1x256xi1>
    %39 = vector.broadcast %38 : vector<1x256xi1> to vector<8x256xi1>
    %40 = arith.select %39, %26, %37 : vector<8x256xi1>, vector<8x256xf32>
    %c255_i32 = arith.constant 255 : i32
    %41 = tpu.dynamic_rotate %26 by %c255_i32 dim 1 : vector<8x256xf32>, i32 -> vector<8x256xf32>
    %42 = vector.shape_cast %21 : vector<1x256xi1> to vector<1x256xi1>
    %43 = vector.broadcast %42 : vector<1x256xi1> to vector<8x256xi1>
    %44 = arith.select %43, %26, %41 : vector<8x256xi1>, vector<8x256xf32>
    %c16_i32_16 = arith.constant 16 : i32
    %45 = tpu.dynamic_rotate %40 by %c16_i32_16 dim 1 : vector<8x256xf32>, i32 -> vector<8x256xf32>
    %46 = vector.shape_cast %23 : vector<1x256xi1> to vector<1x256xi1>
    %47 = vector.broadcast %46 : vector<1x256xi1> to vector<8x256xi1>
    %48 = arith.select %47, %40, %45 : vector<8x256xi1>, vector<8x256xf32>
    %c16_i32_17 = arith.constant 16 : i32
    %49 = tpu.dynamic_rotate %26 by %c16_i32_17 dim 1 : vector<8x256xf32>, i32 -> vector<8x256xf32>
    %50 = vector.shape_cast %23 : vector<1x256xi1> to vector<1x256xi1>
    %51 = vector.broadcast %50 : vector<1x256xi1> to vector<8x256xi1>
    %52 = arith.select %51, %26, %49 : vector<8x256xi1>, vector<8x256xf32>
    %c16_i32_18 = arith.constant 16 : i32
    %53 = tpu.dynamic_rotate %44 by %c16_i32_18 dim 1 : vector<8x256xf32>, i32 -> vector<8x256xf32>
    %54 = vector.shape_cast %23 : vector<1x256xi1> to vector<1x256xi1>
    %55 = vector.broadcast %54 : vector<1x256xi1> to vector<8x256xi1>
    %56 = arith.select %55, %44, %53 : vector<8x256xi1>, vector<8x256xf32>
    %c240_i32_19 = arith.constant 240 : i32
    %57 = tpu.dynamic_rotate %40 by %c240_i32_19 dim 1 : vector<8x256xf32>, i32 -> vector<8x256xf32>
    %58 = vector.shape_cast %25 : vector<1x256xi1> to vector<1x256xi1>
    %59 = vector.broadcast %58 : vector<1x256xi1> to vector<8x256xi1>
    %60 = arith.select %59, %40, %57 : vector<8x256xi1>, vector<8x256xf32>
    %c240_i32_20 = arith.constant 240 : i32
    %61 = tpu.dynamic_rotate %26 by %c240_i32_20 dim 1 : vector<8x256xf32>, i32 -> vector<8x256xf32>
    %62 = vector.shape_cast %25 : vector<1x256xi1> to vector<1x256xi1>
    %63 = vector.broadcast %62 : vector<1x256xi1> to vector<8x256xi1>
    %64 = arith.select %63, %26, %61 : vector<8x256xi1>, vector<8x256xf32>
    %c240_i32_21 = arith.constant 240 : i32
    %65 = tpu.dynamic_rotate %44 by %c240_i32_21 dim 1 : vector<8x256xf32>, i32 -> vector<8x256xf32>
    %66 = vector.shape_cast %25 : vector<1x256xi1> to vector<1x256xi1>
    %67 = vector.broadcast %66 : vector<1x256xi1> to vector<8x256xi1>
    %68 = arith.select %67, %44, %65 : vector<8x256xi1>, vector<8x256xf32>
    %69 = tpu.concatenate %48, %52, %56, %40, %26, %44, %60, %64, %68 in 0 : vector<8x256xf32>, vector<8x256xf32>, vector<8x256xf32>, vector<8x256xf32>, vector<8x256xf32>, vector<8x256xf32>, vector<8x256xf32>, vector<8x256xf32>, vector<8x256xf32> -> vector<72x256xf32>
    %cst_22 = arith.constant dense<0.000000e+00> : vector<8x256xf32>
    %70 = tpu.matmul %36, %69, %cst_22 {dimension_numbers = #tpu.dot_dimension_numbers<[1], [0], [0], [1], [0, 0, 1, 1], [], []>} : vector<8x72xf32>, vector<72x256xf32>, vector<8x256xf32> -> vector<8x256xf32>
    %71 = vector.broadcast %35 : vector<8x1xf32> to vector<8x256xf32>
    %72 = arith.addf %70, %71 : vector<8x256xf32>
    %73 = vector.extract_strided_slice %0 {offsets = [0, 1], sizes = [8, 1], strides = [1, 1]} : vector<16x16xf32> to vector<8x1xf32>
    %cst_23 = arith.constant 0.000000e+00 : f32
    %74 = vector.broadcast %cst_23 : f32 to vector<8x256xf32>
    %75 = arith.cmpf oge, %72, %74 : vector<8x256xf32>
    %76 = vector.broadcast %73 : vector<8x1xf32> to vector<8x256xf32>
    %77 = arith.mulf %72, %76 : vector<8x256xf32>
    %78 = arith.select %75, %72, %77 : vector<8x256xi1>, vector<8x256xf32>
    %79 = vector.extract_strided_slice %0 {offsets = [0, 2], sizes = [16, 1], strides = [1, 1]} : vector<16x16xf32> to vector<16x1xf32>
    %c0_24 = arith.constant 0 : index
    %c128 = arith.constant 128 : index
    %80 = vector.load %arg3[%c0_24, %c128] : memref<16x896xf32, #tpu.memory_space<vmem>>, vector<16x72xf32>
    %c1_i32_25 = arith.constant 1 : i32
    %81 = tpu.dynamic_rotate %78 by %c1_i32_25 dim 1 : vector<8x256xf32>, i32 -> vector<8x256xf32>
    %82 = vector.shape_cast %19 : vector<1x256xi1> to vector<1x256xi1>
    %83 = vector.broadcast %82 : vector<1x256xi1> to vector<8x256xi1>
    %84 = arith.select %83, %78, %81 : vector<8x256xi1>, vector<8x256xf32>
    %c255_i32_26 = arith.constant 255 : i32
    %85 = tpu.dynamic_rotate %78 by %c255_i32_26 dim 1 : vector<8x256xf32>, i32 -> vector<8x256xf32>
    %86 = vector.shape_cast %21 : vector<1x256xi1> to vector<1x256xi1>
    %87 = vector.broadcast %86 : vector<1x256xi1> to vector<8x256xi1>
    %88 = arith.select %87, %78, %85 : vector<8x256xi1>, vector<8x256xf32>
    %c16_i32_27 = arith.constant 16 : i32
    %89 = tpu.dynamic_rotate %84 by %c16_i32_27 dim 1 : vector<8x256xf32>, i32 -> vector<8x256xf32>
    %90 = vector.shape_cast %23 : vector<1x256xi1> to vector<1x256xi1>
    %91 = vector.broadcast %90 : vector<1x256xi1> to vector<8x256xi1>
    %92 = arith.select %91, %84, %89 : vector<8x256xi1>, vector<8x256xf32>
    %c16_i32_28 = arith.constant 16 : i32
    %93 = tpu.dynamic_rotate %78 by %c16_i32_28 dim 1 : vector<8x256xf32>, i32 -> vector<8x256xf32>
    %94 = vector.shape_cast %23 : vector<1x256xi1> to vector<1x256xi1>
    %95 = vector.broadcast %94 : vector<1x256xi1> to vector<8x256xi1>
    %96 = arith.select %95, %78, %93 : vector<8x256xi1>, vector<8x256xf32>
    %c16_i32_29 = arith.constant 16 : i32
    %97 = tpu.dynamic_rotate %88 by %c16_i32_29 dim 1 : vector<8x256xf32>, i32 -> vector<8x256xf32>
    %98 = vector.shape_cast %23 : vector<1x256xi1> to vector<1x256xi1>
    %99 = vector.broadcast %98 : vector<1x256xi1> to vector<8x256xi1>
    %100 = arith.select %99, %88, %97 : vector<8x256xi1>, vector<8x256xf32>
    %c240_i32_30 = arith.constant 240 : i32
    %101 = tpu.dynamic_rotate %84 by %c240_i32_30 dim 1 : vector<8x256xf32>, i32 -> vector<8x256xf32>
    %102 = vector.shape_cast %25 : vector<1x256xi1> to vector<1x256xi1>
    %103 = vector.broadcast %102 : vector<1x256xi1> to vector<8x256xi1>
    %104 = arith.select %103, %84, %101 : vector<8x256xi1>, vector<8x256xf32>
    %c240_i32_31 = arith.constant 240 : i32
    %105 = tpu.dynamic_rotate %78 by %c240_i32_31 dim 1 : vector<8x256xf32>, i32 -> vector<8x256xf32>
    %106 = vector.shape_cast %25 : vector<1x256xi1> to vector<1x256xi1>
    %107 = vector.broadcast %106 : vector<1x256xi1> to vector<8x256xi1>
    %108 = arith.select %107, %78, %105 : vector<8x256xi1>, vector<8x256xf32>
    %c240_i32_32 = arith.constant 240 : i32
    %109 = tpu.dynamic_rotate %88 by %c240_i32_32 dim 1 : vector<8x256xf32>, i32 -> vector<8x256xf32>
    %110 = vector.shape_cast %25 : vector<1x256xi1> to vector<1x256xi1>
    %111 = vector.broadcast %110 : vector<1x256xi1> to vector<8x256xi1>
    %112 = arith.select %111, %88, %109 : vector<8x256xi1>, vector<8x256xf32>
    %113 = tpu.concatenate %92, %96, %100, %84, %78, %88, %104, %108, %112 in 0 : vector<8x256xf32>, vector<8x256xf32>, vector<8x256xf32>, vector<8x256xf32>, vector<8x256xf32>, vector<8x256xf32>, vector<8x256xf32>, vector<8x256xf32>, vector<8x256xf32> -> vector<72x256xf32>
    %cst_33 = arith.constant dense<0.000000e+00> : vector<16x256xf32>
    %114 = tpu.matmul %80, %113, %cst_33 {dimension_numbers = #tpu.dot_dimension_numbers<[1], [0], [0], [1], [0, 0, 1, 1], [], []>} : vector<16x72xf32>, vector<72x256xf32>, vector<16x256xf32> -> vector<16x256xf32>
    %115 = vector.broadcast %79 : vector<16x1xf32> to vector<16x256xf32>
    %116 = arith.addf %114, %115 : vector<16x256xf32>
    %117 = vector.extract_strided_slice %0 {offsets = [0, 3], sizes = [16, 1], strides = [1, 1]} : vector<16x16xf32> to vector<16x1xf32>
    %cst_34 = arith.constant 0.000000e+00 : f32
    %118 = vector.broadcast %cst_34 : f32 to vector<16x256xf32>
    %119 = arith.cmpf oge, %116, %118 : vector<16x256xf32>
    %120 = vector.broadcast %117 : vector<16x1xf32> to vector<16x256xf32>
    %121 = arith.mulf %116, %120 : vector<16x256xf32>
    %122 = arith.select %119, %116, %121 : vector<16x256xi1>, vector<16x256xf32>
    %c1_i32_35 = arith.constant 1 : i32
    %123 = tpu.dynamic_rotate %122 by %c1_i32_35 dim 1 : vector<16x256xf32>, i32 -> vector<16x256xf32>
    %124 = vector.shape_cast %19 : vector<1x256xi1> to vector<1x256xi1>
    %125 = vector.broadcast %124 : vector<1x256xi1> to vector<16x256xi1>
    %126 = arith.select %125, %122, %123 : vector<16x256xi1>, vector<16x256xf32>
    %c255_i32_36 = arith.constant 255 : i32
    %127 = tpu.dynamic_rotate %122 by %c255_i32_36 dim 1 : vector<16x256xf32>, i32 -> vector<16x256xf32>
    %128 = vector.shape_cast %21 : vector<1x256xi1> to vector<1x256xi1>
    %129 = vector.broadcast %128 : vector<1x256xi1> to vector<16x256xi1>
    %130 = arith.select %129, %122, %127 : vector<16x256xi1>, vector<16x256xf32>
    %c16_i32_37 = arith.constant 16 : i32
    %131 = tpu.dynamic_rotate %126 by %c16_i32_37 dim 1 : vector<16x256xf32>, i32 -> vector<16x256xf32>
    %132 = vector.shape_cast %23 : vector<1x256xi1> to vector<1x256xi1>
    %133 = vector.broadcast %132 : vector<1x256xi1> to vector<16x256xi1>
    %134 = arith.select %133, %126, %131 : vector<16x256xi1>, vector<16x256xf32>
    %c16_i32_38 = arith.constant 16 : i32
    %135 = tpu.dynamic_rotate %122 by %c16_i32_38 dim 1 : vector<16x256xf32>, i32 -> vector<16x256xf32>
    %136 = vector.shape_cast %23 : vector<1x256xi1> to vector<1x256xi1>
    %137 = vector.broadcast %136 : vector<1x256xi1> to vector<16x256xi1>
    %138 = arith.select %137, %122, %135 : vector<16x256xi1>, vector<16x256xf32>
    %c16_i32_39 = arith.constant 16 : i32
    %139 = tpu.dynamic_rotate %130 by %c16_i32_39 dim 1 : vector<16x256xf32>, i32 -> vector<16x256xf32>
    %140 = vector.shape_cast %23 : vector<1x256xi1> to vector<1x256xi1>
    %141 = vector.broadcast %140 : vector<1x256xi1> to vector<16x256xi1>
    %142 = arith.select %141, %130, %139 : vector<16x256xi1>, vector<16x256xf32>
    %c240_i32_40 = arith.constant 240 : i32
    %143 = tpu.dynamic_rotate %126 by %c240_i32_40 dim 1 : vector<16x256xf32>, i32 -> vector<16x256xf32>
    %144 = vector.shape_cast %25 : vector<1x256xi1> to vector<1x256xi1>
    %145 = vector.broadcast %144 : vector<1x256xi1> to vector<16x256xi1>
    %146 = arith.select %145, %126, %143 : vector<16x256xi1>, vector<16x256xf32>
    %c240_i32_41 = arith.constant 240 : i32
    %147 = tpu.dynamic_rotate %122 by %c240_i32_41 dim 1 : vector<16x256xf32>, i32 -> vector<16x256xf32>
    %148 = vector.shape_cast %25 : vector<1x256xi1> to vector<1x256xi1>
    %149 = vector.broadcast %148 : vector<1x256xi1> to vector<16x256xi1>
    %150 = arith.select %149, %122, %147 : vector<16x256xi1>, vector<16x256xf32>
    %c240_i32_42 = arith.constant 240 : i32
    %151 = tpu.dynamic_rotate %130 by %c240_i32_42 dim 1 : vector<16x256xf32>, i32 -> vector<16x256xf32>
    %152 = vector.shape_cast %25 : vector<1x256xi1> to vector<1x256xi1>
    %153 = vector.broadcast %152 : vector<1x256xi1> to vector<16x256xi1>
    %154 = arith.select %153, %130, %151 : vector<16x256xi1>, vector<16x256xf32>
    %cst_43 = arith.constant 6.250000e-02 : f32
    %155 = vector.broadcast %cst_43 : f32 to vector<16x256xf32>
    %156 = arith.mulf %155, %134 : vector<16x256xf32>
    %cst_44 = arith.constant 1.250000e-01 : f32
    %157 = vector.broadcast %cst_44 : f32 to vector<16x256xf32>
    %158 = arith.mulf %157, %138 : vector<16x256xf32>
    %159 = arith.addf %156, %158 : vector<16x256xf32>
    %cst_45 = arith.constant 6.250000e-02 : f32
    %160 = vector.broadcast %cst_45 : f32 to vector<16x256xf32>
    %161 = arith.mulf %160, %142 : vector<16x256xf32>
    %162 = arith.addf %159, %161 : vector<16x256xf32>
    %cst_46 = arith.constant 1.250000e-01 : f32
    %163 = vector.broadcast %cst_46 : f32 to vector<16x256xf32>
    %164 = arith.mulf %163, %126 : vector<16x256xf32>
    %165 = arith.addf %162, %164 : vector<16x256xf32>
    %cst_47 = arith.constant 2.500000e-01 : f32
    %166 = vector.broadcast %cst_47 : f32 to vector<16x256xf32>
    %167 = arith.mulf %166, %122 : vector<16x256xf32>
    %168 = arith.addf %165, %167 : vector<16x256xf32>
    %cst_48 = arith.constant 1.250000e-01 : f32
    %169 = vector.broadcast %cst_48 : f32 to vector<16x256xf32>
    %170 = arith.mulf %169, %130 : vector<16x256xf32>
    %171 = arith.addf %168, %170 : vector<16x256xf32>
    %cst_49 = arith.constant 6.250000e-02 : f32
    %172 = vector.broadcast %cst_49 : f32 to vector<16x256xf32>
    %173 = arith.mulf %172, %146 : vector<16x256xf32>
    %174 = arith.addf %171, %173 : vector<16x256xf32>
    %cst_50 = arith.constant 1.250000e-01 : f32
    %175 = vector.broadcast %cst_50 : f32 to vector<16x256xf32>
    %176 = arith.mulf %175, %150 : vector<16x256xf32>
    %177 = arith.addf %174, %176 : vector<16x256xf32>
    %cst_51 = arith.constant 6.250000e-02 : f32
    %178 = vector.broadcast %cst_51 : f32 to vector<16x256xf32>
    %179 = arith.mulf %178, %154 : vector<16x256xf32>
    %180 = arith.addf %177, %179 : vector<16x256xf32>
    %c0_52 = arith.constant 0 : index
    %c256_53 = arith.constant 256 : index
    %181 = vector.load %arg3[%c0_52, %c256_53] : memref<16x896xf32, #tpu.memory_space<vmem>>, vector<16x144xf32>
    %c1_i32_54 = arith.constant 1 : i32
    %182 = tpu.dynamic_rotate %180 by %c1_i32_54 dim 1 : vector<16x256xf32>, i32 -> vector<16x256xf32>
    %183 = vector.shape_cast %19 : vector<1x256xi1> to vector<1x256xi1>
    %184 = vector.broadcast %183 : vector<1x256xi1> to vector<16x256xi1>
    %185 = arith.select %184, %180, %182 : vector<16x256xi1>, vector<16x256xf32>
    %c255_i32_55 = arith.constant 255 : i32
    %186 = tpu.dynamic_rotate %180 by %c255_i32_55 dim 1 : vector<16x256xf32>, i32 -> vector<16x256xf32>
    %187 = vector.shape_cast %21 : vector<1x256xi1> to vector<1x256xi1>
    %188 = vector.broadcast %187 : vector<1x256xi1> to vector<16x256xi1>
    %189 = arith.select %188, %180, %186 : vector<16x256xi1>, vector<16x256xf32>
    %c16_i32_56 = arith.constant 16 : i32
    %190 = tpu.dynamic_rotate %185 by %c16_i32_56 dim 1 : vector<16x256xf32>, i32 -> vector<16x256xf32>
    %191 = vector.shape_cast %23 : vector<1x256xi1> to vector<1x256xi1>
    %192 = vector.broadcast %191 : vector<1x256xi1> to vector<16x256xi1>
    %193 = arith.select %192, %185, %190 : vector<16x256xi1>, vector<16x256xf32>
    %c16_i32_57 = arith.constant 16 : i32
    %194 = tpu.dynamic_rotate %180 by %c16_i32_57 dim 1 : vector<16x256xf32>, i32 -> vector<16x256xf32>
    %195 = vector.shape_cast %23 : vector<1x256xi1> to vector<1x256xi1>
    %196 = vector.broadcast %195 : vector<1x256xi1> to vector<16x256xi1>
    %197 = arith.select %196, %180, %194 : vector<16x256xi1>, vector<16x256xf32>
    %c16_i32_58 = arith.constant 16 : i32
    %198 = tpu.dynamic_rotate %189 by %c16_i32_58 dim 1 : vector<16x256xf32>, i32 -> vector<16x256xf32>
    %199 = vector.shape_cast %23 : vector<1x256xi1> to vector<1x256xi1>
    %200 = vector.broadcast %199 : vector<1x256xi1> to vector<16x256xi1>
    %201 = arith.select %200, %189, %198 : vector<16x256xi1>, vector<16x256xf32>
    %c240_i32_59 = arith.constant 240 : i32
    %202 = tpu.dynamic_rotate %185 by %c240_i32_59 dim 1 : vector<16x256xf32>, i32 -> vector<16x256xf32>
    %203 = vector.shape_cast %25 : vector<1x256xi1> to vector<1x256xi1>
    %204 = vector.broadcast %203 : vector<1x256xi1> to vector<16x256xi1>
    %205 = arith.select %204, %185, %202 : vector<16x256xi1>, vector<16x256xf32>
    %c240_i32_60 = arith.constant 240 : i32
    %206 = tpu.dynamic_rotate %180 by %c240_i32_60 dim 1 : vector<16x256xf32>, i32 -> vector<16x256xf32>
    %207 = vector.shape_cast %25 : vector<1x256xi1> to vector<1x256xi1>
    %208 = vector.broadcast %207 : vector<1x256xi1> to vector<16x256xi1>
    %209 = arith.select %208, %180, %206 : vector<16x256xi1>, vector<16x256xf32>
    %c240_i32_61 = arith.constant 240 : i32
    %210 = tpu.dynamic_rotate %189 by %c240_i32_61 dim 1 : vector<16x256xf32>, i32 -> vector<16x256xf32>
    %211 = vector.shape_cast %25 : vector<1x256xi1> to vector<1x256xi1>
    %212 = vector.broadcast %211 : vector<1x256xi1> to vector<16x256xi1>
    %213 = arith.select %212, %189, %210 : vector<16x256xi1>, vector<16x256xf32>
    %214 = tpu.concatenate %193, %197, %201, %185, %180, %189, %205, %209, %213 in 0 : vector<16x256xf32>, vector<16x256xf32>, vector<16x256xf32>, vector<16x256xf32>, vector<16x256xf32>, vector<16x256xf32>, vector<16x256xf32>, vector<16x256xf32>, vector<16x256xf32> -> vector<144x256xf32>
    %cst_62 = arith.constant dense<0.000000e+00> : vector<16x256xf32>
    %215 = tpu.matmul %181, %214, %cst_62 {dimension_numbers = #tpu.dot_dimension_numbers<[1], [0], [0], [1], [0, 0, 1, 1], [], []>} : vector<16x144xf32>, vector<144x256xf32>, vector<16x256xf32> -> vector<16x256xf32>
    %cst_63 = arith.constant dense<0.000000e+00> : vector<16x64xf32>
    %216 = tpu.matmul %215, %28, %cst_63 {dimension_numbers = #tpu.dot_dimension_numbers<[1], [0], [0], [1], [0, 0, 1, 1], [], []>} : vector<16x256xf32>, vector<256x64xf32>, vector<16x64xf32> -> vector<16x64xf32>
    %217 = vector.extract_strided_slice %0 {offsets = [0, 4], sizes = [16, 1], strides = [1, 1]} : vector<16x16xf32> to vector<16x1xf32>
    %218 = vector.broadcast %217 : vector<16x1xf32> to vector<16x64xf32>
    %219 = arith.addf %216, %218 : vector<16x64xf32>
    %220 = vector.extract_strided_slice %0 {offsets = [0, 5], sizes = [16, 1], strides = [1, 1]} : vector<16x16xf32> to vector<16x1xf32>
    %cst_64 = arith.constant 0.000000e+00 : f32
    %221 = vector.broadcast %cst_64 : f32 to vector<16x64xf32>
    %222 = arith.cmpf oge, %219, %221 : vector<16x64xf32>
    %223 = vector.broadcast %220 : vector<16x1xf32> to vector<16x64xf32>
    %224 = arith.mulf %219, %223 : vector<16x64xf32>
    %225 = arith.select %222, %219, %224 : vector<16x64xi1>, vector<16x64xf32>
    %c0_65 = arith.constant 0 : index
    %c0_66 = arith.constant 0 : index
    %c0_67 = arith.constant 0 : index
    %226 = vector.load %arg2[%c0_65, %c0_66, %c0_67] : memref<9x64x9xf32, #tpu.memory_space<vmem>>, vector<1x64x9xf32>
    %227 = vector.shape_cast %226 : vector<1x64x9xf32> to vector<64x9xf32>
    %cst_68 = arith.constant dense<0.000000e+00> : vector<16x9xf32>
    %228 = tpu.matmul %225, %227, %cst_68 {dimension_numbers = #tpu.dot_dimension_numbers<[1], [0], [0], [1], [0, 0, 1, 1], [], []>} : vector<16x64xf32>, vector<64x9xf32>, vector<16x9xf32> -> vector<16x9xf32>
    %c1 = arith.constant 1 : index
    %c0_69 = arith.constant 0 : index
    %c0_70 = arith.constant 0 : index
    %229 = vector.load %arg2[%c1, %c0_69, %c0_70] : memref<9x64x9xf32, #tpu.memory_space<vmem>>, vector<1x64x9xf32>
    %230 = vector.shape_cast %229 : vector<1x64x9xf32> to vector<64x9xf32>
    %cst_71 = arith.constant dense<0.000000e+00> : vector<16x9xf32>
    %231 = tpu.matmul %225, %230, %cst_71 {dimension_numbers = #tpu.dot_dimension_numbers<[1], [0], [0], [1], [0, 0, 1, 1], [], []>} : vector<16x64xf32>, vector<64x9xf32>, vector<16x9xf32> -> vector<16x9xf32>
    %c2 = arith.constant 2 : index
    %c0_72 = arith.constant 0 : index
    %c0_73 = arith.constant 0 : index
    %232 = vector.load %arg2[%c2, %c0_72, %c0_73] : memref<9x64x9xf32, #tpu.memory_space<vmem>>, vector<1x64x9xf32>
    %233 = vector.shape_cast %232 : vector<1x64x9xf32> to vector<64x9xf32>
    %cst_74 = arith.constant dense<0.000000e+00> : vector<16x9xf32>
    %234 = tpu.matmul %225, %233, %cst_74 {dimension_numbers = #tpu.dot_dimension_numbers<[1], [0], [0], [1], [0, 0, 1, 1], [], []>} : vector<16x64xf32>, vector<64x9xf32>, vector<16x9xf32> -> vector<16x9xf32>
    %c3 = arith.constant 3 : index
    %c0_75 = arith.constant 0 : index
    %c0_76 = arith.constant 0 : index
    %235 = vector.load %arg2[%c3, %c0_75, %c0_76] : memref<9x64x9xf32, #tpu.memory_space<vmem>>, vector<1x64x9xf32>
    %236 = vector.shape_cast %235 : vector<1x64x9xf32> to vector<64x9xf32>
    %cst_77 = arith.constant dense<0.000000e+00> : vector<16x9xf32>
    %237 = tpu.matmul %225, %236, %cst_77 {dimension_numbers = #tpu.dot_dimension_numbers<[1], [0], [0], [1], [0, 0, 1, 1], [], []>} : vector<16x64xf32>, vector<64x9xf32>, vector<16x9xf32> -> vector<16x9xf32>
    %c4 = arith.constant 4 : index
    %c0_78 = arith.constant 0 : index
    %c0_79 = arith.constant 0 : index
    %238 = vector.load %arg2[%c4, %c0_78, %c0_79] : memref<9x64x9xf32, #tpu.memory_space<vmem>>, vector<1x64x9xf32>
    %239 = vector.shape_cast %238 : vector<1x64x9xf32> to vector<64x9xf32>
    %cst_80 = arith.constant dense<0.000000e+00> : vector<16x9xf32>
    %240 = tpu.matmul %225, %239, %cst_80 {dimension_numbers = #tpu.dot_dimension_numbers<[1], [0], [0], [1], [0, 0, 1, 1], [], []>} : vector<16x64xf32>, vector<64x9xf32>, vector<16x9xf32> -> vector<16x9xf32>
    %c5 = arith.constant 5 : index
    %c0_81 = arith.constant 0 : index
    %c0_82 = arith.constant 0 : index
    %241 = vector.load %arg2[%c5, %c0_81, %c0_82] : memref<9x64x9xf32, #tpu.memory_space<vmem>>, vector<1x64x9xf32>
    %242 = vector.shape_cast %241 : vector<1x64x9xf32> to vector<64x9xf32>
    %cst_83 = arith.constant dense<0.000000e+00> : vector<16x9xf32>
    %243 = tpu.matmul %225, %242, %cst_83 {dimension_numbers = #tpu.dot_dimension_numbers<[1], [0], [0], [1], [0, 0, 1, 1], [], []>} : vector<16x64xf32>, vector<64x9xf32>, vector<16x9xf32> -> vector<16x9xf32>
    %c6 = arith.constant 6 : index
    %c0_84 = arith.constant 0 : index
    %c0_85 = arith.constant 0 : index
    %244 = vector.load %arg2[%c6, %c0_84, %c0_85] : memref<9x64x9xf32, #tpu.memory_space<vmem>>, vector<1x64x9xf32>
    %245 = vector.shape_cast %244 : vector<1x64x9xf32> to vector<64x9xf32>
    %cst_86 = arith.constant dense<0.000000e+00> : vector<16x9xf32>
    %246 = tpu.matmul %225, %245, %cst_86 {dimension_numbers = #tpu.dot_dimension_numbers<[1], [0], [0], [1], [0, 0, 1, 1], [], []>} : vector<16x64xf32>, vector<64x9xf32>, vector<16x9xf32> -> vector<16x9xf32>
    %c7 = arith.constant 7 : index
    %c0_87 = arith.constant 0 : index
    %c0_88 = arith.constant 0 : index
    %247 = vector.load %arg2[%c7, %c0_87, %c0_88] : memref<9x64x9xf32, #tpu.memory_space<vmem>>, vector<1x64x9xf32>
    %248 = vector.shape_cast %247 : vector<1x64x9xf32> to vector<64x9xf32>
    %cst_89 = arith.constant dense<0.000000e+00> : vector<16x9xf32>
    %249 = tpu.matmul %225, %248, %cst_89 {dimension_numbers = #tpu.dot_dimension_numbers<[1], [0], [0], [1], [0, 0, 1, 1], [], []>} : vector<16x64xf32>, vector<64x9xf32>, vector<16x9xf32> -> vector<16x9xf32>
    %c8 = arith.constant 8 : index
    %c0_90 = arith.constant 0 : index
    %c0_91 = arith.constant 0 : index
    %250 = vector.load %arg2[%c8, %c0_90, %c0_91] : memref<9x64x9xf32, #tpu.memory_space<vmem>>, vector<1x64x9xf32>
    %251 = vector.shape_cast %250 : vector<1x64x9xf32> to vector<64x9xf32>
    %cst_92 = arith.constant dense<0.000000e+00> : vector<16x9xf32>
    %252 = tpu.matmul %225, %251, %cst_92 {dimension_numbers = #tpu.dot_dimension_numbers<[1], [0], [0], [1], [0, 0, 1, 1], [], []>} : vector<16x64xf32>, vector<64x9xf32>, vector<16x9xf32> -> vector<16x9xf32>
    %c0_93 = arith.constant 0 : index
    %c512 = arith.constant 512 : index
    %253 = vector.load %arg3[%c0_93, %c512] : memref<16x896xf32, #tpu.memory_space<vmem>>, vector<16x144xf32>
    %254 = tpu.concatenate %228, %231, %234, %237, %240, %243, %246, %249, %252 in 0 : vector<16x9xf32>, vector<16x9xf32>, vector<16x9xf32>, vector<16x9xf32>, vector<16x9xf32>, vector<16x9xf32>, vector<16x9xf32>, vector<16x9xf32>, vector<16x9xf32> -> vector<144x9xf32>
    %cst_94 = arith.constant dense<0.000000e+00> : vector<16x9xf32>
    %255 = tpu.matmul %253, %254, %cst_94 {dimension_numbers = #tpu.dot_dimension_numbers<[1], [0], [0], [1], [0, 0, 1, 1], [], []>} : vector<16x144xf32>, vector<144x9xf32>, vector<16x9xf32> -> vector<16x9xf32>
    %256 = vector.extract_strided_slice %0 {offsets = [0, 7], sizes = [16, 1], strides = [1, 1]} : vector<16x16xf32> to vector<16x1xf32>
    %257 = vector.broadcast %256 : vector<16x1xf32> to vector<16x9xf32>
    %258 = arith.addf %255, %257 : vector<16x9xf32>
    %259 = vector.extract_strided_slice %0 {offsets = [0, 8], sizes = [16, 1], strides = [1, 1]} : vector<16x16xf32> to vector<16x1xf32>
    %cst_95 = arith.constant 0.000000e+00 : f32
    %260 = vector.broadcast %cst_95 : f32 to vector<16x9xf32>
    %261 = arith.cmpf oge, %258, %260 : vector<16x9xf32>
    %262 = vector.broadcast %259 : vector<16x1xf32> to vector<16x9xf32>
    %263 = arith.mulf %258, %262 : vector<16x9xf32>
    %264 = arith.select %261, %258, %263 : vector<16x9xi1>, vector<16x9xf32>
    %265 = vector.extract_strided_slice %0 {offsets = [0, 9], sizes = [16, 1], strides = [1, 1]} : vector<16x16xf32> to vector<16x1xf32>
    %c0_96 = arith.constant 0 : index
    %c656 = arith.constant 656 : index
    %266 = vector.load %arg3[%c0_96, %c656] : memref<16x896xf32, #tpu.memory_space<vmem>>, vector<16x16xf32>
    %267 = vector.extract_strided_slice %264 {offsets = [0, 0], sizes = [16, 1], strides = [1, 1]} : vector<16x9xf32> to vector<16x1xf32>
    %cst_97 = arith.constant dense<0.000000e+00> : vector<16x1xf32>
    %268 = tpu.matmul %266, %267, %cst_97 {dimension_numbers = #tpu.dot_dimension_numbers<[1], [0], [0], [1], [0, 0, 1, 1], [], []>} : vector<16x16xf32>, vector<16x1xf32>, vector<16x1xf32> -> vector<16x1xf32>
    %269 = arith.addf %265, %268 : vector<16x1xf32>
    %c0_98 = arith.constant 0 : index
    %c672 = arith.constant 672 : index
    %270 = vector.load %arg3[%c0_98, %c672] : memref<16x896xf32, #tpu.memory_space<vmem>>, vector<16x16xf32>
    %271 = vector.extract_strided_slice %264 {offsets = [0, 1], sizes = [16, 1], strides = [1, 1]} : vector<16x9xf32> to vector<16x1xf32>
    %cst_99 = arith.constant dense<0.000000e+00> : vector<16x1xf32>
    %272 = tpu.matmul %270, %271, %cst_99 {dimension_numbers = #tpu.dot_dimension_numbers<[1], [0], [0], [1], [0, 0, 1, 1], [], []>} : vector<16x16xf32>, vector<16x1xf32>, vector<16x1xf32> -> vector<16x1xf32>
    %273 = arith.addf %269, %272 : vector<16x1xf32>
    %c0_100 = arith.constant 0 : index
    %c688 = arith.constant 688 : index
    %274 = vector.load %arg3[%c0_100, %c688] : memref<16x896xf32, #tpu.memory_space<vmem>>, vector<16x16xf32>
    %275 = vector.extract_strided_slice %264 {offsets = [0, 2], sizes = [16, 1], strides = [1, 1]} : vector<16x9xf32> to vector<16x1xf32>
    %cst_101 = arith.constant dense<0.000000e+00> : vector<16x1xf32>
    %276 = tpu.matmul %274, %275, %cst_101 {dimension_numbers = #tpu.dot_dimension_numbers<[1], [0], [0], [1], [0, 0, 1, 1], [], []>} : vector<16x16xf32>, vector<16x1xf32>, vector<16x1xf32> -> vector<16x1xf32>
    %277 = arith.addf %273, %276 : vector<16x1xf32>
    %c0_102 = arith.constant 0 : index
    %c704 = arith.constant 704 : index
    %278 = vector.load %arg3[%c0_102, %c704] : memref<16x896xf32, #tpu.memory_space<vmem>>, vector<16x16xf32>
    %279 = vector.extract_strided_slice %264 {offsets = [0, 3], sizes = [16, 1], strides = [1, 1]} : vector<16x9xf32> to vector<16x1xf32>
    %cst_103 = arith.constant dense<0.000000e+00> : vector<16x1xf32>
    %280 = tpu.matmul %278, %279, %cst_103 {dimension_numbers = #tpu.dot_dimension_numbers<[1], [0], [0], [1], [0, 0, 1, 1], [], []>} : vector<16x16xf32>, vector<16x1xf32>, vector<16x1xf32> -> vector<16x1xf32>
    %281 = arith.addf %277, %280 : vector<16x1xf32>
    %c0_104 = arith.constant 0 : index
    %c720 = arith.constant 720 : index
    %282 = vector.load %arg3[%c0_104, %c720] : memref<16x896xf32, #tpu.memory_space<vmem>>, vector<16x16xf32>
    %283 = vector.extract_strided_slice %264 {offsets = [0, 4], sizes = [16, 1], strides = [1, 1]} : vector<16x9xf32> to vector<16x1xf32>
    %cst_105 = arith.constant dense<0.000000e+00> : vector<16x1xf32>
    %284 = tpu.matmul %282, %283, %cst_105 {dimension_numbers = #tpu.dot_dimension_numbers<[1], [0], [0], [1], [0, 0, 1, 1], [], []>} : vector<16x16xf32>, vector<16x1xf32>, vector<16x1xf32> -> vector<16x1xf32>
    %285 = arith.addf %281, %284 : vector<16x1xf32>
    %c0_106 = arith.constant 0 : index
    %c736 = arith.constant 736 : index
    %286 = vector.load %arg3[%c0_106, %c736] : memref<16x896xf32, #tpu.memory_space<vmem>>, vector<16x16xf32>
    %287 = vector.extract_strided_slice %264 {offsets = [0, 5], sizes = [16, 1], strides = [1, 1]} : vector<16x9xf32> to vector<16x1xf32>
    %cst_107 = arith.constant dense<0.000000e+00> : vector<16x1xf32>
    %288 = tpu.matmul %286, %287, %cst_107 {dimension_numbers = #tpu.dot_dimension_numbers<[1], [0], [0], [1], [0, 0, 1, 1], [], []>} : vector<16x16xf32>, vector<16x1xf32>, vector<16x1xf32> -> vector<16x1xf32>
    %289 = arith.addf %285, %288 : vector<16x1xf32>
    %c0_108 = arith.constant 0 : index
    %c752 = arith.constant 752 : index
    %290 = vector.load %arg3[%c0_108, %c752] : memref<16x896xf32, #tpu.memory_space<vmem>>, vector<16x16xf32>
    %291 = vector.extract_strided_slice %264 {offsets = [0, 6], sizes = [16, 1], strides = [1, 1]} : vector<16x9xf32> to vector<16x1xf32>
    %cst_109 = arith.constant dense<0.000000e+00> : vector<16x1xf32>
    %292 = tpu.matmul %290, %291, %cst_109 {dimension_numbers = #tpu.dot_dimension_numbers<[1], [0], [0], [1], [0, 0, 1, 1], [], []>} : vector<16x16xf32>, vector<16x1xf32>, vector<16x1xf32> -> vector<16x1xf32>
    %293 = arith.addf %289, %292 : vector<16x1xf32>
    %c0_110 = arith.constant 0 : index
    %c768 = arith.constant 768 : index
    %294 = vector.load %arg3[%c0_110, %c768] : memref<16x896xf32, #tpu.memory_space<vmem>>, vector<16x16xf32>
    %295 = vector.extract_strided_slice %264 {offsets = [0, 7], sizes = [16, 1], strides = [1, 1]} : vector<16x9xf32> to vector<16x1xf32>
    %cst_111 = arith.constant dense<0.000000e+00> : vector<16x1xf32>
    %296 = tpu.matmul %294, %295, %cst_111 {dimension_numbers = #tpu.dot_dimension_numbers<[1], [0], [0], [1], [0, 0, 1, 1], [], []>} : vector<16x16xf32>, vector<16x1xf32>, vector<16x1xf32> -> vector<16x1xf32>
    %297 = arith.addf %293, %296 : vector<16x1xf32>
    %c0_112 = arith.constant 0 : index
    %c784 = arith.constant 784 : index
    %298 = vector.load %arg3[%c0_112, %c784] : memref<16x896xf32, #tpu.memory_space<vmem>>, vector<16x16xf32>
    %299 = vector.extract_strided_slice %264 {offsets = [0, 8], sizes = [16, 1], strides = [1, 1]} : vector<16x9xf32> to vector<16x1xf32>
    %cst_113 = arith.constant dense<0.000000e+00> : vector<16x1xf32>
    %300 = tpu.matmul %298, %299, %cst_113 {dimension_numbers = #tpu.dot_dimension_numbers<[1], [0], [0], [1], [0, 0, 1, 1], [], []>} : vector<16x16xf32>, vector<16x1xf32>, vector<16x1xf32> -> vector<16x1xf32>
    %301 = arith.addf %297, %300 : vector<16x1xf32>
    %302 = vector.extract_strided_slice %0 {offsets = [0, 10], sizes = [16, 1], strides = [1, 1]} : vector<16x16xf32> to vector<16x1xf32>
    %cst_114 = arith.constant 0.000000e+00 : f32
    %303 = vector.broadcast %cst_114 : f32 to vector<16x1xf32>
    %304 = arith.cmpf oge, %301, %303 : vector<16x1xf32>
    %305 = arith.mulf %301, %302 : vector<16x1xf32>
    %306 = arith.select %304, %301, %305 : vector<16x1xi1>, vector<16x1xf32>
    %c0_115 = arith.constant 0 : index
    %c408 = arith.constant 408 : index
    %307 = vector.load %arg3[%c0_115, %c408] : memref<16x896xf32, #tpu.memory_space<vmem>>, vector<16x16xf32>
    %cst_116 = arith.constant dense<0.000000e+00> : vector<16x1xf32>
    %308 = tpu.matmul %307, %306, %cst_116 {dimension_numbers = #tpu.dot_dimension_numbers<[1], [0], [0], [1], [0, 0, 1, 1], [], []>} : vector<16x16xf32>, vector<16x1xf32>, vector<16x1xf32> -> vector<16x1xf32>
    %309 = vector.extract_strided_slice %0 {offsets = [0, 11], sizes = [16, 1], strides = [1, 1]} : vector<16x16xf32> to vector<16x1xf32>
    %310 = arith.addf %308, %309 : vector<16x1xf32>
    %311 = vector.extract_strided_slice %0 {offsets = [0, 12], sizes = [16, 1], strides = [1, 1]} : vector<16x16xf32> to vector<16x1xf32>
    %cst_117 = arith.constant 0.000000e+00 : f32
    %312 = vector.broadcast %cst_117 : f32 to vector<16x1xf32>
    %313 = arith.cmpf oge, %310, %312 : vector<16x1xf32>
    %314 = arith.mulf %310, %311 : vector<16x1xf32>
    %315 = arith.select %313, %310, %314 : vector<16x1xi1>, vector<16x1xf32>
    %c0_118 = arith.constant 0 : index
    %c424 = arith.constant 424 : index
    %316 = vector.load %arg3[%c0_118, %c424] : memref<16x896xf32, #tpu.memory_space<vmem>>, vector<16x16xf32>
    %cst_119 = arith.constant dense<0.000000e+00> : vector<16x1xf32>
    %317 = tpu.matmul %316, %315, %cst_119 {dimension_numbers = #tpu.dot_dimension_numbers<[1], [0], [0], [1], [0, 0, 1, 1], [], []>} : vector<16x16xf32>, vector<16x1xf32>, vector<16x1xf32> -> vector<16x1xf32>
    %318 = vector.extract_strided_slice %0 {offsets = [0, 13], sizes = [16, 1], strides = [1, 1]} : vector<16x16xf32> to vector<16x1xf32>
    %319 = arith.addf %317, %318 : vector<16x1xf32>
    %320 = arith.negf %319 : vector<16x1xf32>
    %321 = math.exp %320 : vector<16x1xf32>
    %cst_120 = arith.constant 1.000000e+00 : f32
    %322 = vector.broadcast %cst_120 : f32 to vector<16x1xf32>
    %323 = arith.addf %322, %321 : vector<16x1xf32>
    %324 = arith.divf %322, %323 : vector<16x1xf32>
    %325 = vector.broadcast %324 : vector<16x1xf32> to vector<16x64xf32>
    %326 = arith.mulf %225, %325 : vector<16x64xf32>
    %327 = arith.addf %326, %34 : vector<16x64xf32>
    %328 = tpu.concatenate %327, %327 in 1 : vector<16x64xf32>, vector<16x64xf32> -> vector<16x128xf32>
    %c0_121 = arith.constant 0 : index
    %c0_122 = arith.constant 0 : index
    %329 = vector.load %arg5[%c0_121, %c0_122] : memref<16x128xf32, #tpu.memory_space<vmem>>, vector<16x128xf32>
    tpu.vector_store %arg5[%c0_121, %c0_122], %328 {strides = array<i32>} : memref<16x128xf32, #tpu.memory_space<vmem>>, vector<16x128xf32>,
    return
  }
}

</mosaic_0001>

<llo_original>
// kernel: discriminator_block_forward.1
$region0: #{discriminator_block_forward.1}
  #allocation0 [shape = 'u32[]', space=smem, size = 0x4, offset = 0x4, fixed_abs, tag = 'smem constant byte address 0x4 - core index']
  #allocation1 [shape = 'u32[144,128]{1,0:T(1,128)}', space=vmem, size = 0x12000, scoped, tag = 'internal scratch']
  %s0 = inlined_call_operand.vmem [shape: f32[8,256], index: 0, kind: input, shape index: {}]
  %s1 = inlined_call_operand.vmem [shape: f32[512,64], index: 1, kind: input, shape index: {}]
  %s2 = inlined_call_operand.vmem [shape: f32[9,64,9], index: 2, kind: input, shape index: {}]
  %s3 = inlined_call_operand.vmem [shape: f32[16,896], index: 3, kind: input, shape index: {}]
  %s4 = inlined_call_operand.vmem [shape: f32[16,16], index: 4, kind: input, shape index: {}]
  %s5 = inlined_call_operand.vmem [shape: f32[16,128], index: 5, kind: output, shape index: {}]
  %s6 = sld [smem:[#allocation0]]
  $region30: #{discriminator_block_forward.1} parent=0
    _
  %s8 = ssub.s32 1, %s6
  %s9 = scalar_select 0, %s8, %s6
  // Predicated region
  $region2: #{discriminator_block_forward.1} parent=0 // pred_check
    _
  $region3: #{discriminator_block_forward.1} parent=0 // pred_check_branch
    %11 = sbr.rel (0) target = $region5
  $region4: #{discriminator_block_forward.1} parent=0 // pred_region
    _
  $region5: #{discriminator_block_forward.1} parent=0 // pred_fallthru
    _
  // Predicated region
  $region6: #{discriminator_block_forward.1} parent=0 // pred_check
    _
  $region7: #{discriminator_block_forward.1} parent=0 // pred_check_branch
    %13 = sbr.rel (0) target = $region9
  $region8: #{discriminator_block_forward.1} parent=0 // pred_region
    _
  $region9: #{discriminator_block_forward.1} parent=0 // pred_fallthru
    _
  // Predicated region
  $region10: #{discriminator_block_forward.1} parent=0 // pred_check
    _
  $region11: #{discriminator_block_forward.1} parent=0 // pred_check_branch
    %15 = sbr.rel (0) target = $region13
  $region12: #{discriminator_block_forward.1} parent=0 // pred_region
    _
  $region13: #{discriminator_block_forward.1} parent=0 // pred_fallthru
    _
  // Predicated region
  $region14: #{discriminator_block_forward.1} parent=0 // pred_check
    _
  $region15: #{discriminator_block_forward.1} parent=0 // pred_check_branch
    %17 = sbr.rel (0) target = $region17
  $region16: #{discriminator_block_forward.1} parent=0 // pred_region
    _
  $region17: #{discriminator_block_forward.1} parent=0 // pred_fallthru
    _
  // Predicated region
  $region18: #{discriminator_block_forward.1} parent=0 // pred_check
    _
  $region19: #{discriminator_block_forward.1} parent=0 // pred_check_branch
    %19 = sbr.rel (0) target = $region21
  $region20: #{discriminator_block_forward.1} parent=0 // pred_region
    _
  $region21: #{discriminator_block_forward.1} parent=0 // pred_fallthru
    _
  %v20 = vld [vmem:[%s4] sm:$0xff]
  %v21 = vld [vmem:[%s4 + $0x8] sm:$0xff]
  %v22 = vlaneseq
  %v23 = vand.u32 %v22, 127
  %v24 = vadd.s32 %v23, 128
  %vm25 = vcmp.lt.s32.totalorder %v23, 0
  %v26 = vsub.s32 0, %v23
  %v27 = vsel %vm25, %v26, %v23
  %v28 = vshrl.u32 %v27, 4
  %v29 = vand.u32 %v27, 15
  %v30 = vsub.s32 0, %v29
  %v31 = vsel %vm25, %v30, %v29
  %vm32 = vcmp.lt.s32.totalorder %v24, 0
  %v33 = vsub.s32 0, %v24
  %v34 = vsel %vm32, %v33, %v24
  %v35 = vshrl.u32 %v34, 4
  %v36 = vand.u32 %v34, 15
  %v37 = vsub.s32 0, %v36
  %v38 = vsel %vm32, %v37, %v36
  %vm39 = vcmp.ne.s32.totalorder %v31, 0
  %vm40 = vcmp.ne.s32.totalorder %v38, 0
  %vm41 = vcmp.lt.s32.totalorder %v31, 0
  %vm42 = vcmp.lt.s32.totalorder %v38, 0
  %vm43 = vmand %vm41, %vm39
  %vm44 = vmand %vm42, %vm40
  %v45 = vadd.s32 %v31, 16
  %v46 = vadd.s32 %v38, 16
  %v47 = vsel %vm43, %v45, %v31
  %v48 = vsel %vm44, %v46, %v38
  %vm49 = vcmp.eq.s32.totalorder %v47, 0
  %vm50 = vcmp.eq.s32.totalorder %v48, 0
  %vm51 = vcmp.eq.s32.totalorder %v47, 15
  %vm52 = vcmp.eq.s32.totalorder %v48, 15
  %vm53 = vcmp.lt.s32.totalorder %v23, 16
  %vm54 = vcmp.lt.s32.totalorder %v24, 16
  %vm55 = vcmp.ge.s32.totalorder %v23, 240
  %vm56 = vcmp.ge.s32.totalorder %v24, 240
  %v57 = vld [vmem:[%s0] sm:$0xff]
  %v58 = vld [vmem:[%s0 + $0x8] sm:$0xff]
  %v59 = vld [vmem:[%s1] sm:$0xff]
  %v60 = vld [vmem:[%s1 + $0x8] sm:$0xff]
  %v61 = vld [vmem:[%s1 + $0x10] sm:$0xff]
  %v62 = vld [vmem:[%s1 + $0x18] sm:$0xff]
  %v63 = vld [vmem:[%s1 + $0x20] sm:$0xff]
  %v64 = vld [vmem:[%s1 + $0x28] sm:$0xff]
  %v65 = vld [vmem:[%s1 + $0x30] sm:$0xff]
  %v66 = vld [vmem:[%s1 + $0x38] sm:$0xff]
  %v67 = vld [vmem:[%s1 + $0x40] sm:$0xff]
  %v68 = vld [vmem:[%s1 + $0x48] sm:$0xff]
  %v69 = vld [vmem:[%s1 + $0x50] sm:$0xff]
  %v70 = vld [vmem:[%s1 + $0x58] sm:$0xff]
  %v71 = vld [vmem:[%s1 + $0x60] sm:$0xff]
  %v72 = vld [vmem:[%s1 + $0x68] sm:$0xff]
  %v73 = vld [vmem:[%s1 + $0x70] sm:$0xff]
  %v74 = vld [vmem:[%s1 + $0x78] sm:$0xff]
  %v75 = vld [vmem:[%s1 + $0x80] sm:$0xff]
  %v76 = vld [vmem:[%s1 + $0x88] sm:$0xff]
  %v77 = vld [vmem:[%s1 + $0x90] sm:$0xff]
  %v78 = vld [vmem:[%s1 + $0x98] sm:$0xff]
  %v79 = vld [vmem:[%s1 + $0xa0] sm:$0xff]
  %v80 = vld [vmem:[%s1 + $0xa8] sm:$0xff]
  %v81 = vld [vmem:[%s1 + $0xb0] sm:$0xff]
  %v82 = vld [vmem:[%s1 + $0xb8] sm:$0xff]
  %v83 = vld [vmem:[%s1 + $0xc0] sm:$0xff]
  %v84 = vld [vmem:[%s1 + $0xc8] sm:$0xff]
  %v85 = vld [vmem:[%s1 + $0xd0] sm:$0xff]
  %v86 = vld [vmem:[%s1 + $0xd8] sm:$0xff]
  %v87 = vld [vmem:[%s1 + $0xe0] sm:$0xff]
  %v88 = vld [vmem:[%s1 + $0xe8] sm:$0xff]
  %v89 = vld [vmem:[%s1 + $0xf0] sm:$0xff]
  %v90 = vld [vmem:[%s1 + $0xf8] sm:$0xff]
  %v91 = vld [vmem:[%s1 + $0x100] sm:$0xff]
  %v92 = vld [vmem:[%s1 + $0x108] sm:$0xff]
  %v93 = vld [vmem:[%s1 + $0x110] sm:$0xff]
  %v94 = vld [vmem:[%s1 + $0x118] sm:$0xff]
  %v95 = vld [vmem:[%s1 + $0x120] sm:$0xff]
  %v96 = vld [vmem:[%s1 + $0x128] sm:$0xff]
  %v97 = vld [vmem:[%s1 + $0x130] sm:$0xff]
  %v98 = vld [vmem:[%s1 + $0x138] sm:$0xff]
  %v99 = vld [vmem:[%s1 + $0x140] sm:$0xff]
  %v100 = vld [vmem:[%s1 + $0x148] sm:$0xff]
  %v101 = vld [vmem:[%s1 + $0x150] sm:$0xff]
  %v102 = vld [vmem:[%s1 + $0x158] sm:$0xff]
  %v103 = vld [vmem:[%s1 + $0x160] sm:$0xff]
  %v104 = vld [vmem:[%s1 + $0x168] sm:$0xff]
  %v105 = vld [vmem:[%s1 + $0x170] sm:$0xff]
  %v106 = vld [vmem:[%s1 + $0x178] sm:$0xff]
  %v107 = vld [vmem:[%s1 + $0x180] sm:$0xff]
  %v108 = vld [vmem:[%s1 + $0x188] sm:$0xff]
  %v109 = vld [vmem:[%s1 + $0x190] sm:$0xff]
  %v110 = vld [vmem:[%s1 + $0x198] sm:$0xff]
  %v111 = vld [vmem:[%s1 + $0x1a0] sm:$0xff]
  %v112 = vld [vmem:[%s1 + $0x1a8] sm:$0xff]
  %v113 = vld [vmem:[%s1 + $0x1b0] sm:$0xff]
  %v114 = vld [vmem:[%s1 + $0x1b8] sm:$0xff]
  %v115 = vld [vmem:[%s1 + $0x1c0] sm:$0xff]
  %v116 = vld [vmem:[%s1 + $0x1c8] sm:$0xff]
  %v117 = vld [vmem:[%s1 + $0x1d0] sm:$0xff]
  %v118 = vld [vmem:[%s1 + $0x1d8] sm:$0xff]
  %v119 = vld [vmem:[%s1 + $0x1e0] sm:$0xff]
  %v120 = vld [vmem:[%s1 + $0x1e8] sm:$0xff]
  %v121 = vld [vmem:[%s1 + $0x1f0] sm:$0xff]
  %v122 = vld [vmem:[%s1 + $0x1f8] sm:$0xff]
  %v123 = vld [vmem:[%s3 + $0x18] sm:$0xff]
  %v124 = vld [vmem:[%s3 + $0x50] sm:$0xff]
  %125 = vmatprep.subr.mxu0 0.0
  %126 = vmatpush1.msra.mxu0 %v74
  %127 = vmatprep.subr.mxu0 0.0
  %128 = vmatpush1.msra.mxu0 %v73
  %129 = vmatprep.subr.mxu0 0.0
  %130 = vmatpush1.msra.mxu0 %v72
  %131 = vmatprep.subr.mxu0 0.0
  %132 = vmatpush1.msra.mxu0 %v71
  %133 = vmatprep.subr.mxu0 0.0
  %134 = vmatpush1.msra.mxu0 %v70
  %135 = vmatprep.subr.mxu0 0.0
  %136 = vmatpush1.msra.mxu0 %v69
  %137 = vmatprep.subr.mxu0 0.0
  %138 = vmatpush1.msra.mxu0 %v68
  %139 = vmatprep.subr.mxu0 0.0
  %140 = vmatpush1.msra.mxu0 %v67
  %141 = vmatprep.subr.mxu0 0.0
  %142 = vmatpush1.msra.mxu0 %v66
  %143 = vmatprep.subr.mxu0 0.0
  %144 = vmatpush1.msra.mxu0 %v65
  %145 = vmatprep.subr.mxu0 0.0
  %146 = vmatpush1.msra.mxu0 %v64
  %147 = vmatprep.subr.mxu0 0.0
  %148 = vmatpush1.msra.mxu0 %v63
  %149 = vmatprep.subr.mxu0 0.0
  %150 = vmatpush1.msra.mxu0 %v62
  %151 = vmatprep.subr.mxu0 0.0
  %152 = vmatpush1.msra.mxu0 %v61
  %153 = vmatprep.subr.mxu0 0.0
  %154 = vmatpush1.msra.mxu0 %v60
  %155 = vmatprep.subr.mxu0 0.0
  %156 = vmatpush1.msra.mxu0 %v59
  %157 = vmatprep.subr.mxu0 0.0
  %158 = vmatpush2.msra.mxu0 %v90
  %159 = vmatprep.subr.mxu0 0.0
  %160 = vmatpush2.msra.mxu0 %v89
  %161 = vmatprep.subr.mxu0 0.0
  %162 = vmatpush2.msra.mxu0 %v88
  %163 = vmatprep.subr.mxu0 0.0
  %164 = vmatpush2.msra.mxu0 %v87
  %165 = vmatprep.subr.mxu0 0.0
  %166 = vmatpush2.msra.mxu0 %v86
  %167 = vmatprep.subr.mxu0 0.0
  %168 = vmatpush2.msra.mxu0 %v85
  %169 = vmatprep.subr.mxu0 0.0
  %170 = vmatpush2.msra.mxu0 %v84
  %171 = vmatprep.subr.mxu0 0.0
  %172 = vmatpush2.msra.mxu0 %v83
  %173 = vmatprep.subr.mxu0 0.0
  %174 = vmatpush2.msra.mxu0 %v82
  %175 = vmatprep.subr.mxu0 0.0
  %176 = vmatpush2.msra.mxu0 %v81
  %177 = vmatprep.subr.mxu0 0.0
  %178 = vmatpush2.msra.mxu0 %v80
  %179 = vmatprep.subr.mxu0 0.0
  %180 = vmatpush2.msra.mxu0 %v79
  %181 = vmatprep.subr.mxu0 0.0
  %182 = vmatpush2.msra.mxu0 %v78
  %183 = vmatprep.subr.mxu0 0.0
  %184 = vmatpush2.msra.mxu0 %v77
  %185 = vmatprep.subr.mxu0 0.0
  %186 = vmatpush2.msra.mxu0 %v76
  %187 = vmatprep.subr.mxu0 0.0
  %188 = vmatpush2.msra.mxu0 %v75
  %189 = vmatprep.mubr.f32.mxu0 %v58
  %190 = vmatmul.mubr.f32.gmra.mxu0 %v57
  %v191 = vpop.f32.mrf.mxu0
  %v192 = vadd.f32 0.0, %v191
  %v193 = vpop.f32.mrf.mxu0
  %194 = vdwg.mxu0
  %196 = vset.pattern.permute.xlu0 6
  %197 = vperm.xlu0 %196, %v20
  %v198 = vpop.permute.xlu0 %197
  %201 = vset.pattern.permute.xlu0 6
  %202 = vperm.xlu0 %201, %v21
  %v203 = vpop.permute.xlu0 %202
  %207 = vrot.lane.b32.xlu0 %v123, 112
  %v208 = vpop.permute.xlu0 %207
  %209 = vrot.lane.b32.xlu0 %v124, 112
  %v210 = vpop.permute.xlu0 %209
  %vm211 = vcmask 64512
  %v212 = vsel %vm211, %v208, 0
  %v214 = vsel %vm211, %v210, 0
  %216 = vmatprep.subr.mxu0 0.0
  %217 = vmatpush1.msra.mxu0 0.0
  %218 = vmatprep.subr.mxu0 0.0
  %219 = vmatpush1.msra.mxu0 0.0
  %220 = vmatprep.subr.mxu0 0.0
  %221 = vmatpush1.msra.mxu0 0.0
  %222 = vmatprep.subr.mxu0 0.0
  %223 = vmatpush1.msra.mxu0 0.0
  %224 = vmatprep.subr.mxu0 0.0
  %225 = vmatpush1.msra.mxu0 0.0
  %226 = vmatprep.subr.mxu0 0.0
  %227 = vmatpush1.msra.mxu0 0.0
  %228 = vmatprep.subr.mxu0 0.0
  %229 = vmatpush1.msra.mxu0 0.0
  %230 = vmatprep.subr.mxu0 0.0
  %231 = vmatpush1.msra.mxu0 0.0
  %232 = vmatprep.subr.mxu0 0.0
  %233 = vmatpush1.msra.mxu0 0.0
  %234 = vmatprep.subr.mxu0 0.0
  %235 = vmatpush1.msra.mxu0 0.0
  %236 = vmatprep.subr.mxu0 0.0
  %237 = vmatpush1.msra.mxu0 0.0
  %238 = vmatprep.subr.mxu0 0.0
  %239 = vmatpush1.msra.mxu0 0.0
  %240 = vmatprep.subr.mxu0 0.0
  %241 = vmatpush1.msra.mxu0 0.0
  %242 = vmatprep.subr.mxu0 0.0
  %243 = vmatpush1.msra.mxu0 0.0
  %244 = vmatprep.subr.mxu0 0.0
  %245 = vmatpush1.msra.mxu0 0.0
  %246 = vmatprep.subr.mxu0 0.0
  %247 = vmatpush1.msra.mxu0 %v192
  %248 = vmatprep.subr.mxu0 0.0
  %249 = vmatpush2.msra.mxu0 0.0
  %250 = vmatprep.subr.mxu0 0.0
  %251 = vmatpush2.msra.mxu0 0.0
  %252 = vmatprep.subr.mxu0 0.0
  %253 = vmatpush2.msra.mxu0 0.0
  %254 = vmatprep.subr.mxu0 0.0
  %255 = vmatpush2.msra.mxu0 0.0
  %256 = vmatprep.subr.mxu0 0.0
  %257 = vmatpush2.msra.mxu0 0.0
  %258 = vmatprep.subr.mxu0 0.0
  %259 = vmatpush2.msra.mxu0 0.0
  %260 = vmatprep.subr.mxu0 0.0
  %261 = vmatpush2.msra.mxu0 0.0
  %262 = vmatprep.subr.mxu0 0.0
  %263 = vmatpush2.msra.mxu0 0.0
  %264 = vmatprep.subr.mxu0 0.0
  %265 = vmatpush2.msra.mxu0 0.0
  %266 = vmatprep.subr.mxu0 0.0
  %267 = vmatpush2.msra.mxu0 0.0
  %268 = vmatprep.subr.mxu0 0.0
  %269 = vmatpush2.msra.mxu0 0.0
  %270 = vmatprep.subr.mxu0 0.0
  %271 = vmatpush2.msra.mxu0 0.0
  %272 = vmatprep.subr.mxu0 0.0
  %273 = vmatpush2.msra.mxu0 0.0
  %274 = vmatprep.subr.mxu0 0.0
  %275 = vmatpush2.msra.mxu0 0.0
  %276 = vmatprep.subr.mxu0 0.0
  %277 = vmatpush2.msra.mxu0 0.0
  %278 = vmatprep.subr.mxu0 0.0
  %279 = vmatpush2.msra.mxu0 0.0
  %280 = vmatprep.mubr.f32.mxu0 0.0
  %281 = vmatmul.mubr.f32.gmra.mxu0 %v212
  %v282 = vpop.f32.mrf.mxu0
  %v283 = vadd.f32 %v198, %v282
  %v284 = vpop.f32.mrf.mxu0
  %285 = vmatprep.mubr.f32.mxu0 0.0
  %286 = vmatmul.mubr.f32.gmra.mxu0 %v214
  %v287 = vpop.f32.mrf.mxu0
  %v288 = vadd.f32 %v203, %v287
  %v289 = vpop.f32.mrf.mxu0
  %290 = vdwg.mxu0
  %v291 = vld [vmem:[%s3] sm:$0xff]
  %292 = vrot.lane.b32.xlu0 %v57, 1
  %v293 = vpop.permute.xlu0 %292
  %294 = vrot.lane.b32.xlu0 %v58, 1
  %v295 = vpop.permute.xlu0 %294
  %vm296 = vcmp.lt.s32.totalorder %v23, 1
  %v297 = vsel %vm296, %v293, %v295
  %v298 = vsel %vm296, %v295, %v293
  %v299 = vsel %vm49, 1, 0
  %v300 = vsel %vm50, 1, 0
  %vm301 = vcmp.eq.s32.totalorder %v299, 1
  %vm302 = vcmp.eq.s32.totalorder %v300, 1
  %v303 = vsel %vm301, %v57, %v298
  %v304 = vsel %vm302, %v58, %v297
  %305 = vrot.lane.b32.xlu0 %v57, 127
  %v306 = vpop.permute.xlu0 %305
  %307 = vrot.lane.b32.xlu0 %v58, 127
  %v308 = vpop.permute.xlu0 %307
  %vm309 = vcmp.lt.s32.totalorder %v23, 127
  %v310 = vsel %vm309, %v306, %v308
  %v311 = vsel %vm309, %v308, %v306
  %v312 = vsel %vm51, 1, 0
  %v313 = vsel %vm52, 1, 0
  %vm314 = vcmp.eq.s32.totalorder %v312, 1
  %vm315 = vcmp.eq.s32.totalorder %v313, 1
  %v316 = vsel %vm314, %v57, %v310
  %v317 = vsel %vm315, %v58, %v311
  %318 = vrot.lane.b32.xlu0 %v303, 16
  %v319 = vpop.permute.xlu0 %318
  %320 = vrot.lane.b32.xlu0 %v304, 16
  %v321 = vpop.permute.xlu0 %320
  %v322 = vsel %vm53, %v319, %v321
  %v323 = vsel %vm53, %v321, %v319
  %v324 = vsel %vm53, 1, 0
  %v325 = vsel %vm54, 1, 0
  %vm326 = vcmp.eq.s32.totalorder %v324, 1
  %vm327 = vcmp.eq.s32.totalorder %v325, 1
  %v328 = vsel %vm326, %v303, %v323
  %v329 = vsel %vm327, %v304, %v322
  %330 = vrot.lane.b32.xlu0 %v57, 16
  %v331 = vpop.permute.xlu0 %330
  %332 = vrot.lane.b32.xlu0 %v58, 16
  %v333 = vpop.permute.xlu0 %332
  %v334 = vsel %vm53, %v331, %v333
  %v335 = vsel %vm53, %v333, %v331
  %v336 = vsel %vm326, %v57, %v335
  %v337 = vsel %vm327, %v58, %v334
  %338 = vrot.lane.b32.xlu0 %v316, 16
  %v339 = vpop.permute.xlu0 %338
  %340 = vrot.lane.b32.xlu0 %v317, 16
  %v341 = vpop.permute.xlu0 %340
  %v342 = vsel %vm53, %v339, %v341
  %v343 = vsel %vm53, %v341, %v339
  %v344 = vsel %vm326, %v316, %v343
  %v345 = vsel %vm327, %v317, %v342
  %346 = vrot.lane.b32.xlu0 %v303, 112
  %v347 = vpop.permute.xlu0 %346
  %348 = vrot.lane.b32.xlu0 %v304, 112
  %v349 = vpop.permute.xlu0 %348
  %vm350 = vcmp.lt.s32.totalorder %v23, 112
  %v351 = vsel %vm350, %v347, %v349
  %v352 = vsel %vm350, %v349, %v347
  %v353 = vsel %vm55, 1, 0
  %v354 = vsel %vm56, 1, 0
  %vm355 = vcmp.eq.s32.totalorder %v353, 1
  %vm356 = vcmp.eq.s32.totalorder %v354, 1
  %v357 = vsel %vm355, %v303, %v351
  %v358 = vsel %vm356, %v304, %v352
  %359 = vrot.lane.b32.xlu0 %v57, 112
  %v360 = vpop.permute.xlu0 %359
  %361 = vrot.lane.b32.xlu0 %v58, 112
  %v362 = vpop.permute.xlu0 %361
  %v363 = vsel %vm350, %v360, %v362
  %v364 = vsel %vm350, %v362, %v360
  %v365 = vsel %vm355, %v57, %v363
  %v366 = vsel %vm356, %v58, %v364
  %367 = vrot.lane.b32.xlu0 %v316, 112
  %v368 = vpop.permute.xlu0 %367
  %369 = vrot.lane.b32.xlu0 %v317, 112
  %v370 = vpop.permute.xlu0 %369
  %v371 = vsel %vm350, %v368, %v370
  %v372 = vsel %vm350, %v370, %v368
  %v373 = vsel %vm355, %v316, %v371
  %v374 = vsel %vm356, %v317, %v372
  %375 = vset.pattern.permute.xlu0 0
  %376 = vperm.xlu0 %375, %v20
  %v377 = vpop.permute.xlu0 %376
  %vm379 = vcmask 588800
  %v381 = vsel %vm379, %v291, 0
  %383 = vmatprep.subr.mxu0 0.0
  %384 = vmatpush1.msra.mxu0 0.0
  %385 = vmatprep.subr.mxu0 0.0
  %386 = vmatpush1.msra.mxu0 0.0
  %387 = vmatprep.subr.mxu0 0.0
  %388 = vmatpush1.msra.mxu0 0.0
  %389 = vmatprep.subr.mxu0 0.0
  %390 = vmatpush1.msra.mxu0 0.0
  %391 = vmatprep.subr.mxu0 0.0
  %392 = vmatpush1.msra.mxu0 0.0
  %393 = vmatprep.subr.mxu0 0.0
  %394 = vmatpush1.msra.mxu0 0.0
  %395 = vmatprep.subr.mxu0 0.0
  %396 = vmatpush1.msra.mxu0 0.0
  %397 = vmatprep.subr.mxu0 %v374
  %398 = vmatpush1.msra.mxu0 %v373
  %399 = vmatprep.subr.mxu0 %v366
  %400 = vmatpush1.msra.mxu0 %v365
  %401 = vmatprep.subr.mxu0 %v358
  %402 = vmatpush1.msra.mxu0 %v357
  %403 = vmatprep.subr.mxu0 %v317
  %404 = vmatpush1.msra.mxu0 %v316
  %405 = vmatprep.subr.mxu0 %v58
  %406 = vmatpush1.msra.mxu0 %v57
  %407 = vmatprep.subr.mxu0 %v304
  %408 = vmatpush1.msra.mxu0 %v303
  %409 = vmatprep.subr.mxu0 %v345
  %410 = vmatpush1.msra.mxu0 %v344
  %411 = vmatprep.subr.mxu0 %v337
  %412 = vmatpush1.msra.mxu0 %v336
  %413 = vmatprep.subr.mxu0 %v329
  %414 = vmatpush1.msra.mxu0 %v328
  %415 = vmatprep.subr.mxu0 0.0
  %416 = vmatpush2.msra.mxu0 0.0
  %417 = vmatprep.subr.mxu0 0.0
  %418 = vmatpush2.msra.mxu0 0.0
  %419 = vmatprep.subr.mxu0 0.0
  %420 = vmatpush2.msra.mxu0 0.0
  %421 = vmatprep.subr.mxu0 0.0
  %422 = vmatpush2.msra.mxu0 0.0
  %423 = vmatprep.subr.mxu0 0.0
  %424 = vmatpush2.msra.mxu0 0.0
  %425 = vmatprep.subr.mxu0 0.0
  %426 = vmatpush2.msra.mxu0 0.0
  %427 = vmatprep.subr.mxu0 0.0
  %428 = vmatpush2.msra.mxu0 0.0
  %429 = vmatprep.subr.mxu0 0.0
  %430 = vmatpush2.msra.mxu0 0.0
  %431 = vmatprep.subr.mxu0 0.0
  %432 = vmatpush2.msra.mxu0 0.0
  %433 = vmatprep.subr.mxu0 0.0
  %434 = vmatpush2.msra.mxu0 0.0
  %435 = vmatprep.subr.mxu0 0.0
  %436 = vmatpush2.msra.mxu0 0.0
  %437 = vmatprep.subr.mxu0 0.0
  %438 = vmatpush2.msra.mxu0 0.0
  %439 = vmatprep.subr.mxu0 0.0
  %440 = vmatpush2.msra.mxu0 0.0
  %441 = vmatprep.subr.mxu0 0.0
  %442 = vmatpush2.msra.mxu0 0.0
  %443 = vmatprep.subr.mxu0 0.0
  %444 = vmatpush2.msra.mxu0 0.0
  %445 = vmatprep.subr.mxu0 0.0
  %446 = vmatpush2.msra.mxu0 0.0
  %447 = vmatprep.mubr.f32.mxu0 0.0
  %448 = vmatmul.mubr.f32.gmra.mxu0 %v381
  %v449 = vpop.f32.mrf.mxu0
  %v450 = vadd.f32 %v377, %v449
  %v451 = vpop.f32.mrf.mxu0
  %v452 = vadd.f32 %v377, %v451
  %453 = vdwg.mxu0
  %vm454 = vcmp.ge.f32.partialorder %v450, 0.0
  %vm455 = vcmp.ge.f32.partialorder %v452, 0.0
  %456 = vset.pattern.permute.xlu0 1
  %457 = vperm.xlu0 %456, %v20
  %v458 = vpop.permute.xlu0 %457
  %v460 = vmul.f32 %v450, %v458
  %v461 = vmul.f32 %v452, %v458
  %v462 = vsel %vm454, %v450, %v460
  %v463 = vsel %vm455, %v452, %v461
  %v464 = vld [vmem:[%s3 + $0x8] sm:$0xff]
  %v465 = vld [vmem:[%s3 + $0x40] sm:$0xff]
  %466 = vrot.lane.b32.xlu0 %v462, 1
  %v467 = vpop.permute.xlu0 %466
  %468 = vrot.lane.b32.xlu0 %v463, 1
  %v469 = vpop.permute.xlu0 %468
  %v470 = vsel %vm296, %v467, %v469
  %v471 = vsel %vm296, %v469, %v467
  %v472 = vsel %vm301, %v462, %v471
  %v473 = vsel %vm302, %v463, %v470
  %474 = vrot.lane.b32.xlu0 %v462, 127
  %v475 = vpop.permute.xlu0 %474
  %476 = vrot.lane.b32.xlu0 %v463, 127
  %v477 = vpop.permute.xlu0 %476
  %v478 = vsel %vm309, %v475, %v477
  %v479 = vsel %vm309, %v477, %v475
  %v480 = vsel %vm314, %v462, %v478
  %v481 = vsel %vm315, %v463, %v479
  %482 = vrot.lane.b32.xlu0 %v472, 16
  %v483 = vpop.permute.xlu0 %482
  %484 = vrot.lane.b32.xlu0 %v473, 16
  %v485 = vpop.permute.xlu0 %484
  %v486 = vsel %vm53, %v483, %v485
  %v487 = vsel %vm53, %v485, %v483
  %v488 = vsel %vm326, %v472, %v487
  %v489 = vsel %vm327, %v473, %v486
  %490 = vrot.lane.b32.xlu0 %v462, 16
  %v491 = vpop.permute.xlu0 %490
  %492 = vrot.lane.b32.xlu0 %v463, 16
  %v493 = vpop.permute.xlu0 %492
  %v494 = vsel %vm53, %v491, %v493
  %v495 = vsel %vm53, %v493, %v491
  %v496 = vsel %vm326, %v462, %v495
  %v497 = vsel %vm327, %v463, %v494
  %498 = vrot.lane.b32.xlu0 %v480, 16
  %v499 = vpop.permute.xlu0 %498
  %500 = vrot.lane.b32.xlu0 %v481, 16
  %v501 = vpop.permute.xlu0 %500
  %v502 = vsel %vm53, %v499, %v501
  %v503 = vsel %vm53, %v501, %v499
  %v504 = vsel %vm326, %v480, %v503
  %v505 = vsel %vm327, %v481, %v502
  %506 = vrot.lane.b32.xlu0 %v472, 112
  %v507 = vpop.permute.xlu0 %506
  %508 = vrot.lane.b32.xlu0 %v473, 112
  %v509 = vpop.permute.xlu0 %508
  %v510 = vsel %vm350, %v507, %v509
  %v511 = vsel %vm350, %v509, %v507
  %v512 = vsel %vm355, %v472, %v510
  %v513 = vsel %vm356, %v473, %v511
  %514 = vrot.lane.b32.xlu0 %v462, 112
  %v515 = vpop.permute.xlu0 %514
  %516 = vrot.lane.b32.xlu0 %v463, 112
  %v517 = vpop.permute.xlu0 %516
  %v518 = vsel %vm350, %v515, %v517
  %v519 = vsel %vm350, %v517, %v515
  %v520 = vsel %vm355, %v462, %v518
  %v521 = vsel %vm356, %v463, %v519
  %522 = vrot.lane.b32.xlu0 %v480, 112
  %v523 = vpop.permute.xlu0 %522
  %524 = vrot.lane.b32.xlu0 %v481, 112
  %v525 = vpop.permute.xlu0 %524
  %v526 = vsel %vm350, %v523, %v525
  %v527 = vsel %vm350, %v525, %v523
  %v528 = vsel %vm355, %v480, %v526
  %v529 = vsel %vm356, %v481, %v527
  %530 = vset.pattern.permute.xlu0 2
  %531 = vperm.xlu0 %530, %v20
  %v532 = vpop.permute.xlu0 %531
  %534 = vset.pattern.permute.xlu0 2
  %535 = vperm.xlu0 %534, %v21
  %v536 = vpop.permute.xlu0 %535
  %v539 = vsel %vm379, %v464, 0
  %v542 = vsel %vm379, %v465, 0
  %544 = vmatprep.subr.mxu0 0.0
  %545 = vmatpush1.msra.mxu0 0.0
  %546 = vmatprep.subr.mxu0 0.0
  %547 = vmatpush1.msra.mxu0 0.0
  %548 = vmatprep.subr.mxu0 0.0
  %549 = vmatpush1.msra.mxu0 0.0
  %550 = vmatprep.subr.mxu0 0.0
  %551 = vmatpush1.msra.mxu0 0.0
  %552 = vmatprep.subr.mxu0 0.0
  %553 = vmatpush1.msra.mxu0 0.0
  %554 = vmatprep.subr.mxu0 0.0
  %555 = vmatpush1.msra.mxu0 0.0
  %556 = vmatprep.subr.mxu0 0.0
  %557 = vmatpush1.msra.mxu0 0.0
  %558 = vmatprep.subr.mxu0 %v529
  %559 = vmatpush1.msra.mxu0 %v528
  %560 = vmatprep.subr.mxu0 %v521
  %561 = vmatpush1.msra.mxu0 %v520
  %562 = vmatprep.subr.mxu0 %v513
  %563 = vmatpush1.msra.mxu0 %v512
  %564 = vmatprep.subr.mxu0 %v481
  %565 = vmatpush1.msra.mxu0 %v480
  %566 = vmatprep.subr.mxu0 %v463
  %567 = vmatpush1.msra.mxu0 %v462
  %568 = vmatprep.subr.mxu0 %v473
  %569 = vmatpush1.msra.mxu0 %v472
  %570 = vmatprep.subr.mxu0 %v505
  %571 = vmatpush1.msra.mxu0 %v504
  %572 = vmatprep.subr.mxu0 %v497
  %573 = vmatpush1.msra.mxu0 %v496
  %574 = vmatprep.subr.mxu0 %v489
  %575 = vmatpush1.msra.mxu0 %v488
  %576 = vmatprep.subr.mxu0 0.0
  %577 = vmatpush2.msra.mxu0 0.0
  %578 = vmatprep.subr.mxu0 0.0
  %579 = vmatpush2.msra.mxu0 0.0
  %580 = vmatprep.subr.mxu0 0.0
  %581 = vmatpush2.msra.mxu0 0.0
  %582 = vmatprep.subr.mxu0 0.0
  %583 = vmatpush2.msra.mxu0 0.0
  %584 = vmatprep.subr.mxu0 0.0
  %585 = vmatpush2.msra.mxu0 0.0
  %586 = vmatprep.subr.mxu0 0.0
  %587 = vmatpush2.msra.mxu0 0.0
  %588 = vmatprep.subr.mxu0 0.0
  %589 = vmatpush2.msra.mxu0 0.0
  %590 = vmatprep.subr.mxu0 0.0
  %591 = vmatpush2.msra.mxu0 0.0
  %592 = vmatprep.subr.mxu0 0.0
  %593 = vmatpush2.msra.mxu0 0.0
  %594 = vmatprep.subr.mxu0 0.0
  %595 = vmatpush2.msra.mxu0 0.0
  %596 = vmatprep.subr.mxu0 0.0
  %597 = vmatpush2.msra.mxu0 0.0
  %598 = vmatprep.subr.mxu0 0.0
  %599 = vmatpush2.msra.mxu0 0.0
  %600 = vmatprep.subr.mxu0 0.0
  %601 = vmatpush2.msra.mxu0 0.0
  %602 = vmatprep.subr.mxu0 0.0
  %603 = vmatpush2.msra.mxu0 0.0
  %604 = vmatprep.subr.mxu0 0.0
  %605 = vmatpush2.msra.mxu0 0.0
  %606 = vmatprep.subr.mxu0 0.0
  %607 = vmatpush2.msra.mxu0 0.0
  %608 = vmatprep.mubr.f32.mxu0 0.0
  %609 = vmatmul.mubr.f32.gmra.mxu0 %v539
  %v610 = vpop.f32.mrf.mxu0
  %v611 = vadd.f32 %v532, %v610
  %v612 = vpop.f32.mrf.mxu0
  %v613 = vadd.f32 %v532, %v612
  %614 = vmatprep.mubr.f32.mxu0 0.0
  %615 = vmatmul.mubr.f32.gmra.mxu0 %v542
  %v616 = vpop.f32.mrf.mxu0
  %v617 = vadd.f32 %v536, %v616
  %v618 = vpop.f32.mrf.mxu0
  %v619 = vadd.f32 %v536, %v618
  %620 = vdwg.mxu0
  %vm621 = vcmp.ge.f32.partialorder %v611, 0.0
  %vm622 = vcmp.ge.f32.partialorder %v613, 0.0
  %vm623 = vcmp.ge.f32.partialorder %v617, 0.0
  %vm624 = vcmp.ge.f32.partialorder %v619, 0.0
  %625 = vset.pattern.permute.xlu0 3
  %626 = vperm.xlu0 %625, %v20
  %v627 = vpop.permute.xlu0 %626
  %629 = vset.pattern.permute.xlu0 3
  %630 = vperm.xlu0 %629, %v21
  %v631 = vpop.permute.xlu0 %630
  %v633 = vmul.f32 %v611, %v627
  %v634 = vmul.f32 %v613, %v627
  %v635 = vmul.f32 %v617, %v631
  %v636 = vmul.f32 %v619, %v631
  %v637 = vsel %vm621, %v611, %v633
  %v638 = vsel %vm622, %v613, %v634
  %v639 = vsel %vm623, %v617, %v635
  %v640 = vsel %vm624, %v619, %v636
  %641 = vrot.lane.b32.xlu0 %v637, 1
  %v642 = vpop.permute.xlu0 %641
  %643 = vrot.lane.b32.xlu0 %v639, 1
  %v644 = vpop.permute.xlu0 %643
  %645 = vrot.lane.b32.xlu0 %v638, 1
  %v646 = vpop.permute.xlu0 %645
  %647 = vrot.lane.b32.xlu0 %v640, 1
  %v648 = vpop.permute.xlu0 %647
  %v649 = vsel %vm296, %v642, %v646
  %v650 = vsel %vm296, %v644, %v648
  %v651 = vsel %vm296, %v646, %v642
  %v652 = vsel %vm296, %v648, %v644
  %v653 = vsel %vm301, %v637, %v651
  %v654 = vsel %vm302, %v638, %v649
  %v655 = vsel %vm301, %v639, %v652
  %v656 = vsel %vm302, %v640, %v650
  %657 = vrot.lane.b32.xlu0 %v637, 127
  %v658 = vpop.permute.xlu0 %657
  %659 = vrot.lane.b32.xlu0 %v639, 127
  %v660 = vpop.permute.xlu0 %659
  %661 = vrot.lane.b32.xlu0 %v638, 127
  %v662 = vpop.permute.xlu0 %661
  %663 = vrot.lane.b32.xlu0 %v640, 127
  %v664 = vpop.permute.xlu0 %663
  %v665 = vsel %vm309, %v658, %v662
  %v666 = vsel %vm309, %v660, %v664
  %v667 = vsel %vm309, %v662, %v658
  %v668 = vsel %vm309, %v664, %v660
  %v669 = vsel %vm314, %v637, %v665
  %v670 = vsel %vm315, %v638, %v667
  %v671 = vsel %vm314, %v639, %v666
  %v672 = vsel %vm315, %v640, %v668
  %673 = vrot.lane.b32.xlu0 %v653, 16
  %v674 = vpop.permute.xlu0 %673
  %675 = vrot.lane.b32.xlu0 %v655, 16
  %v676 = vpop.permute.xlu0 %675
  %677 = vrot.lane.b32.xlu0 %v654, 16
  %v678 = vpop.permute.xlu0 %677
  %679 = vrot.lane.b32.xlu0 %v656, 16
  %v680 = vpop.permute.xlu0 %679
  %v681 = vsel %vm53, %v674, %v678
  %v682 = vsel %vm53, %v676, %v680
  %v683 = vsel %vm53, %v678, %v674
  %v684 = vsel %vm53, %v680, %v676
  %v685 = vsel %vm326, %v653, %v683
  %v686 = vsel %vm327, %v654, %v681
  %v687 = vsel %vm326, %v655, %v684
  %v688 = vsel %vm327, %v656, %v682
  %689 = vrot.lane.b32.xlu0 %v637, 16
  %v690 = vpop.permute.xlu0 %689
  %691 = vrot.lane.b32.xlu0 %v639, 16
  %v692 = vpop.permute.xlu0 %691
  %693 = vrot.lane.b32.xlu0 %v638, 16
  %v694 = vpop.permute.xlu0 %693
  %695 = vrot.lane.b32.xlu0 %v640, 16
  %v696 = vpop.permute.xlu0 %695
  %v697 = vsel %vm53, %v690, %v694
  %v698 = vsel %vm53, %v692, %v696
  %v699 = vsel %vm53, %v694, %v690
  %v700 = vsel %vm53, %v696, %v692
  %v701 = vsel %vm326, %v637, %v699
  %v702 = vsel %vm327, %v638, %v697
  %v703 = vsel %vm326, %v639, %v700
  %v704 = vsel %vm327, %v640, %v698
  %705 = vrot.lane.b32.xlu0 %v669, 16
  %v706 = vpop.permute.xlu0 %705
  %707 = vrot.lane.b32.xlu0 %v671, 16
  %v708 = vpop.permute.xlu0 %707
  %709 = vrot.lane.b32.xlu0 %v670, 16
  %v710 = vpop.permute.xlu0 %709
  %711 = vrot.lane.b32.xlu0 %v672, 16
  %v712 = vpop.permute.xlu0 %711
  %v713 = vsel %vm53, %v706, %v710
  %v714 = vsel %vm53, %v708, %v712
  %v715 = vsel %vm53, %v710, %v706
  %v716 = vsel %vm53, %v712, %v708
  %v717 = vsel %vm326, %v669, %v715
  %v718 = vsel %vm327, %v670, %v713
  %v719 = vsel %vm326, %v671, %v716
  %v720 = vsel %vm327, %v672, %v714
  %721 = vrot.lane.b32.xlu0 %v653, 112
  %v722 = vpop.permute.xlu0 %721
  %723 = vrot.lane.b32.xlu0 %v655, 112
  %v724 = vpop.permute.xlu0 %723
  %725 = vrot.lane.b32.xlu0 %v654, 112
  %v726 = vpop.permute.xlu0 %725
  %727 = vrot.lane.b32.xlu0 %v656, 112
  %v728 = vpop.permute.xlu0 %727
  %v729 = vsel %vm350, %v722, %v726
  %v730 = vsel %vm350, %v724, %v728
  %v731 = vsel %vm350, %v726, %v722
  %v732 = vsel %vm350, %v728, %v724
  %v733 = vsel %vm355, %v653, %v729
  %v734 = vsel %vm356, %v654, %v731
  %v735 = vsel %vm355, %v655, %v730
  %v736 = vsel %vm356, %v656, %v732
  %737 = vrot.lane.b32.xlu0 %v637, 112
  %v738 = vpop.permute.xlu0 %737
  %739 = vrot.lane.b32.xlu0 %v639, 112
  %v740 = vpop.permute.xlu0 %739
  %741 = vrot.lane.b32.xlu0 %v638, 112
  %v742 = vpop.permute.xlu0 %741
  %743 = vrot.lane.b32.xlu0 %v640, 112
  %v744 = vpop.permute.xlu0 %743
  %v745 = vsel %vm350, %v738, %v742
  %v746 = vsel %vm350, %v740, %v744
  %v747 = vsel %vm350, %v742, %v738
  %v748 = vsel %vm350, %v744, %v740
  %v749 = vsel %vm355, %v637, %v745
  %v750 = vsel %vm356, %v638, %v747
  %v751 = vsel %vm355, %v639, %v746
  %v752 = vsel %vm356, %v640, %v748
  %753 = vrot.lane.b32.xlu0 %v669, 112
  %v754 = vpop.permute.xlu0 %753
  %755 = vrot.lane.b32.xlu0 %v671, 112
  %v756 = vpop.permute.xlu0 %755
  %757 = vrot.lane.b32.xlu0 %v670, 112
  %v758 = vpop.permute.xlu0 %757
  %759 = vrot.lane.b32.xlu0 %v672, 112
  %v760 = vpop.permute.xlu0 %759
  %v761 = vsel %vm350, %v754, %v758
  %v762 = vsel %vm350, %v756, %v760
  %v763 = vsel %vm350, %v758, %v754
  %v764 = vsel %vm350, %v760, %v756
  %v765 = vsel %vm355, %v669, %v761
  %v766 = vsel %vm356, %v670, %v763
  %v767 = vsel %vm355, %v671, %v762
  %v768 = vsel %vm356, %v672, %v764
  %v769 = vmul.f32 %v685, 0.0625
  %v770 = vmul.f32 %v686, 0.0625
  %v771 = vmul.f32 %v687, 0.0625
  %v772 = vmul.f32 %v688, 0.0625
  %v773 = vmul.f32 %v701, 0.125
  %v774 = vmul.f32 %v702, 0.125
  %v775 = vmul.f32 %v703, 0.125
  %v776 = vmul.f32 %v704, 0.125
  %v777 = vadd.f32 %v769, %v773
  %v778 = vadd.f32 %v770, %v774
  %v779 = vadd.f32 %v771, %v775
  %v780 = vadd.f32 %v772, %v776
  %v781 = vmul.f32 %v717, 0.0625
  %v782 = vmul.f32 %v718, 0.0625
  %v783 = vmul.f32 %v719, 0.0625
  %v784 = vmul.f32 %v720, 0.0625
  %v785 = vadd.f32 %v777, %v781
  %v786 = vadd.f32 %v778, %v782
  %v787 = vadd.f32 %v779, %v783
  %v788 = vadd.f32 %v780, %v784
  %v789 = vmul.f32 %v653, 0.125
  %v790 = vmul.f32 %v654, 0.125
  %v791 = vmul.f32 %v655, 0.125
  %v792 = vmul.f32 %v656, 0.125
  %v793 = vadd.f32 %v785, %v789
  %v794 = vadd.f32 %v786, %v790
  %v795 = vadd.f32 %v787, %v791
  %v796 = vadd.f32 %v788, %v792
  %v797 = vmul.f32 %v637, 0.25
  %v798 = vmul.f32 %v638, 0.25
  %v799 = vmul.f32 %v639, 0.25
  %v800 = vmul.f32 %v640, 0.25
  %v801 = vadd.f32 %v793, %v797
  %v802 = vadd.f32 %v794, %v798
  %v803 = vadd.f32 %v795, %v799
  %v804 = vadd.f32 %v796, %v800
  %v805 = vmul.f32 %v669, 0.125
  %v806 = vmul.f32 %v670, 0.125
  %v807 = vmul.f32 %v671, 0.125
  %v808 = vmul.f32 %v672, 0.125
  %v809 = vadd.f32 %v801, %v805
  %v810 = vadd.f32 %v802, %v806
  %v811 = vadd.f32 %v803, %v807
  %v812 = vadd.f32 %v804, %v808
  %v813 = vmul.f32 %v733, 0.0625
  %v814 = vmul.f32 %v734, 0.0625
  %v815 = vmul.f32 %v735, 0.0625
  %v816 = vmul.f32 %v736, 0.0625
  %v817 = vadd.f32 %v809, %v813
  %v818 = vadd.f32 %v810, %v814
  %v819 = vadd.f32 %v811, %v815
  %v820 = vadd.f32 %v812, %v816
  %v821 = vmul.f32 %v749, 0.125
  %v822 = vmul.f32 %v750, 0.125
  %v823 = vmul.f32 %v751, 0.125
  %v824 = vmul.f32 %v752, 0.125
  %v825 = vadd.f32 %v817, %v821
  %v826 = vadd.f32 %v818, %v822
  %v827 = vadd.f32 %v819, %v823
  %v828 = vadd.f32 %v820, %v824
  %v829 = vmul.f32 %v765, 0.0625
  %v830 = vmul.f32 %v766, 0.0625
  %v831 = vmul.f32 %v767, 0.0625
  %v832 = vmul.f32 %v768, 0.0625
  %v833 = vadd.f32 %v825, %v829
  %v834 = vadd.f32 %v826, %v830
  %v835 = vadd.f32 %v827, %v831
  %v836 = vadd.f32 %v828, %v832
  %v837 = vld [vmem:[%s3 + $0x10] sm:$0xff]
  %v838 = vld [vmem:[%s3 + $0x48] sm:$0xff]
  %839 = vrot.lane.b32.xlu0 %v833, 1
  %v840 = vpop.permute.xlu0 %839
  %841 = vrot.lane.b32.xlu0 %v835, 1
  %v842 = vpop.permute.xlu0 %841
  %843 = vrot.lane.b32.xlu0 %v834, 1
  %v844 = vpop.permute.xlu0 %843
  %845 = vrot.lane.b32.xlu0 %v836, 1
  %v846 = vpop.permute.xlu0 %845
  %v847 = vsel %vm296, %v840, %v844
  %v848 = vsel %vm296, %v842, %v846
  %v849 = vsel %vm296, %v844, %v840
  %v850 = vsel %vm296, %v846, %v842
  %v851 = vsel %vm301, %v833, %v849
  %v852 = vsel %vm302, %v834, %v847
  %v853 = vsel %vm301, %v835, %v850
  %v854 = vsel %vm302, %v836, %v848
  %855 = vrot.lane.b32.xlu0 %v833, 127
  %v856 = vpop.permute.xlu0 %855
  %857 = vrot.lane.b32.xlu0 %v835, 127
  %v858 = vpop.permute.xlu0 %857
  %859 = vrot.lane.b32.xlu0 %v834, 127
  %v860 = vpop.permute.xlu0 %859
  %861 = vrot.lane.b32.xlu0 %v836, 127
  %v862 = vpop.permute.xlu0 %861
  %v863 = vsel %vm309, %v856, %v860
  %v864 = vsel %vm309, %v858, %v862
  %v865 = vsel %vm309, %v860, %v856
  %v866 = vsel %vm309, %v862, %v858
  %v867 = vsel %vm314, %v833, %v863
  %v868 = vsel %vm315, %v834, %v865
  %v869 = vsel %vm314, %v835, %v864
  %v870 = vsel %vm315, %v836, %v866
  %871 = vrot.lane.b32.xlu0 %v851, 16
  %v872 = vpop.permute.xlu0 %871
  %873 = vrot.lane.b32.xlu0 %v853, 16
  %v874 = vpop.permute.xlu0 %873
  %875 = vrot.lane.b32.xlu0 %v852, 16
  %v876 = vpop.permute.xlu0 %875
  %877 = vrot.lane.b32.xlu0 %v854, 16
  %v878 = vpop.permute.xlu0 %877
  %v879 = vsel %vm53, %v872, %v876
  %v880 = vsel %vm53, %v874, %v878
  %v881 = vsel %vm53, %v876, %v872
  %v882 = vsel %vm53, %v878, %v874
  %v883 = vsel %vm326, %v851, %v881
  %v884 = vsel %vm327, %v852, %v879
  %v885 = vsel %vm326, %v853, %v882
  %v886 = vsel %vm327, %v854, %v880
  %887 = vrot.lane.b32.xlu0 %v833, 16
  %v888 = vpop.permute.xlu0 %887
  %889 = vrot.lane.b32.xlu0 %v835, 16
  %v890 = vpop.permute.xlu0 %889
  %891 = vrot.lane.b32.xlu0 %v834, 16
  %v892 = vpop.permute.xlu0 %891
  %893 = vrot.lane.b32.xlu0 %v836, 16
  %v894 = vpop.permute.xlu0 %893
  %v895 = vsel %vm53, %v888, %v892
  %v896 = vsel %vm53, %v890, %v894
  %v897 = vsel %vm53, %v892, %v888
  %v898 = vsel %vm53, %v894, %v890
  %v899 = vsel %vm326, %v833, %v897
  %v900 = vsel %vm327, %v834, %v895
  %v901 = vsel %vm326, %v835, %v898
  %v902 = vsel %vm327, %v836, %v896
  %903 = vrot.lane.b32.xlu0 %v867, 16
  %v904 = vpop.permute.xlu0 %903
  %905 = vrot.lane.b32.xlu0 %v869, 16
  %v906 = vpop.permute.xlu0 %905
  %907 = vrot.lane.b32.xlu0 %v868, 16
  %v908 = vpop.permute.xlu0 %907
  %909 = vrot.lane.b32.xlu0 %v870, 16
  %v910 = vpop.permute.xlu0 %909
  %v911 = vsel %vm53, %v904, %v908
  %v912 = vsel %vm53, %v906, %v910
  %v913 = vsel %vm53, %v908, %v904
  %v914 = vsel %vm53, %v910, %v906
  %v915 = vsel %vm326, %v867, %v913
  %v916 = vsel %vm327, %v868, %v911
  %v917 = vsel %vm326, %v869, %v914
  %v918 = vsel %vm327, %v870, %v912
  %919 = vrot.lane.b32.xlu0 %v851, 112
  %v920 = vpop.permute.xlu0 %919
  %921 = vrot.lane.b32.xlu0 %v853, 112
  %v922 = vpop.permute.xlu0 %921
  %923 = vrot.lane.b32.xlu0 %v852, 112
  %v924 = vpop.permute.xlu0 %923
  %925 = vrot.lane.b32.xlu0 %v854, 112
  %v926 = vpop.permute.xlu0 %925
  %v927 = vsel %vm350, %v920, %v924
  %v928 = vsel %vm350, %v922, %v926
  %v929 = vsel %vm350, %v924, %v920
  %v930 = vsel %vm350, %v926, %v922
  %v931 = vsel %vm355, %v851, %v927
  %v932 = vsel %vm356, %v852, %v929
  %v933 = vsel %vm355, %v853, %v928
  %v934 = vsel %vm356, %v854, %v930
  %935 = vrot.lane.b32.xlu0 %v833, 112
  %v936 = vpop.permute.xlu0 %935
  %937 = vrot.lane.b32.xlu0 %v835, 112
  %v938 = vpop.permute.xlu0 %937
  %939 = vrot.lane.b32.xlu0 %v834, 112
  %v940 = vpop.permute.xlu0 %939
  %941 = vrot.lane.b32.xlu0 %v836, 112
  %v942 = vpop.permute.xlu0 %941
  %v943 = vsel %vm350, %v936, %v940
  %v944 = vsel %vm350, %v938, %v942
  %v945 = vsel %vm350, %v940, %v936
  %v946 = vsel %vm350, %v942, %v938
  %v947 = vsel %vm355, %v833, %v943
  %v948 = vsel %vm356, %v834, %v945
  %v949 = vsel %vm355, %v835, %v944
  %v950 = vsel %vm356, %v836, %v946
  %951 = vrot.lane.b32.xlu0 %v867, 112
  %v952 = vpop.permute.xlu0 %951
  %953 = vrot.lane.b32.xlu0 %v869, 112
  %v954 = vpop.permute.xlu0 %953
  %955 = vrot.lane.b32.xlu0 %v868, 112
  %v956 = vpop.permute.xlu0 %955
  %957 = vrot.lane.b32.xlu0 %v870, 112
  %v958 = vpop.permute.xlu0 %957
  %v959 = vsel %vm350, %v952, %v956
  %v960 = vsel %vm350, %v954, %v958
  %v961 = vsel %vm350, %v956, %v952
  %v962 = vsel %vm350, %v958, %v954
  %v963 = vsel %vm355, %v867, %v959
  %v964 = vsel %vm356, %v868, %v961
  %v965 = vsel %vm355, %v869, %v960
  %v966 = vsel %vm356, %v870, %v962
  %vm967 = vcmask 130048
  %v968 = vsel %vm967, %v123, 0
  %v970 = vsel %vm967, %v124, 0
  %972 = vmatprep.subr.mxu0 %v950
  %973 = vmatpush1.msra.mxu0 %v949
  %974 = vmatprep.subr.mxu0 %v948
  %975 = vmatpush1.msra.mxu0 %v947
  %976 = vmatprep.subr.mxu0 %v934
  %977 = vmatpush1.msra.mxu0 %v933
  %978 = vmatprep.subr.mxu0 %v932
  %979 = vmatpush1.msra.mxu0 %v931
  %980 = vmatprep.subr.mxu0 %v870
  %981 = vmatpush1.msra.mxu0 %v869
  %982 = vmatprep.subr.mxu0 %v868
  %983 = vmatpush1.msra.mxu0 %v867
  %984 = vmatprep.subr.mxu0 %v836
  %985 = vmatpush1.msra.mxu0 %v835
  %986 = vmatprep.subr.mxu0 %v834
  %987 = vmatpush1.msra.mxu0 %v833
  %988 = vmatprep.subr.mxu0 %v854
  %989 = vmatpush1.msra.mxu0 %v853
  %990 = vmatprep.subr.mxu0 %v852
  %991 = vmatpush1.msra.mxu0 %v851
  %992 = vmatprep.subr.mxu0 %v918
  %993 = vmatpush1.msra.mxu0 %v917
  %994 = vmatprep.subr.mxu0 %v916
  %995 = vmatpush1.msra.mxu0 %v915
  %996 = vmatprep.subr.mxu0 %v902
  %997 = vmatpush1.msra.mxu0 %v901
  %998 = vmatprep.subr.mxu0 %v900
  %999 = vmatpush1.msra.mxu0 %v899
  %1000 = vmatprep.subr.mxu0 %v886
  %1001 = vmatpush1.msra.mxu0 %v885
  %1002 = vmatprep.subr.mxu0 %v884
  %1003 = vmatpush1.msra.mxu0 %v883
  %1004 = vmatprep.subr.mxu0 0.0
  %1005 = vmatpush2.msra.mxu0 0.0
  %1006 = vmatprep.subr.mxu0 0.0
  %1007 = vmatpush2.msra.mxu0 0.0
  %1008 = vmatprep.subr.mxu0 0.0
  %1009 = vmatpush2.msra.mxu0 0.0
  %1010 = vmatprep.subr.mxu0 0.0
  %1011 = vmatpush2.msra.mxu0 0.0
  %1012 = vmatprep.subr.mxu0 0.0
  %1013 = vmatpush2.msra.mxu0 0.0
  %1014 = vmatprep.subr.mxu0 0.0
  %1015 = vmatpush2.msra.mxu0 0.0
  %1016 = vmatprep.subr.mxu0 0.0
  %1017 = vmatpush2.msra.mxu0 0.0
  %1018 = vmatprep.subr.mxu0 0.0
  %1019 = vmatpush2.msra.mxu0 0.0
  %1020 = vmatprep.subr.mxu0 0.0
  %1021 = vmatpush2.msra.mxu0 0.0
  %1022 = vmatprep.subr.mxu0 0.0
  %1023 = vmatpush2.msra.mxu0 0.0
  %1024 = vmatprep.subr.mxu0 0.0
  %1025 = vmatpush2.msra.mxu0 0.0
  %1026 = vmatprep.subr.mxu0 0.0
  %1027 = vmatpush2.msra.mxu0 0.0
  %1028 = vmatprep.subr.mxu0 0.0
  %1029 = vmatpush2.msra.mxu0 0.0
  %1030 = vmatprep.subr.mxu0 0.0
  %1031 = vmatpush2.msra.mxu0 0.0
  %1032 = vmatprep.subr.mxu0 %v966
  %1033 = vmatpush2.msra.mxu0 %v965
  %1034 = vmatprep.subr.mxu0 %v964
  %1035 = vmatpush2.msra.mxu0 %v963
  %1036 = vmatprep.mubr.f32.mxu0 %v968
  %1037 = vmatmul.mubr.f32.gmra.mxu0 %v837
  %v1038 = vpop.f32.mrf.mxu0
  %v1039 = vadd.f32 0.0, %v1038
  %v1040 = vpop.f32.mrf.mxu0
  %v1041 = vadd.f32 0.0, %v1040
  %1042 = vmatprep.mubr.f32.mxu0 %v970
  %1043 = vmatmul.mubr.f32.gmra.mxu0 %v838
  %v1044 = vpop.f32.mrf.mxu0
  %v1045 = vadd.f32 0.0, %v1044
  %v1046 = vpop.f32.mrf.mxu0
  %v1047 = vadd.f32 0.0, %v1046
  %1048 = vdwg.mxu0
  %1049 = vset.pattern.permute.xlu0 4
  %1050 = vperm.xlu0 %1049, %v20
  %v1051 = vpop.permute.xlu0 %1050
  %1053 = vset.pattern.permute.xlu0 4
  %1054 = vperm.xlu0 %1053, %v21
  %v1055 = vpop.permute.xlu0 %1054
  %1057 = vmatprep.subr.mxu0 0.0
  %1058 = vmatpush1.msra.mxu0 %v106
  %1059 = vmatprep.subr.mxu0 0.0
  %1060 = vmatpush1.msra.mxu0 %v105
  %1061 = vmatprep.subr.mxu0 0.0
  %1062 = vmatpush1.msra.mxu0 %v104
  %1063 = vmatprep.subr.mxu0 0.0
  %1064 = vmatpush1.msra.mxu0 %v103
  %1065 = vmatprep.subr.mxu0 0.0
  %1066 = vmatpush1.msra.mxu0 %v102
  %1067 = vmatprep.subr.mxu0 0.0
  %1068 = vmatpush1.msra.mxu0 %v101
  %1069 = vmatprep.subr.mxu0 0.0
  %1070 = vmatpush1.msra.mxu0 %v100
  %1071 = vmatprep.subr.mxu0 0.0
  %1072 = vmatpush1.msra.mxu0 %v99
  %1073 = vmatprep.subr.mxu0 0.0
  %1074 = vmatpush1.msra.mxu0 %v98
  %1075 = vmatprep.subr.mxu0 0.0
  %1076 = vmatpush1.msra.mxu0 %v97
  %1077 = vmatprep.subr.mxu0 0.0
  %1078 = vmatpush1.msra.mxu0 %v96
  %1079 = vmatprep.subr.mxu0 0.0
  %1080 = vmatpush1.msra.mxu0 %v95
  %1081 = vmatprep.subr.mxu0 0.0
  %1082 = vmatpush1.msra.mxu0 %v94
  %1083 = vmatprep.subr.mxu0 0.0
  %1084 = vmatpush1.msra.mxu0 %v93
  %1085 = vmatprep.subr.mxu0 0.0
  %1086 = vmatpush1.msra.mxu0 %v92
  %1087 = vmatprep.subr.mxu0 0.0
  %1088 = vmatpush1.msra.mxu0 %v91
  %1089 = vmatprep.subr.mxu0 0.0
  %1090 = vmatpush2.msra.mxu0 %v122
  %1091 = vmatprep.subr.mxu0 0.0
  %1092 = vmatpush2.msra.mxu0 %v121
  %1093 = vmatprep.subr.mxu0 0.0
  %1094 = vmatpush2.msra.mxu0 %v120
  %1095 = vmatprep.subr.mxu0 0.0
  %1096 = vmatpush2.msra.mxu0 %v119
  %1097 = vmatprep.subr.mxu0 0.0
  %1098 = vmatpush2.msra.mxu0 %v118
  %1099 = vmatprep.subr.mxu0 0.0
  %1100 = vmatpush2.msra.mxu0 %v117
  %1101 = vmatprep.subr.mxu0 0.0
  %1102 = vmatpush2.msra.mxu0 %v116
  %1103 = vmatprep.subr.mxu0 0.0
  %1104 = vmatpush2.msra.mxu0 %v115
  %1105 = vmatprep.subr.mxu0 0.0
  %1106 = vmatpush2.msra.mxu0 %v114
  %1107 = vmatprep.subr.mxu0 0.0
  %1108 = vmatpush2.msra.mxu0 %v113
  %1109 = vmatprep.subr.mxu0 0.0
  %1110 = vmatpush2.msra.mxu0 %v112
  %1111 = vmatprep.subr.mxu0 0.0
  %1112 = vmatpush2.msra.mxu0 %v111
  %1113 = vmatprep.subr.mxu0 0.0
  %1114 = vmatpush2.msra.mxu0 %v110
  %1115 = vmatprep.subr.mxu0 0.0
  %1116 = vmatpush2.msra.mxu0 %v109
  %1117 = vmatprep.subr.mxu0 0.0
  %1118 = vmatpush2.msra.mxu0 %v108
  %1119 = vmatprep.subr.mxu0 0.0
  %1120 = vmatpush2.msra.mxu0 %v107
  %1121 = vmatprep.mubr.f32.mxu0 %v1041
  %1122 = vmatmul.mubr.f32.gmra.mxu0 %v1039
  %v1123 = vpop.f32.mrf.mxu0
  %v1124 = vadd.f32 %v1051, %v1123
  %v1125 = vpop.f32.mrf.mxu0
  %1126 = vmatprep.mubr.f32.mxu0 %v1047
  %1127 = vmatmul.mubr.f32.gmra.mxu0 %v1045
  %v1128 = vpop.f32.mrf.mxu0
  %v1129 = vadd.f32 %v1055, %v1128
  %v1130 = vpop.f32.mrf.mxu0
  %1131 = vdwg.mxu0
  %vm1132 = vcmp.ge.f32.partialorder %v1124, 0.0
  %vm1133 = vcmp.ge.f32.partialorder %v1129, 0.0
  %1134 = vset.pattern.permute.xlu0 5
  %1135 = vperm.xlu0 %1134, %v20
  %v1136 = vpop.permute.xlu0 %1135
  %1138 = vset.pattern.permute.xlu0 5
  %1139 = vperm.xlu0 %1138, %v21
  %v1140 = vpop.permute.xlu0 %1139
  %v1142 = vmul.f32 %v1124, %v1136
  %v1143 = vmul.f32 %v1129, %v1140
  %v1144 = vsel %vm1132, %v1124, %v1142
  %v1145 = vsel %vm1133, %v1129, %v1143
  %v1146 = vld [vmem:[%s2] sm:$0xff]
  %v1147 = vld [vmem:[%s2 + $0x8] sm:$0xff]
  %v1148 = vld [vmem:[%s2 + $0x10] sm:$0xff]
  %v1149 = vld [vmem:[%s2 + $0x18] sm:$0xff]
  %v1150 = vld [vmem:[%s2 + $0x20] sm:$0xff]
  %v1151 = vld [vmem:[%s2 + $0x28] sm:$0xff]
  %v1152 = vld [vmem:[%s2 + $0x30] sm:$0xff]
  %v1153 = vld [vmem:[%s2 + $0x38] sm:$0xff]
  %vm1154 = vcmask 523264
  %v1156 = vsel %vm1154, %v1144, 0
  %v1159 = vsel %vm1154, %v1145, 0
  %1161 = vmatprep.subr.mxu0 0.0
  %1162 = vmatpush1.msra.mxu0 0.0
  %1163 = vmatprep.subr.mxu0 0.0
  %1164 = vmatpush1.msra.mxu0 0.0
  %1165 = vmatprep.subr.mxu0 0.0
  %1166 = vmatpush1.msra.mxu0 0.0
  %1167 = vmatprep.subr.mxu0 0.0
  %1168 = vmatpush1.msra.mxu0 0.0
  %1169 = vmatprep.subr.mxu0 0.0
  %1170 = vmatpush1.msra.mxu0 0.0
  %1171 = vmatprep.subr.mxu0 0.0
  %1172 = vmatpush1.msra.mxu0 0.0
  %1173 = vmatprep.subr.mxu0 0.0
  %1174 = vmatpush1.msra.mxu0 0.0
  %1175 = vmatprep.subr.mxu0 0.0
  %1176 = vmatpush1.msra.mxu0 0.0
  %1177 = vmatprep.subr.mxu0 0.0
  %1178 = vmatpush1.msra.mxu0 %v1153
  %1179 = vmatprep.subr.mxu0 0.0
  %1180 = vmatpush1.msra.mxu0 %v1152
  %1181 = vmatprep.subr.mxu0 0.0
  %1182 = vmatpush1.msra.mxu0 %v1151
  %1183 = vmatprep.subr.mxu0 0.0
  %1184 = vmatpush1.msra.mxu0 %v1150
  %1185 = vmatprep.subr.mxu0 0.0
  %1186 = vmatpush1.msra.mxu0 %v1149
  %1187 = vmatprep.subr.mxu0 0.0
  %1188 = vmatpush1.msra.mxu0 %v1148
  %1189 = vmatprep.subr.mxu0 0.0
  %1190 = vmatpush1.msra.mxu0 %v1147
  %1191 = vmatprep.subr.mxu0 0.0
  %1192 = vmatpush1.msra.mxu0 %v1146
  %1193 = vmatprep.subr.mxu0 0.0
  %1194 = vmatpush2.msra.mxu0 0.0
  %1195 = vmatprep.subr.mxu0 0.0
  %1196 = vmatpush2.msra.mxu0 0.0
  %1197 = vmatprep.subr.mxu0 0.0
  %1198 = vmatpush2.msra.mxu0 0.0
  %1199 = vmatprep.subr.mxu0 0.0
  %1200 = vmatpush2.msra.mxu0 0.0
  %1201 = vmatprep.subr.mxu0 0.0
  %1202 = vmatpush2.msra.mxu0 0.0
  %1203 = vmatprep.subr.mxu0 0.0
  %1204 = vmatpush2.msra.mxu0 0.0
  %1205 = vmatprep.subr.mxu0 0.0
  %1206 = vmatpush2.msra.mxu0 0.0
  %1207 = vmatprep.subr.mxu0 0.0
  %1208 = vmatpush2.msra.mxu0 0.0
  %1209 = vmatprep.subr.mxu0 0.0
  %1210 = vmatpush2.msra.mxu0 0.0
  %1211 = vmatprep.subr.mxu0 0.0
  %1212 = vmatpush2.msra.mxu0 0.0
  %1213 = vmatprep.subr.mxu0 0.0
  %1214 = vmatpush2.msra.mxu0 0.0
  %1215 = vmatprep.subr.mxu0 0.0
  %1216 = vmatpush2.msra.mxu0 0.0
  %1217 = vmatprep.subr.mxu0 0.0
  %1218 = vmatpush2.msra.mxu0 0.0
  %1219 = vmatprep.subr.mxu0 0.0
  %1220 = vmatpush2.msra.mxu0 0.0
  %1221 = vmatprep.subr.mxu0 0.0
  %1222 = vmatpush2.msra.mxu0 0.0
  %1223 = vmatprep.subr.mxu0 0.0
  %1224 = vmatpush2.msra.mxu0 0.0
  %1225 = vmatprep.mubr.f32.mxu0 0.0
  %1226 = vmatmul.mubr.f32.gmra.mxu0 %v1156
  %v1227 = vpop.f32.mrf.mxu0
  %v1228 = vadd.f32 0.0, %v1227
  %v1229 = vpop.f32.mrf.mxu0
  %1230 = vmatprep.mubr.f32.mxu0 0.0
  %1231 = vmatmul.mubr.f32.gmra.mxu0 %v1159
  %v1232 = vpop.f32.mrf.mxu0
  %v1233 = vadd.f32 0.0, %v1232
  %v1234 = vpop.f32.mrf.mxu0
  %1235 = vdwg.mxu0
  %s1236 = scalar_lea.vmem %s2, 64
  %v1237 = vld [vmem:[%s1236] sm:$0xff]
  %v1238 = vld [vmem:[%s1236 + $0x8] sm:$0xff]
  %v1239 = vld [vmem:[%s1236 + $0x10] sm:$0xff]
  %v1240 = vld [vmem:[%s1236 + $0x18] sm:$0xff]
  %v1241 = vld [vmem:[%s1236 + $0x20] sm:$0xff]
  %v1242 = vld [vmem:[%s1236 + $0x28] sm:$0xff]
  %v1243 = vld [vmem:[%s1236 + $0x30] sm:$0xff]
  %v1244 = vld [vmem:[%s1236 + $0x38] sm:$0xff]
  %1245 = vmatprep.subr.mxu0 0.0
  %1246 = vmatpush1.msra.mxu0 0.0
  %1247 = vmatprep.subr.mxu0 0.0
  %1248 = vmatpush1.msra.mxu0 0.0
  %1249 = vmatprep.subr.mxu0 0.0
  %1250 = vmatpush1.msra.mxu0 0.0
  %1251 = vmatprep.subr.mxu0 0.0
  %1252 = vmatpush1.msra.mxu0 0.0
  %1253 = vmatprep.subr.mxu0 0.0
  %1254 = vmatpush1.msra.mxu0 0.0
  %1255 = vmatprep.subr.mxu0 0.0
  %1256 = vmatpush1.msra.mxu0 0.0
  %1257 = vmatprep.subr.mxu0 0.0
  %1258 = vmatpush1.msra.mxu0 0.0
  %1259 = vmatprep.subr.mxu0 0.0
  %1260 = vmatpush1.msra.mxu0 0.0
  %1261 = vmatprep.subr.mxu0 0.0
  %1262 = vmatpush1.msra.mxu0 %v1244
  %1263 = vmatprep.subr.mxu0 0.0
  %1264 = vmatpush1.msra.mxu0 %v1243
  %1265 = vmatprep.subr.mxu0 0.0
  %1266 = vmatpush1.msra.mxu0 %v1242
  %1267 = vmatprep.subr.mxu0 0.0
  %1268 = vmatpush1.msra.mxu0 %v1241
  %1269 = vmatprep.subr.mxu0 0.0
  %1270 = vmatpush1.msra.mxu0 %v1240
  %1271 = vmatprep.subr.mxu0 0.0
  %1272 = vmatpush1.msra.mxu0 %v1239
  %1273 = vmatprep.subr.mxu0 0.0
  %1274 = vmatpush1.msra.mxu0 %v1238
  %1275 = vmatprep.subr.mxu0 0.0
  %1276 = vmatpush1.msra.mxu0 %v1237
  %1277 = vmatprep.subr.mxu0 0.0
  %1278 = vmatpush2.msra.mxu0 0.0
  %1279 = vmatprep.subr.mxu0 0.0
  %1280 = vmatpush2.msra.mxu0 0.0
  %1281 = vmatprep.subr.mxu0 0.0
  %1282 = vmatpush2.msra.mxu0 0.0
  %1283 = vmatprep.subr.mxu0 0.0
  %1284 = vmatpush2.msra.mxu0 0.0
  %1285 = vmatprep.subr.mxu0 0.0
  %1286 = vmatpush2.msra.mxu0 0.0
  %1287 = vmatprep.subr.mxu0 0.0
  %1288 = vmatpush2.msra.mxu0 0.0
  %1289 = vmatprep.subr.mxu0 0.0
  %1290 = vmatpush2.msra.mxu0 0.0
  %1291 = vmatprep.subr.mxu0 0.0
  %1292 = vmatpush2.msra.mxu0 0.0
  %1293 = vmatprep.subr.mxu0 0.0
  %1294 = vmatpush2.msra.mxu0 0.0
  %1295 = vmatprep.subr.mxu0 0.0
  %1296 = vmatpush2.msra.mxu0 0.0
  %1297 = vmatprep.subr.mxu0 0.0
  %1298 = vmatpush2.msra.mxu0 0.0
  %1299 = vmatprep.subr.mxu0 0.0
  %1300 = vmatpush2.msra.mxu0 0.0
  %1301 = vmatprep.subr.mxu0 0.0
  %1302 = vmatpush2.msra.mxu0 0.0
  %1303 = vmatprep.subr.mxu0 0.0
  %1304 = vmatpush2.msra.mxu0 0.0
  %1305 = vmatprep.subr.mxu0 0.0
  %1306 = vmatpush2.msra.mxu0 0.0
  %1307 = vmatprep.subr.mxu0 0.0
  %1308 = vmatpush2.msra.mxu0 0.0
  %1309 = vmatprep.mubr.f32.mxu0 0.0
  %1310 = vmatmul.mubr.f32.gmra.mxu0 %v1156
  %v1311 = vpop.f32.mrf.mxu0
  %v1312 = vadd.f32 0.0, %v1311
  %v1313 = vpop.f32.mrf.mxu0
  %1314 = vmatprep.mubr.f32.mxu0 0.0
  %1315 = vmatmul.mubr.f32.gmra.mxu0 %v1159
  %v1316 = vpop.f32.mrf.mxu0
  %v1317 = vadd.f32 0.0, %v1316
  %v1318 = vpop.f32.mrf.mxu0
  %1319 = vdwg.mxu0
  %s1320 = scalar_lea.vmem %s2, 128
  %v1321 = vld [vmem:[%s1320] sm:$0xff]
  %v1322 = vld [vmem:[%s1320 + $0x8] sm:$0xff]
  %v1323 = vld [vmem:[%s1320 + $0x10] sm:$0xff]
  %v1324 = vld [vmem:[%s1320 + $0x18] sm:$0xff]
  %v1325 = vld [vmem:[%s1320 + $0x20] sm:$0xff]
  %v1326 = vld [vmem:[%s1320 + $0x28] sm:$0xff]
  %v1327 = vld [vmem:[%s1320 + $0x30] sm:$0xff]
  %v1328 = vld [vmem:[%s1320 + $0x38] sm:$0xff]
  %1329 = vmatprep.subr.mxu0 0.0
  %1330 = vmatpush1.msra.mxu0 0.0
  %1331 = vmatprep.subr.mxu0 0.0
  %1332 = vmatpush1.msra.mxu0 0.0
  %1333 = vmatprep.subr.mxu0 0.0
  %1334 = vmatpush1.msra.mxu0 0.0
  %1335 = vmatprep.subr.mxu0 0.0
  %1336 = vmatpush1.msra.mxu0 0.0
  %1337 = vmatprep.subr.mxu0 0.0
  %1338 = vmatpush1.msra.mxu0 0.0
  %1339 = vmatprep.subr.mxu0 0.0
  %1340 = vmatpush1.msra.mxu0 0.0
  %1341 = vmatprep.subr.mxu0 0.0
  %1342 = vmatpush1.msra.mxu0 0.0
  %1343 = vmatprep.subr.mxu0 0.0
  %1344 = vmatpush1.msra.mxu0 0.0
  %1345 = vmatprep.subr.mxu0 0.0
  %1346 = vmatpush1.msra.mxu0 %v1328
  %1347 = vmatprep.subr.mxu0 0.0
  %1348 = vmatpush1.msra.mxu0 %v1327
  %1349 = vmatprep.subr.mxu0 0.0
  %1350 = vmatpush1.msra.mxu0 %v1326
  %1351 = vmatprep.subr.mxu0 0.0
  %1352 = vmatpush1.msra.mxu0 %v1325
  %1353 = vmatprep.subr.mxu0 0.0
  %1354 = vmatpush1.msra.mxu0 %v1324
  %1355 = vmatprep.subr.mxu0 0.0
  %1356 = vmatpush1.msra.mxu0 %v1323
  %1357 = vmatprep.subr.mxu0 0.0
  %1358 = vmatpush1.msra.mxu0 %v1322
  %1359 = vmatprep.subr.mxu0 0.0
  %1360 = vmatpush1.msra.mxu0 %v1321
  %1361 = vmatprep.subr.mxu0 0.0
  %1362 = vmatpush2.msra.mxu0 0.0
  %1363 = vmatprep.subr.mxu0 0.0
  %1364 = vmatpush2.msra.mxu0 0.0
  %1365 = vmatprep.subr.mxu0 0.0
  %1366 = vmatpush2.msra.mxu0 0.0
  %1367 = vmatprep.subr.mxu0 0.0
  %1368 = vmatpush2.msra.mxu0 0.0
  %1369 = vmatprep.subr.mxu0 0.0
  %1370 = vmatpush2.msra.mxu0 0.0
  %1371 = vmatprep.subr.mxu0 0.0
  %1372 = vmatpush2.msra.mxu0 0.0
  %1373 = vmatprep.subr.mxu0 0.0
  %1374 = vmatpush2.msra.mxu0 0.0
  %1375 = vmatprep.subr.mxu0 0.0
  %1376 = vmatpush2.msra.mxu0 0.0
  %1377 = vmatprep.subr.mxu0 0.0
  %1378 = vmatpush2.msra.mxu0 0.0
  %1379 = vmatprep.subr.mxu0 0.0
  %1380 = vmatpush2.msra.mxu0 0.0
  %1381 = vmatprep.subr.mxu0 0.0
  %1382 = vmatpush2.msra.mxu0 0.0
  %1383 = vmatprep.subr.mxu0 0.0
  %1384 = vmatpush2.msra.mxu0 0.0
  %1385 = vmatprep.subr.mxu0 0.0
  %1386 = vmatpush2.msra.mxu0 0.0
  %1387 = vmatprep.subr.mxu0 0.0
  %1388 = vmatpush2.msra.mxu0 0.0
  %1389 = vmatprep.subr.mxu0 0.0
  %1390 = vmatpush2.msra.mxu0 0.0
  %1391 = vmatprep.subr.mxu0 0.0
  %1392 = vmatpush2.msra.mxu0 0.0
  %1393 = vmatprep.mubr.f32.mxu0 0.0
  %1394 = vmatmul.mubr.f32.gmra.mxu0 %v1156
  %v1395 = vpop.f32.mrf.mxu0
  %v1396 = vadd.f32 0.0, %v1395
  %v1397 = vpop.f32.mrf.mxu0
  %1398 = vmatprep.mubr.f32.mxu0 0.0
  %1399 = vmatmul.mubr.f32.gmra.mxu0 %v1159
  %v1400 = vpop.f32.mrf.mxu0
  %v1401 = vadd.f32 0.0, %v1400
  %v1402 = vpop.f32.mrf.mxu0
  %1403 = vdwg.mxu0
  %s1404 = scalar_lea.vmem %s2, 192
  %v1405 = vld [vmem:[%s1404] sm:$0xff]
  %v1406 = vld [vmem:[%s1404 + $0x8] sm:$0xff]
  %v1407 = vld [vmem:[%s1404 + $0x10] sm:$0xff]
  %v1408 = vld [vmem:[%s1404 + $0x18] sm:$0xff]
  %v1409 = vld [vmem:[%s1404 + $0x20] sm:$0xff]
  %v1410 = vld [vmem:[%s1404 + $0x28] sm:$0xff]
  %v1411 = vld [vmem:[%s1404 + $0x30] sm:$0xff]
  %v1412 = vld [vmem:[%s1404 + $0x38] sm:$0xff]
  %1413 = vmatprep.subr.mxu0 0.0
  %1414 = vmatpush1.msra.mxu0 0.0
  %1415 = vmatprep.subr.mxu0 0.0
  %1416 = vmatpush1.msra.mxu0 0.0
  %1417 = vmatprep.subr.mxu0 0.0
  %1418 = vmatpush1.msra.mxu0 0.0
  %1419 = vmatprep.subr.mxu0 0.0
  %1420 = vmatpush1.msra.mxu0 0.0
  %1421 = vmatprep.subr.mxu0 0.0
  %1422 = vmatpush1.msra.mxu0 0.0
  %1423 = vmatprep.subr.mxu0 0.0
  %1424 = vmatpush1.msra.mxu0 0.0
  %1425 = vmatprep.subr.mxu0 0.0
  %1426 = vmatpush1.msra.mxu0 0.0
  %1427 = vmatprep.subr.mxu0 0.0
  %1428 = vmatpush1.msra.mxu0 0.0
  %1429 = vmatprep.subr.mxu0 0.0
  %1430 = vmatpush1.msra.mxu0 %v1412
  %1431 = vmatprep.subr.mxu0 0.0
  %1432 = vmatpush1.msra.mxu0 %v1411
  %1433 = vmatprep.subr.mxu0 0.0
  %1434 = vmatpush1.msra.mxu0 %v1410
  %1435 = vmatprep.subr.mxu0 0.0
  %1436 = vmatpush1.msra.mxu0 %v1409
  %1437 = vmatprep.subr.mxu0 0.0
  %1438 = vmatpush1.msra.mxu0 %v1408
  %1439 = vmatprep.subr.mxu0 0.0
  %1440 = vmatpush1.msra.mxu0 %v1407
  %1441 = vmatprep.subr.mxu0 0.0
  %1442 = vmatpush1.msra.mxu0 %v1406
  %1443 = vmatprep.subr.mxu0 0.0
  %1444 = vmatpush1.msra.mxu0 %v1405
  %1445 = vmatprep.subr.mxu0 0.0
  %1446 = vmatpush2.msra.mxu0 0.0
  %1447 = vmatprep.subr.mxu0 0.0
  %1448 = vmatpush2.msra.mxu0 0.0
  %1449 = vmatprep.subr.mxu0 0.0
  %1450 = vmatpush2.msra.mxu0 0.0
  %1451 = vmatprep.subr.mxu0 0.0
  %1452 = vmatpush2.msra.mxu0 0.0
  %1453 = vmatprep.subr.mxu0 0.0
  %1454 = vmatpush2.msra.mxu0 0.0
  %1455 = vmatprep.subr.mxu0 0.0
  %1456 = vmatpush2.msra.mxu0 0.0
  %1457 = vmatprep.subr.mxu0 0.0
  %1458 = vmatpush2.msra.mxu0 0.0
  %1459 = vmatprep.subr.mxu0 0.0
  %1460 = vmatpush2.msra.mxu0 0.0
  %1461 = vmatprep.subr.mxu0 0.0
  %1462 = vmatpush2.msra.mxu0 0.0
  %1463 = vmatprep.subr.mxu0 0.0
  %1464 = vmatpush2.msra.mxu0 0.0
  %1465 = vmatprep.subr.mxu0 0.0
  %1466 = vmatpush2.msra.mxu0 0.0
  %1467 = vmatprep.subr.mxu0 0.0
  %1468 = vmatpush2.msra.mxu0 0.0
  %1469 = vmatprep.subr.mxu0 0.0
  %1470 = vmatpush2.msra.mxu0 0.0
  %1471 = vmatprep.subr.mxu0 0.0
  %1472 = vmatpush2.msra.mxu0 0.0
  %1473 = vmatprep.subr.mxu0 0.0
  %1474 = vmatpush2.msra.mxu0 0.0
  %1475 = vmatprep.subr.mxu0 0.0
  %1476 = vmatpush2.msra.mxu0 0.0
  %1477 = vmatprep.mubr.f32.mxu0 0.0
  %1478 = vmatmul.mubr.f32.gmra.mxu0 %v1156
  %v1479 = vpop.f32.mrf.mxu0
  %v1480 = vadd.f32 0.0, %v1479
  %v1481 = vpop.f32.mrf.mxu0
  %1482 = vmatprep.mubr.f32.mxu0 0.0
  %1483 = vmatmul.mubr.f32.gmra.mxu0 %v1159
  %v1484 = vpop.f32.mrf.mxu0
  %v1485 = vadd.f32 0.0, %v1484
  %v1486 = vpop.f32.mrf.mxu0
  %1487 = vdwg.mxu0
  %s1488 = scalar_lea.vmem %s2, 256
  %v1489 = vld [vmem:[%s1488] sm:$0xff]
  %v1490 = vld [vmem:[%s1488 + $0x8] sm:$0xff]
  %v1491 = vld [vmem:[%s1488 + $0x10] sm:$0xff]
  %v1492 = vld [vmem:[%s1488 + $0x18] sm:$0xff]
  %v1493 = vld [vmem:[%s1488 + $0x20] sm:$0xff]
  %v1494 = vld [vmem:[%s1488 + $0x28] sm:$0xff]
  %v1495 = vld [vmem:[%s1488 + $0x30] sm:$0xff]
  %v1496 = vld [vmem:[%s1488 + $0x38] sm:$0xff]
  %1497 = vmatprep.subr.mxu0 0.0
  %1498 = vmatpush1.msra.mxu0 0.0
  %1499 = vmatprep.subr.mxu0 0.0
  %1500 = vmatpush1.msra.mxu0 0.0
  %1501 = vmatprep.subr.mxu0 0.0
  %1502 = vmatpush1.msra.mxu0 0.0
  %1503 = vmatprep.subr.mxu0 0.0
  %1504 = vmatpush1.msra.mxu0 0.0
  %1505 = vmatprep.subr.mxu0 0.0
  %1506 = vmatpush1.msra.mxu0 0.0
  %1507 = vmatprep.subr.mxu0 0.0
  %1508 = vmatpush1.msra.mxu0 0.0
  %1509 = vmatprep.subr.mxu0 0.0
  %1510 = vmatpush1.msra.mxu0 0.0
  %1511 = vmatprep.subr.mxu0 0.0
  %1512 = vmatpush1.msra.mxu0 0.0
  %1513 = vmatprep.subr.mxu0 0.0
  %1514 = vmatpush1.msra.mxu0 %v1496
  %1515 = vmatprep.subr.mxu0 0.0
  %1516 = vmatpush1.msra.mxu0 %v1495
  %1517 = vmatprep.subr.mxu0 0.0
  %1518 = vmatpush1.msra.mxu0 %v1494
  %1519 = vmatprep.subr.mxu0 0.0
  %1520 = vmatpush1.msra.mxu0 %v1493
  %1521 = vmatprep.subr.mxu0 0.0
  %1522 = vmatpush1.msra.mxu0 %v1492
  %1523 = vmatprep.subr.mxu0 0.0
  %1524 = vmatpush1.msra.mxu0 %v1491
  %1525 = vmatprep.subr.mxu0 0.0
  %1526 = vmatpush1.msra.mxu0 %v1490
  %1527 = vmatprep.subr.mxu0 0.0
  %1528 = vmatpush1.msra.mxu0 %v1489
  %1529 = vmatprep.subr.mxu0 0.0
  %1530 = vmatpush2.msra.mxu0 0.0
  %1531 = vmatprep.subr.mxu0 0.0
  %1532 = vmatpush2.msra.mxu0 0.0
  %1533 = vmatprep.subr.mxu0 0.0
  %1534 = vmatpush2.msra.mxu0 0.0
  %1535 = vmatprep.subr.mxu0 0.0
  %1536 = vmatpush2.msra.mxu0 0.0
  %1537 = vmatprep.subr.mxu0 0.0
  %1538 = vmatpush2.msra.mxu0 0.0
  %1539 = vmatprep.subr.mxu0 0.0
  %1540 = vmatpush2.msra.mxu0 0.0
  %1541 = vmatprep.subr.mxu0 0.0
  %1542 = vmatpush2.msra.mxu0 0.0
  %1543 = vmatprep.subr.mxu0 0.0
  %1544 = vmatpush2.msra.mxu0 0.0
  %1545 = vmatprep.subr.mxu0 0.0
  %1546 = vmatpush2.msra.mxu0 0.0
  %1547 = vmatprep.subr.mxu0 0.0
  %1548 = vmatpush2.msra.mxu0 0.0
  %1549 = vmatprep.subr.mxu0 0.0
  %1550 = vmatpush2.msra.mxu0 0.0
  %1551 = vmatprep.subr.mxu0 0.0
  %1552 = vmatpush2.msra.mxu0 0.0
  %1553 = vmatprep.subr.mxu0 0.0
  %1554 = vmatpush2.msra.mxu0 0.0
  %1555 = vmatprep.subr.mxu0 0.0
  %1556 = vmatpush2.msra.mxu0 0.0
  %1557 = vmatprep.subr.mxu0 0.0
  %1558 = vmatpush2.msra.mxu0 0.0
  %1559 = vmatprep.subr.mxu0 0.0
  %1560 = vmatpush2.msra.mxu0 0.0
  %1561 = vmatprep.mubr.f32.mxu0 0.0
  %1562 = vmatmul.mubr.f32.gmra.mxu0 %v1156
  %v1563 = vpop.f32.mrf.mxu0
  %v1564 = vadd.f32 0.0, %v1563
  %v1565 = vpop.f32.mrf.mxu0
  %1566 = vmatprep.mubr.f32.mxu0 0.0
  %1567 = vmatmul.mubr.f32.gmra.mxu0 %v1159
  %v1568 = vpop.f32.mrf.mxu0
  %v1569 = vadd.f32 0.0, %v1568
  %v1570 = vpop.f32.mrf.mxu0
  %1571 = vdwg.mxu0
  %s1572 = scalar_lea.vmem %s2, 320
  %v1573 = vld [vmem:[%s1572] sm:$0xff]
  %v1574 = vld [vmem:[%s1572 + $0x8] sm:$0xff]
  %v1575 = vld [vmem:[%s1572 + $0x10] sm:$0xff]
  %v1576 = vld [vmem:[%s1572 + $0x18] sm:$0xff]
  %v1577 = vld [vmem:[%s1572 + $0x20] sm:$0xff]
  %v1578 = vld [vmem:[%s1572 + $0x28] sm:$0xff]
  %v1579 = vld [vmem:[%s1572 + $0x30] sm:$0xff]
  %v1580 = vld [vmem:[%s1572 + $0x38] sm:$0xff]
  %1581 = vmatprep.subr.mxu0 0.0
  %1582 = vmatpush1.msra.mxu0 0.0
  %1583 = vmatprep.subr.mxu0 0.0
  %1584 = vmatpush1.msra.mxu0 0.0
  %1585 = vmatprep.subr.mxu0 0.0
  %1586 = vmatpush1.msra.mxu0 0.0
  %1587 = vmatprep.subr.mxu0 0.0
  %1588 = vmatpush1.msra.mxu0 0.0
  %1589 = vmatprep.subr.mxu0 0.0
  %1590 = vmatpush1.msra.mxu0 0.0
  %1591 = vmatprep.subr.mxu0 0.0
  %1592 = vmatpush1.msra.mxu0 0.0
  %1593 = vmatprep.subr.mxu0 0.0
  %1594 = vmatpush1.msra.mxu0 0.0
  %1595 = vmatprep.subr.mxu0 0.0
  %1596 = vmatpush1.msra.mxu0 0.0
  %1597 = vmatprep.subr.mxu0 0.0
  %1598 = vmatpush1.msra.mxu0 %v1580
  %1599 = vmatprep.subr.mxu0 0.0
  %1600 = vmatpush1.msra.mxu0 %v1579
  %1601 = vmatprep.subr.mxu0 0.0
  %1602 = vmatpush1.msra.mxu0 %v1578
  %1603 = vmatprep.subr.mxu0 0.0
  %1604 = vmatpush1.msra.mxu0 %v1577
  %1605 = vmatprep.subr.mxu0 0.0
  %1606 = vmatpush1.msra.mxu0 %v1576
  %1607 = vmatprep.subr.mxu0 0.0
  %1608 = vmatpush1.msra.mxu0 %v1575
  %1609 = vmatprep.subr.mxu0 0.0
  %1610 = vmatpush1.msra.mxu0 %v1574
  %1611 = vmatprep.subr.mxu0 0.0
  %1612 = vmatpush1.msra.mxu0 %v1573
  %1613 = vmatprep.subr.mxu0 0.0
  %1614 = vmatpush2.msra.mxu0 0.0
  %1615 = vmatprep.subr.mxu0 0.0
  %1616 = vmatpush2.msra.mxu0 0.0
  %1617 = vmatprep.subr.mxu0 0.0
  %1618 = vmatpush2.msra.mxu0 0.0
  %1619 = vmatprep.subr.mxu0 0.0
  %1620 = vmatpush2.msra.mxu0 0.0
  %1621 = vmatprep.subr.mxu0 0.0
  %1622 = vmatpush2.msra.mxu0 0.0
  %1623 = vmatprep.subr.mxu0 0.0
  %1624 = vmatpush2.msra.mxu0 0.0
  %1625 = vmatprep.subr.mxu0 0.0
  %1626 = vmatpush2.msra.mxu0 0.0
  %1627 = vmatprep.subr.mxu0 0.0
  %1628 = vmatpush2.msra.mxu0 0.0
  %1629 = vmatprep.subr.mxu0 0.0
  %1630 = vmatpush2.msra.mxu0 0.0
  %1631 = vmatprep.subr.mxu0 0.0
  %1632 = vmatpush2.msra.mxu0 0.0
  %1633 = vmatprep.subr.mxu0 0.0
  %1634 = vmatpush2.msra.mxu0 0.0
  %1635 = vmatprep.subr.mxu0 0.0
  %1636 = vmatpush2.msra.mxu0 0.0
  %1637 = vmatprep.subr.mxu0 0.0
  %1638 = vmatpush2.msra.mxu0 0.0
  %1639 = vmatprep.subr.mxu0 0.0
  %1640 = vmatpush2.msra.mxu0 0.0
  %1641 = vmatprep.subr.mxu0 0.0
  %1642 = vmatpush2.msra.mxu0 0.0
  %1643 = vmatprep.subr.mxu0 0.0
  %1644 = vmatpush2.msra.mxu0 0.0
  %1645 = vmatprep.mubr.f32.mxu0 0.0
  %1646 = vmatmul.mubr.f32.gmra.mxu0 %v1156
  %v1647 = vpop.f32.mrf.mxu0
  %v1648 = vadd.f32 0.0, %v1647
  %v1649 = vpop.f32.mrf.mxu0
  %1650 = vmatprep.mubr.f32.mxu0 0.0
  %1651 = vmatmul.mubr.f32.gmra.mxu0 %v1159
  %v1652 = vpop.f32.mrf.mxu0
  %v1653 = vadd.f32 0.0, %v1652
  %v1654 = vpop.f32.mrf.mxu0
  %1655 = vdwg.mxu0
  %s1656 = scalar_lea.vmem %s2, 384
  %v1657 = vld [vmem:[%s1656] sm:$0xff]
  %v1658 = vld [vmem:[%s1656 + $0x8] sm:$0xff]
  %v1659 = vld [vmem:[%s1656 + $0x10] sm:$0xff]
  %v1660 = vld [vmem:[%s1656 + $0x18] sm:$0xff]
  %v1661 = vld [vmem:[%s1656 + $0x20] sm:$0xff]
  %v1662 = vld [vmem:[%s1656 + $0x28] sm:$0xff]
  %v1663 = vld [vmem:[%s1656 + $0x30] sm:$0xff]
  %v1664 = vld [vmem:[%s1656 + $0x38] sm:$0xff]
  %1665 = vmatprep.subr.mxu0 0.0
  %1666 = vmatpush1.msra.mxu0 0.0
  %1667 = vmatprep.subr.mxu0 0.0
  %1668 = vmatpush1.msra.mxu0 0.0
  %1669 = vmatprep.subr.mxu0 0.0
  %1670 = vmatpush1.msra.mxu0 0.0
  %1671 = vmatprep.subr.mxu0 0.0
  %1672 = vmatpush1.msra.mxu0 0.0
  %1673 = vmatprep.subr.mxu0 0.0
  %1674 = vmatpush1.msra.mxu0 0.0
  %1675 = vmatprep.subr.mxu0 0.0
  %1676 = vmatpush1.msra.mxu0 0.0
  %1677 = vmatprep.subr.mxu0 0.0
  %1678 = vmatpush1.msra.mxu0 0.0
  %1679 = vmatprep.subr.mxu0 0.0
  %1680 = vmatpush1.msra.mxu0 0.0
  %1681 = vmatprep.subr.mxu0 0.0
  %1682 = vmatpush1.msra.mxu0 %v1664
  %1683 = vmatprep.subr.mxu0 0.0
  %1684 = vmatpush1.msra.mxu0 %v1663
  %1685 = vmatprep.subr.mxu0 0.0
  %1686 = vmatpush1.msra.mxu0 %v1662
  %1687 = vmatprep.subr.mxu0 0.0
  %1688 = vmatpush1.msra.mxu0 %v1661
  %1689 = vmatprep.subr.mxu0 0.0
  %1690 = vmatpush1.msra.mxu0 %v1660
  %1691 = vmatprep.subr.mxu0 0.0
  %1692 = vmatpush1.msra.mxu0 %v1659
  %1693 = vmatprep.subr.mxu0 0.0
  %1694 = vmatpush1.msra.mxu0 %v1658
  %1695 = vmatprep.subr.mxu0 0.0
  %1696 = vmatpush1.msra.mxu0 %v1657
  %1697 = vmatprep.subr.mxu0 0.0
  %1698 = vmatpush2.msra.mxu0 0.0
  %1699 = vmatprep.subr.mxu0 0.0
  %1700 = vmatpush2.msra.mxu0 0.0
  %1701 = vmatprep.subr.mxu0 0.0
  %1702 = vmatpush2.msra.mxu0 0.0
  %1703 = vmatprep.subr.mxu0 0.0
  %1704 = vmatpush2.msra.mxu0 0.0
  %1705 = vmatprep.subr.mxu0 0.0
  %1706 = vmatpush2.msra.mxu0 0.0
  %1707 = vmatprep.subr.mxu0 0.0
  %1708 = vmatpush2.msra.mxu0 0.0
  %1709 = vmatprep.subr.mxu0 0.0
  %1710 = vmatpush2.msra.mxu0 0.0
  %1711 = vmatprep.subr.mxu0 0.0
  %1712 = vmatpush2.msra.mxu0 0.0
  %1713 = vmatprep.subr.mxu0 0.0
  %1714 = vmatpush2.msra.mxu0 0.0
  %1715 = vmatprep.subr.mxu0 0.0
  %1716 = vmatpush2.msra.mxu0 0.0
  %1717 = vmatprep.subr.mxu0 0.0
  %1718 = vmatpush2.msra.mxu0 0.0
  %1719 = vmatprep.subr.mxu0 0.0
  %1720 = vmatpush2.msra.mxu0 0.0
  %1721 = vmatprep.subr.mxu0 0.0
  %1722 = vmatpush2.msra.mxu0 0.0
  %1723 = vmatprep.subr.mxu0 0.0
  %1724 = vmatpush2.msra.mxu0 0.0
  %1725 = vmatprep.subr.mxu0 0.0
  %1726 = vmatpush2.msra.mxu0 0.0
  %1727 = vmatprep.subr.mxu0 0.0
  %1728 = vmatpush2.msra.mxu0 0.0
  %1729 = vmatprep.mubr.f32.mxu0 0.0
  %1730 = vmatmul.mubr.f32.gmra.mxu0 %v1156
  %v1731 = vpop.f32.mrf.mxu0
  %v1732 = vadd.f32 0.0, %v1731
  %v1733 = vpop.f32.mrf.mxu0
  %1734 = vmatprep.mubr.f32.mxu0 0.0
  %1735 = vmatmul.mubr.f32.gmra.mxu0 %v1159
  %v1736 = vpop.f32.mrf.mxu0
  %v1737 = vadd.f32 0.0, %v1736
  %v1738 = vpop.f32.mrf.mxu0
  %1739 = vdwg.mxu0
  %s1740 = scalar_lea.vmem %s2, 448
  %v1741 = vld [vmem:[%s1740] sm:$0xff]
  %v1742 = vld [vmem:[%s1740 + $0x8] sm:$0xff]
  %v1743 = vld [vmem:[%s1740 + $0x10] sm:$0xff]
  %v1744 = vld [vmem:[%s1740 + $0x18] sm:$0xff]
  %v1745 = vld [vmem:[%s1740 + $0x20] sm:$0xff]
  %v1746 = vld [vmem:[%s1740 + $0x28] sm:$0xff]
  %v1747 = vld [vmem:[%s1740 + $0x30] sm:$0xff]
  %v1748 = vld [vmem:[%s1740 + $0x38] sm:$0xff]
  %1749 = vmatprep.subr.mxu0 0.0
  %1750 = vmatpush1.msra.mxu0 0.0
  %1751 = vmatprep.subr.mxu0 0.0
  %1752 = vmatpush1.msra.mxu0 0.0
  %1753 = vmatprep.subr.mxu0 0.0
  %1754 = vmatpush1.msra.mxu0 0.0
  %1755 = vmatprep.subr.mxu0 0.0
  %1756 = vmatpush1.msra.mxu0 0.0
  %1757 = vmatprep.subr.mxu0 0.0
  %1758 = vmatpush1.msra.mxu0 0.0
  %1759 = vmatprep.subr.mxu0 0.0
  %1760 = vmatpush1.msra.mxu0 0.0
  %1761 = vmatprep.subr.mxu0 0.0
  %1762 = vmatpush1.msra.mxu0 0.0
  %1763 = vmatprep.subr.mxu0 0.0
  %1764 = vmatpush1.msra.mxu0 0.0
  %1765 = vmatprep.subr.mxu0 0.0
  %1766 = vmatpush1.msra.mxu0 %v1748
  %1767 = vmatprep.subr.mxu0 0.0
  %1768 = vmatpush1.msra.mxu0 %v1747
  %1769 = vmatprep.subr.mxu0 0.0
  %1770 = vmatpush1.msra.mxu0 %v1746
  %1771 = vmatprep.subr.mxu0 0.0
  %1772 = vmatpush1.msra.mxu0 %v1745
  %1773 = vmatprep.subr.mxu0 0.0
  %1774 = vmatpush1.msra.mxu0 %v1744
  %1775 = vmatprep.subr.mxu0 0.0
  %1776 = vmatpush1.msra.mxu0 %v1743
  %1777 = vmatprep.subr.mxu0 0.0
  %1778 = vmatpush1.msra.mxu0 %v1742
  %1779 = vmatprep.subr.mxu0 0.0
  %1780 = vmatpush1.msra.mxu0 %v1741
  %1781 = vmatprep.subr.mxu0 0.0
  %1782 = vmatpush2.msra.mxu0 0.0
  %1783 = vmatprep.subr.mxu0 0.0
  %1784 = vmatpush2.msra.mxu0 0.0
  %1785 = vmatprep.subr.mxu0 0.0
  %1786 = vmatpush2.msra.mxu0 0.0
  %1787 = vmatprep.subr.mxu0 0.0
  %1788 = vmatpush2.msra.mxu0 0.0
  %1789 = vmatprep.subr.mxu0 0.0
  %1790 = vmatpush2.msra.mxu0 0.0
  %1791 = vmatprep.subr.mxu0 0.0
  %1792 = vmatpush2.msra.mxu0 0.0
  %1793 = vmatprep.subr.mxu0 0.0
  %1794 = vmatpush2.msra.mxu0 0.0
  %1795 = vmatprep.subr.mxu0 0.0
  %1796 = vmatpush2.msra.mxu0 0.0
  %1797 = vmatprep.subr.mxu0 0.0
  %1798 = vmatpush2.msra.mxu0 0.0
  %1799 = vmatprep.subr.mxu0 0.0
  %1800 = vmatpush2.msra.mxu0 0.0
  %1801 = vmatprep.subr.mxu0 0.0
  %1802 = vmatpush2.msra.mxu0 0.0
  %1803 = vmatprep.subr.mxu0 0.0
  %1804 = vmatpush2.msra.mxu0 0.0
  %1805 = vmatprep.subr.mxu0 0.0
  %1806 = vmatpush2.msra.mxu0 0.0
  %1807 = vmatprep.subr.mxu0 0.0
  %1808 = vmatpush2.msra.mxu0 0.0
  %1809 = vmatprep.subr.mxu0 0.0
  %1810 = vmatpush2.msra.mxu0 0.0
  %1811 = vmatprep.subr.mxu0 0.0
  %1812 = vmatpush2.msra.mxu0 0.0
  %1813 = vmatprep.mubr.f32.mxu0 0.0
  %1814 = vmatmul.mubr.f32.gmra.mxu0 %v1156
  %v1815 = vpop.f32.mrf.mxu0
  %v1816 = vadd.f32 0.0, %v1815
  %v1817 = vpop.f32.mrf.mxu0
  %1818 = vmatprep.mubr.f32.mxu0 0.0
  %1819 = vmatmul.mubr.f32.gmra.mxu0 %v1159
  %v1820 = vpop.f32.mrf.mxu0
  %v1821 = vadd.f32 0.0, %v1820
  %v1822 = vpop.f32.mrf.mxu0
  %1823 = vdwg.mxu0
  %s1824 = scalar_lea.vmem %s2, 512
  %v1825 = vld [vmem:[%s1824] sm:$0xff]
  %v1826 = vld [vmem:[%s1824 + $0x8] sm:$0xff]
  %v1827 = vld [vmem:[%s1824 + $0x10] sm:$0xff]
  %v1828 = vld [vmem:[%s1824 + $0x18] sm:$0xff]
  %v1829 = vld [vmem:[%s1824 + $0x20] sm:$0xff]
  %v1830 = vld [vmem:[%s1824 + $0x28] sm:$0xff]
  %v1831 = vld [vmem:[%s1824 + $0x30] sm:$0xff]
  %v1832 = vld [vmem:[%s1824 + $0x38] sm:$0xff]
  %1833 = vmatprep.subr.mxu0 0.0
  %1834 = vmatpush1.msra.mxu0 0.0
  %1835 = vmatprep.subr.mxu0 0.0
  %1836 = vmatpush1.msra.mxu0 0.0
  %1837 = vmatprep.subr.mxu0 0.0
  %1838 = vmatpush1.msra.mxu0 0.0
  %1839 = vmatprep.subr.mxu0 0.0
  %1840 = vmatpush1.msra.mxu0 0.0
  %1841 = vmatprep.subr.mxu0 0.0
  %1842 = vmatpush1.msra.mxu0 0.0
  %1843 = vmatprep.subr.mxu0 0.0
  %1844 = vmatpush1.msra.mxu0 0.0
  %1845 = vmatprep.subr.mxu0 0.0
  %1846 = vmatpush1.msra.mxu0 0.0
  %1847 = vmatprep.subr.mxu0 0.0
  %1848 = vmatpush1.msra.mxu0 0.0
  %1849 = vmatprep.subr.mxu0 0.0
  %1850 = vmatpush1.msra.mxu0 %v1832
  %1851 = vmatprep.subr.mxu0 0.0
  %1852 = vmatpush1.msra.mxu0 %v1831
  %1853 = vmatprep.subr.mxu0 0.0
  %1854 = vmatpush1.msra.mxu0 %v1830
  %1855 = vmatprep.subr.mxu0 0.0
  %1856 = vmatpush1.msra.mxu0 %v1829
  %1857 = vmatprep.subr.mxu0 0.0
  %1858 = vmatpush1.msra.mxu0 %v1828
  %1859 = vmatprep.subr.mxu0 0.0
  %1860 = vmatpush1.msra.mxu0 %v1827
  %1861 = vmatprep.subr.mxu0 0.0
  %1862 = vmatpush1.msra.mxu0 %v1826
  %1863 = vmatprep.subr.mxu0 0.0
  %1864 = vmatpush1.msra.mxu0 %v1825
  %1865 = vmatprep.subr.mxu0 0.0
  %1866 = vmatpush2.msra.mxu0 0.0
  %1867 = vmatprep.subr.mxu0 0.0
  %1868 = vmatpush2.msra.mxu0 0.0
  %1869 = vmatprep.subr.mxu0 0.0
  %1870 = vmatpush2.msra.mxu0 0.0
  %1871 = vmatprep.subr.mxu0 0.0
  %1872 = vmatpush2.msra.mxu0 0.0
  %1873 = vmatprep.subr.mxu0 0.0
  %1874 = vmatpush2.msra.mxu0 0.0
  %1875 = vmatprep.subr.mxu0 0.0
  %1876 = vmatpush2.msra.mxu0 0.0
  %1877 = vmatprep.subr.mxu0 0.0
  %1878 = vmatpush2.msra.mxu0 0.0
  %1879 = vmatprep.subr.mxu0 0.0
  %1880 = vmatpush2.msra.mxu0 0.0
  %1881 = vmatprep.subr.mxu0 0.0
  %1882 = vmatpush2.msra.mxu0 0.0
  %1883 = vmatprep.subr.mxu0 0.0
  %1884 = vmatpush2.msra.mxu0 0.0
  %1885 = vmatprep.subr.mxu0 0.0
  %1886 = vmatpush2.msra.mxu0 0.0
  %1887 = vmatprep.subr.mxu0 0.0
  %1888 = vmatpush2.msra.mxu0 0.0
  %1889 = vmatprep.subr.mxu0 0.0
  %1890 = vmatpush2.msra.mxu0 0.0
  %1891 = vmatprep.subr.mxu0 0.0
  %1892 = vmatpush2.msra.mxu0 0.0
  %1893 = vmatprep.subr.mxu0 0.0
  %1894 = vmatpush2.msra.mxu0 0.0
  %1895 = vmatprep.subr.mxu0 0.0
  %1896 = vmatpush2.msra.mxu0 0.0
  %1897 = vmatprep.mubr.f32.mxu0 0.0
  %1898 = vmatmul.mubr.f32.gmra.mxu0 %v1156
  %v1899 = vpop.f32.mrf.mxu0
  %v1900 = vadd.f32 0.0, %v1899
  %v1901 = vpop.f32.mrf.mxu0
  %1902 = vmatprep.mubr.f32.mxu0 0.0
  %1903 = vmatmul.mubr.f32.gmra.mxu0 %v1159
  %v1904 = vpop.f32.mrf.mxu0
  %v1905 = vadd.f32 0.0, %v1904
  %v1906 = vpop.f32.mrf.mxu0
  %1907 = vdwg.mxu0
  %v1908 = vld [vmem:[%s3 + $0x20] sm:$0xff]
  %v1909 = vld [vmem:[%s3 + $0x28] sm:$0xff]
  %v1910 = vld [vmem:[%s3 + $0x58] sm:$0xff]
  %v1911 = vld [vmem:[%s3 + $0x60] sm:$0xff]
  %1912 = vset.pattern.permute.xlu0 7
  %1913 = vperm.xlu0 %1912, %v20
  %v1914 = vpop.permute.xlu0 %1913
  %1916 = vset.pattern.permute.xlu0 7
  %1917 = vperm.xlu0 %1916, %v21
  %v1918 = vpop.permute.xlu0 %1917
  %v1921 = vsel %vm967, %v1909, 0
  %v1924 = vsel %vm967, %v1911, 0
  %1926 = vmatprep.subr.mxu0 0.0
  %1927 = vmatpush1.msra.mxu0 %v1821
  %1928 = vmatprep.subr.mxu0 0.0
  %1929 = vmatpush1.msra.mxu0 %v1816
  %1930 = vmatprep.subr.mxu0 0.0
  %1931 = vmatpush1.msra.mxu0 %v1737
  %1932 = vmatprep.subr.mxu0 0.0
  %1933 = vmatpush1.msra.mxu0 %v1732
  %1934 = vmatprep.subr.mxu0 0.0
  %1935 = vmatpush1.msra.mxu0 %v1653
  %1936 = vmatprep.subr.mxu0 0.0
  %1937 = vmatpush1.msra.mxu0 %v1648
  %1938 = vmatprep.subr.mxu0 0.0
  %1939 = vmatpush1.msra.mxu0 %v1569
  %1940 = vmatprep.subr.mxu0 0.0
  %1941 = vmatpush1.msra.mxu0 %v1564
  %1942 = vmatprep.subr.mxu0 0.0
  %1943 = vmatpush1.msra.mxu0 %v1485
  %1944 = vmatprep.subr.mxu0 0.0
  %1945 = vmatpush1.msra.mxu0 %v1480
  %1946 = vmatprep.subr.mxu0 0.0
  %1947 = vmatpush1.msra.mxu0 %v1401
  %1948 = vmatprep.subr.mxu0 0.0
  %1949 = vmatpush1.msra.mxu0 %v1396
  %1950 = vmatprep.subr.mxu0 0.0
  %1951 = vmatpush1.msra.mxu0 %v1317
  %1952 = vmatprep.subr.mxu0 0.0
  %1953 = vmatpush1.msra.mxu0 %v1312
  %1954 = vmatprep.subr.mxu0 0.0
  %1955 = vmatpush1.msra.mxu0 %v1233
  %1956 = vmatprep.subr.mxu0 0.0
  %1957 = vmatpush1.msra.mxu0 %v1228
  %1958 = vmatprep.subr.mxu0 0.0
  %1959 = vmatpush2.msra.mxu0 0.0
  %1960 = vmatprep.subr.mxu0 0.0
  %1961 = vmatpush2.msra.mxu0 0.0
  %1962 = vmatprep.subr.mxu0 0.0
  %1963 = vmatpush2.msra.mxu0 0.0
  %1964 = vmatprep.subr.mxu0 0.0
  %1965 = vmatpush2.msra.mxu0 0.0
  %1966 = vmatprep.subr.mxu0 0.0
  %1967 = vmatpush2.msra.mxu0 0.0
  %1968 = vmatprep.subr.mxu0 0.0
  %1969 = vmatpush2.msra.mxu0 0.0
  %1970 = vmatprep.subr.mxu0 0.0
  %1971 = vmatpush2.msra.mxu0 0.0
  %1972 = vmatprep.subr.mxu0 0.0
  %1973 = vmatpush2.msra.mxu0 0.0
  %1974 = vmatprep.subr.mxu0 0.0
  %1975 = vmatpush2.msra.mxu0 0.0
  %1976 = vmatprep.subr.mxu0 0.0
  %1977 = vmatpush2.msra.mxu0 0.0
  %1978 = vmatprep.subr.mxu0 0.0
  %1979 = vmatpush2.msra.mxu0 0.0
  %1980 = vmatprep.subr.mxu0 0.0
  %1981 = vmatpush2.msra.mxu0 0.0
  %1982 = vmatprep.subr.mxu0 0.0
  %1983 = vmatpush2.msra.mxu0 0.0
  %1984 = vmatprep.subr.mxu0 0.0
  %1985 = vmatpush2.msra.mxu0 0.0
  %1986 = vmatprep.subr.mxu0 0.0
  %1987 = vmatpush2.msra.mxu0 %v1905
  %1988 = vmatprep.subr.mxu0 0.0
  %1989 = vmatpush2.msra.mxu0 %v1900
  %1990 = vmatprep.mubr.f32.mxu0 %v1921
  %1991 = vmatmul.mubr.f32.gmra.mxu0 %v1908
  %v1992 = vpop.f32.mrf.mxu0
  %v1993 = vadd.f32 %v1914, %v1992
  %v1994 = vpop.f32.mrf.mxu0
  %1995 = vmatprep.mubr.f32.mxu0 %v1924
  %1996 = vmatmul.mubr.f32.gmra.mxu0 %v1910
  %v1997 = vpop.f32.mrf.mxu0
  %v1998 = vadd.f32 %v1918, %v1997
  %v1999 = vpop.f32.mrf.mxu0
  %2000 = vdwg.mxu0
  %vm2001 = vcmp.ge.f32.partialorder %v1993, 0.0
  %vm2002 = vcmp.ge.f32.partialorder %v1998, 0.0
  %2003 = vset.pattern.permute.xlu0 8
  %2004 = vperm.xlu0 %2003, %v20
  %v2005 = vpop.permute.xlu0 %2004
  %2007 = vset.pattern.permute.xlu0 8
  %2008 = vperm.xlu0 %2007, %v21
  %v2009 = vpop.permute.xlu0 %2008
  %v2011 = vmul.f32 %v1993, %v2005
  %v2012 = vmul.f32 %v1998, %v2009
  %v2013 = vsel %vm2001, %v1993, %v2011
  %v2014 = vsel %vm2002, %v1998, %v2012
  %2015 = vrot.lane.b32.xlu0 %v1909, 112
  %v2016 = vpop.permute.xlu0 %2015
  %2017 = vrot.lane.b32.xlu0 %v1911, 112
  %v2018 = vpop.permute.xlu0 %2017
  %v2019 = vsel %vm967, %v2016, 0
  %v2021 = vsel %vm967, %v2018, 0
  %2023 = vmatprep.subr.mxu0 0.0
  %2024 = vmatpush1.msra.mxu0 0.0
  %2025 = vmatprep.subr.mxu0 0.0
  %2026 = vmatpush1.msra.mxu0 0.0
  %2027 = vmatprep.subr.mxu0 0.0
  %2028 = vmatpush1.msra.mxu0 0.0
  %2029 = vmatprep.subr.mxu0 0.0
  %2030 = vmatpush1.msra.mxu0 0.0
  %2031 = vmatprep.subr.mxu0 0.0
  %2032 = vmatpush1.msra.mxu0 0.0
  %2033 = vmatprep.subr.mxu0 0.0
  %2034 = vmatpush1.msra.mxu0 0.0
  %2035 = vmatprep.subr.mxu0 0.0
  %2036 = vmatpush1.msra.mxu0 0.0
  %2037 = vmatprep.subr.mxu0 0.0
  %2038 = vmatpush1.msra.mxu0 0.0
  %2039 = vmatprep.subr.mxu0 0.0
  %2040 = vmatpush1.msra.mxu0 0.0
  %2041 = vmatprep.subr.mxu0 0.0
  %2042 = vmatpush1.msra.mxu0 0.0
  %2043 = vmatprep.subr.mxu0 0.0
  %2044 = vmatpush1.msra.mxu0 0.0
  %2045 = vmatprep.subr.mxu0 0.0
  %2046 = vmatpush1.msra.mxu0 0.0
  %2047 = vmatprep.subr.mxu0 0.0
  %2048 = vmatpush1.msra.mxu0 0.0
  %2049 = vmatprep.subr.mxu0 0.0
  %2050 = vmatpush1.msra.mxu0 0.0
  %2051 = vmatprep.subr.mxu0 0.0
  %2052 = vmatpush1.msra.mxu0 %v2014
  %2053 = vmatprep.subr.mxu0 0.0
  %2054 = vmatpush1.msra.mxu0 %v2013
  %2055 = vmatprep.subr.mxu0 0.0
  %2056 = vmatpush2.msra.mxu0 0.0
  %2057 = vmatprep.subr.mxu0 0.0
  %2058 = vmatpush2.msra.mxu0 0.0
  %2059 = vmatprep.subr.mxu0 0.0
  %2060 = vmatpush2.msra.mxu0 0.0
  %2061 = vmatprep.subr.mxu0 0.0
  %2062 = vmatpush2.msra.mxu0 0.0
  %2063 = vmatprep.subr.mxu0 0.0
  %2064 = vmatpush2.msra.mxu0 0.0
  %2065 = vmatprep.subr.mxu0 0.0
  %2066 = vmatpush2.msra.mxu0 0.0
  %2067 = vmatprep.subr.mxu0 0.0
  %2068 = vmatpush2.msra.mxu0 0.0
  %2069 = vmatprep.subr.mxu0 0.0
  %2070 = vmatpush2.msra.mxu0 0.0
  %2071 = vmatprep.subr.mxu0 0.0
  %2072 = vmatpush2.msra.mxu0 0.0
  %2073 = vmatprep.subr.mxu0 0.0
  %2074 = vmatpush2.msra.mxu0 0.0
  %2075 = vmatprep.subr.mxu0 0.0
  %2076 = vmatpush2.msra.mxu0 0.0
  %2077 = vmatprep.subr.mxu0 0.0
  %2078 = vmatpush2.msra.mxu0 0.0
  %2079 = vmatprep.subr.mxu0 0.0
  %2080 = vmatpush2.msra.mxu0 0.0
  %2081 = vmatprep.subr.mxu0 0.0
  %2082 = vmatpush2.msra.mxu0 0.0
  %2083 = vmatprep.subr.mxu0 0.0
  %2084 = vmatpush2.msra.mxu0 0.0
  %2085 = vmatprep.subr.mxu0 0.0
  %2086 = vmatpush2.msra.mxu0 0.0
  %2087 = vmatprep.mubr.f32.mxu0 0.0
  %2088 = vmatmul.mubr.f32.gmra.mxu0 %v2019
  %v2089 = vpop.f32.mrf.mxu0
  %v2090 = vadd.f32 0.0, %v2089
  %v2091 = vpop.f32.mrf.mxu0
  %2092 = vmatprep.mubr.f32.mxu0 0.0
  %2093 = vmatmul.mubr.f32.gmra.mxu0 %v2021
  %v2094 = vpop.f32.mrf.mxu0
  %v2095 = vadd.f32 0.0, %v2094
  %v2096 = vpop.f32.mrf.mxu0
  %2097 = vdwg.mxu0
  %2100 = vrot.lane.b32.xlu0 %v2090, 9
  %v2101 = vpop.permute.xlu0 %2100
  %2102 = vrot.lane.b32.xlu0 %v2095, 9
  %v2103 = vpop.permute.xlu0 %2102
  %v2106 = vadd.f32 %v20, %v2101
  %v2107 = vadd.f32 %v21, %v2103
  %2108 = vrot.lane.b32.xlu0 %v1909, 96
  %v2109 = vpop.permute.xlu0 %2108
  %2110 = vrot.lane.b32.xlu0 %v1911, 96
  %v2111 = vpop.permute.xlu0 %2110
  %2114 = vrot.lane.b32.xlu0 %v2013, 127
  %v2115 = vpop.permute.xlu0 %2114
  %2116 = vrot.lane.b32.xlu0 %v2014, 127
  %v2117 = vpop.permute.xlu0 %2116
  %v2120 = vsel %vm967, %v2109, 0
  %v2122 = vsel %vm967, %v2111, 0
  %2124 = vmatprep.subr.mxu0 0.0
  %2125 = vmatpush1.msra.mxu0 0.0
  %2126 = vmatprep.subr.mxu0 0.0
  %2127 = vmatpush1.msra.mxu0 0.0
  %2128 = vmatprep.subr.mxu0 0.0
  %2129 = vmatpush1.msra.mxu0 0.0
  %2130 = vmatprep.subr.mxu0 0.0
  %2131 = vmatpush1.msra.mxu0 0.0
  %2132 = vmatprep.subr.mxu0 0.0
  %2133 = vmatpush1.msra.mxu0 0.0
  %2134 = vmatprep.subr.mxu0 0.0
  %2135 = vmatpush1.msra.mxu0 0.0
  %2136 = vmatprep.subr.mxu0 0.0
  %2137 = vmatpush1.msra.mxu0 0.0
  %2138 = vmatprep.subr.mxu0 0.0
  %2139 = vmatpush1.msra.mxu0 0.0
  %2140 = vmatprep.subr.mxu0 0.0
  %2141 = vmatpush1.msra.mxu0 0.0
  %2142 = vmatprep.subr.mxu0 0.0
  %2143 = vmatpush1.msra.mxu0 0.0
  %2144 = vmatprep.subr.mxu0 0.0
  %2145 = vmatpush1.msra.mxu0 0.0
  %2146 = vmatprep.subr.mxu0 0.0
  %2147 = vmatpush1.msra.mxu0 0.0
  %2148 = vmatprep.subr.mxu0 0.0
  %2149 = vmatpush1.msra.mxu0 0.0
  %2150 = vmatprep.subr.mxu0 0.0
  %2151 = vmatpush1.msra.mxu0 0.0
  %2152 = vmatprep.subr.mxu0 0.0
  %2153 = vmatpush1.msra.mxu0 %v2117
  %2154 = vmatprep.subr.mxu0 0.0
  %2155 = vmatpush1.msra.mxu0 %v2115
  %2156 = vmatprep.subr.mxu0 0.0
  %2157 = vmatpush2.msra.mxu0 0.0
  %2158 = vmatprep.subr.mxu0 0.0
  %2159 = vmatpush2.msra.mxu0 0.0
  %2160 = vmatprep.subr.mxu0 0.0
  %2161 = vmatpush2.msra.mxu0 0.0
  %2162 = vmatprep.subr.mxu0 0.0
  %2163 = vmatpush2.msra.mxu0 0.0
  %2164 = vmatprep.subr.mxu0 0.0
  %2165 = vmatpush2.msra.mxu0 0.0
  %2166 = vmatprep.subr.mxu0 0.0
  %2167 = vmatpush2.msra.mxu0 0.0
  %2168 = vmatprep.subr.mxu0 0.0
  %2169 = vmatpush2.msra.mxu0 0.0
  %2170 = vmatprep.subr.mxu0 0.0
  %2171 = vmatpush2.msra.mxu0 0.0
  %2172 = vmatprep.subr.mxu0 0.0
  %2173 = vmatpush2.msra.mxu0 0.0
  %2174 = vmatprep.subr.mxu0 0.0
  %2175 = vmatpush2.msra.mxu0 0.0
  %2176 = vmatprep.subr.mxu0 0.0
  %2177 = vmatpush2.msra.mxu0 0.0
  %2178 = vmatprep.subr.mxu0 0.0
  %2179 = vmatpush2.msra.mxu0 0.0
  %2180 = vmatprep.subr.mxu0 0.0
  %2181 = vmatpush2.msra.mxu0 0.0
  %2182 = vmatprep.subr.mxu0 0.0
  %2183 = vmatpush2.msra.mxu0 0.0
  %2184 = vmatprep.subr.mxu0 0.0
  %2185 = vmatpush2.msra.mxu0 0.0
  %2186 = vmatprep.subr.mxu0 0.0
  %2187 = vmatpush2.msra.mxu0 0.0
  %2188 = vmatprep.mubr.f32.mxu0 0.0
  %2189 = vmatmul.mubr.f32.gmra.mxu0 %v2120
  %v2190 = vpop.f32.mrf.mxu0
  %v2191 = vadd.f32 0.0, %v2190
  %v2192 = vpop.f32.mrf.mxu0
  %2193 = vmatprep.mubr.f32.mxu0 0.0
  %2194 = vmatmul.mubr.f32.gmra.mxu0 %v2122
  %v2195 = vpop.f32.mrf.mxu0
  %v2196 = vadd.f32 0.0, %v2195
  %v2197 = vpop.f32.mrf.mxu0
  %2198 = vdwg.mxu0
  %2201 = vrot.lane.b32.xlu0 %v2191, 9
  %v2202 = vpop.permute.xlu0 %2201
  %2203 = vrot.lane.b32.xlu0 %v2196, 9
  %v2204 = vpop.permute.xlu0 %2203
  %v2207 = vadd.f32 %v2106, %v2202
  %v2208 = vadd.f32 %v2107, %v2204
  %2209 = vrot.lane.b32.xlu0 %v1909, 80
  %v2210 = vpop.permute.xlu0 %2209
  %2211 = vrot.lane.b32.xlu0 %v1911, 80
  %v2212 = vpop.permute.xlu0 %2211
  %2213 = vrot.lane.b32.xlu0 %v2013, 126
  %v2214 = vpop.permute.xlu0 %2213
  %2215 = vrot.lane.b32.xlu0 %v2014, 126
  %v2216 = vpop.permute.xlu0 %2215
  %v2219 = vsel %vm967, %v2210, 0
  %v2221 = vsel %vm967, %v2212, 0
  %2223 = vmatprep.subr.mxu0 0.0
  %2224 = vmatpush1.msra.mxu0 0.0
  %2225 = vmatprep.subr.mxu0 0.0
  %2226 = vmatpush1.msra.mxu0 0.0
  %2227 = vmatprep.subr.mxu0 0.0
  %2228 = vmatpush1.msra.mxu0 0.0
  %2229 = vmatprep.subr.mxu0 0.0
  %2230 = vmatpush1.msra.mxu0 0.0
  %2231 = vmatprep.subr.mxu0 0.0
  %2232 = vmatpush1.msra.mxu0 0.0
  %2233 = vmatprep.subr.mxu0 0.0
  %2234 = vmatpush1.msra.mxu0 0.0
  %2235 = vmatprep.subr.mxu0 0.0
  %2236 = vmatpush1.msra.mxu0 0.0
  %2237 = vmatprep.subr.mxu0 0.0
  %2238 = vmatpush1.msra.mxu0 0.0
  %2239 = vmatprep.subr.mxu0 0.0
  %2240 = vmatpush1.msra.mxu0 0.0
  %2241 = vmatprep.subr.mxu0 0.0
  %2242 = vmatpush1.msra.mxu0 0.0
  %2243 = vmatprep.subr.mxu0 0.0
  %2244 = vmatpush1.msra.mxu0 0.0
  %2245 = vmatprep.subr.mxu0 0.0
  %2246 = vmatpush1.msra.mxu0 0.0
  %2247 = vmatprep.subr.mxu0 0.0
  %2248 = vmatpush1.msra.mxu0 0.0
  %2249 = vmatprep.subr.mxu0 0.0
  %2250 = vmatpush1.msra.mxu0 0.0
  %2251 = vmatprep.subr.mxu0 0.0
  %2252 = vmatpush1.msra.mxu0 %v2216
  %2253 = vmatprep.subr.mxu0 0.0
  %2254 = vmatpush1.msra.mxu0 %v2214
  %2255 = vmatprep.subr.mxu0 0.0
  %2256 = vmatpush2.msra.mxu0 0.0
  %2257 = vmatprep.subr.mxu0 0.0
  %2258 = vmatpush2.msra.mxu0 0.0
  %2259 = vmatprep.subr.mxu0 0.0
  %2260 = vmatpush2.msra.mxu0 0.0
  %2261 = vmatprep.subr.mxu0 0.0
  %2262 = vmatpush2.msra.mxu0 0.0
  %2263 = vmatprep.subr.mxu0 0.0
  %2264 = vmatpush2.msra.mxu0 0.0
  %2265 = vmatprep.subr.mxu0 0.0
  %2266 = vmatpush2.msra.mxu0 0.0
  %2267 = vmatprep.subr.mxu0 0.0
  %2268 = vmatpush2.msra.mxu0 0.0
  %2269 = vmatprep.subr.mxu0 0.0
  %2270 = vmatpush2.msra.mxu0 0.0
  %2271 = vmatprep.subr.mxu0 0.0
  %2272 = vmatpush2.msra.mxu0 0.0
  %2273 = vmatprep.subr.mxu0 0.0
  %2274 = vmatpush2.msra.mxu0 0.0
  %2275 = vmatprep.subr.mxu0 0.0
  %2276 = vmatpush2.msra.mxu0 0.0
  %2277 = vmatprep.subr.mxu0 0.0
  %2278 = vmatpush2.msra.mxu0 0.0
  %2279 = vmatprep.subr.mxu0 0.0
  %2280 = vmatpush2.msra.mxu0 0.0
  %2281 = vmatprep.subr.mxu0 0.0
  %2282 = vmatpush2.msra.mxu0 0.0
  %2283 = vmatprep.subr.mxu0 0.0
  %2284 = vmatpush2.msra.mxu0 0.0
  %2285 = vmatprep.subr.mxu0 0.0
  %2286 = vmatpush2.msra.mxu0 0.0
  %2287 = vmatprep.mubr.f32.mxu0 0.0
  %2288 = vmatmul.mubr.f32.gmra.mxu0 %v2219
  %v2289 = vpop.f32.mrf.mxu0
  %v2290 = vadd.f32 0.0, %v2289
  %v2291 = vpop.f32.mrf.mxu0
  %2292 = vmatprep.mubr.f32.mxu0 0.0
  %2293 = vmatmul.mubr.f32.gmra.mxu0 %v2221
  %v2294 = vpop.f32.mrf.mxu0
  %v2295 = vadd.f32 0.0, %v2294
  %v2296 = vpop.f32.mrf.mxu0
  %2297 = vdwg.mxu0
  %2300 = vrot.lane.b32.xlu0 %v2290, 9
  %v2301 = vpop.permute.xlu0 %2300
  %2302 = vrot.lane.b32.xlu0 %v2295, 9
  %v2303 = vpop.permute.xlu0 %2302
  %v2306 = vadd.f32 %v2207, %v2301
  %v2307 = vadd.f32 %v2208, %v2303
  %2308 = vrot.lane.b32.xlu0 %v1909, 64
  %v2309 = vpop.permute.xlu0 %2308
  %2310 = vrot.lane.b32.xlu0 %v1911, 64
  %v2311 = vpop.permute.xlu0 %2310
  %2312 = vrot.lane.b32.xlu0 %v2013, 125
  %v2313 = vpop.permute.xlu0 %2312
  %2314 = vrot.lane.b32.xlu0 %v2014, 125
  %v2315 = vpop.permute.xlu0 %2314
  %v2318 = vsel %vm967, %v2309, 0
  %v2320 = vsel %vm967, %v2311, 0
  %2322 = vmatprep.subr.mxu0 0.0
  %2323 = vmatpush1.msra.mxu0 0.0
  %2324 = vmatprep.subr.mxu0 0.0
  %2325 = vmatpush1.msra.mxu0 0.0
  %2326 = vmatprep.subr.mxu0 0.0
  %2327 = vmatpush1.msra.mxu0 0.0
  %2328 = vmatprep.subr.mxu0 0.0
  %2329 = vmatpush1.msra.mxu0 0.0
  %2330 = vmatprep.subr.mxu0 0.0
  %2331 = vmatpush1.msra.mxu0 0.0
  %2332 = vmatprep.subr.mxu0 0.0
  %2333 = vmatpush1.msra.mxu0 0.0
  %2334 = vmatprep.subr.mxu0 0.0
  %2335 = vmatpush1.msra.mxu0 0.0
  %2336 = vmatprep.subr.mxu0 0.0
  %2337 = vmatpush1.msra.mxu0 0.0
  %2338 = vmatprep.subr.mxu0 0.0
  %2339 = vmatpush1.msra.mxu0 0.0
  %2340 = vmatprep.subr.mxu0 0.0
  %2341 = vmatpush1.msra.mxu0 0.0
  %2342 = vmatprep.subr.mxu0 0.0
  %2343 = vmatpush1.msra.mxu0 0.0
  %2344 = vmatprep.subr.mxu0 0.0
  %2345 = vmatpush1.msra.mxu0 0.0
  %2346 = vmatprep.subr.mxu0 0.0
  %2347 = vmatpush1.msra.mxu0 0.0
  %2348 = vmatprep.subr.mxu0 0.0
  %2349 = vmatpush1.msra.mxu0 0.0
  %2350 = vmatprep.subr.mxu0 0.0
  %2351 = vmatpush1.msra.mxu0 %v2315
  %2352 = vmatprep.subr.mxu0 0.0
  %2353 = vmatpush1.msra.mxu0 %v2313
  %2354 = vmatprep.subr.mxu0 0.0
  %2355 = vmatpush2.msra.mxu0 0.0
  %2356 = vmatprep.subr.mxu0 0.0
  %2357 = vmatpush2.msra.mxu0 0.0
  %2358 = vmatprep.subr.mxu0 0.0
  %2359 = vmatpush2.msra.mxu0 0.0
  %2360 = vmatprep.subr.mxu0 0.0
  %2361 = vmatpush2.msra.mxu0 0.0
  %2362 = vmatprep.subr.mxu0 0.0
  %2363 = vmatpush2.msra.mxu0 0.0
  %2364 = vmatprep.subr.mxu0 0.0
  %2365 = vmatpush2.msra.mxu0 0.0
  %2366 = vmatprep.subr.mxu0 0.0
  %2367 = vmatpush2.msra.mxu0 0.0
  %2368 = vmatprep.subr.mxu0 0.0
  %2369 = vmatpush2.msra.mxu0 0.0
  %2370 = vmatprep.subr.mxu0 0.0
  %2371 = vmatpush2.msra.mxu0 0.0
  %2372 = vmatprep.subr.mxu0 0.0
  %2373 = vmatpush2.msra.mxu0 0.0
  %2374 = vmatprep.subr.mxu0 0.0
  %2375 = vmatpush2.msra.mxu0 0.0
  %2376 = vmatprep.subr.mxu0 0.0
  %2377 = vmatpush2.msra.mxu0 0.0
  %2378 = vmatprep.subr.mxu0 0.0
  %2379 = vmatpush2.msra.mxu0 0.0
  %2380 = vmatprep.subr.mxu0 0.0
  %2381 = vmatpush2.msra.mxu0 0.0
  %2382 = vmatprep.subr.mxu0 0.0
  %2383 = vmatpush2.msra.mxu0 0.0
  %2384 = vmatprep.subr.mxu0 0.0
  %2385 = vmatpush2.msra.mxu0 0.0
  %2386 = vmatprep.mubr.f32.mxu0 0.0
  %2387 = vmatmul.mubr.f32.gmra.mxu0 %v2318
  %v2388 = vpop.f32.mrf.mxu0
  %v2389 = vadd.f32 0.0, %v2388
  %v2390 = vpop.f32.mrf.mxu0
  %2391 = vmatprep.mubr.f32.mxu0 0.0
  %2392 = vmatmul.mubr.f32.gmra.mxu0 %v2320
  %v2393 = vpop.f32.mrf.mxu0
  %v2394 = vadd.f32 0.0, %v2393
  %v2395 = vpop.f32.mrf.mxu0
  %2396 = vdwg.mxu0
  %2399 = vrot.lane.b32.xlu0 %v2389, 9
  %v2400 = vpop.permute.xlu0 %2399
  %2401 = vrot.lane.b32.xlu0 %v2394, 9
  %v2402 = vpop.permute.xlu0 %2401
  %v2405 = vadd.f32 %v2306, %v2400
  %v2406 = vadd.f32 %v2307, %v2402
  %2407 = vrot.lane.b32.xlu0 %v1909, 48
  %v2408 = vpop.permute.xlu0 %2407
  %2409 = vrot.lane.b32.xlu0 %v1911, 48
  %v2410 = vpop.permute.xlu0 %2409
  %2411 = vrot.lane.b32.xlu0 %v2013, 124
  %v2412 = vpop.permute.xlu0 %2411
  %2413 = vrot.lane.b32.xlu0 %v2014, 124
  %v2414 = vpop.permute.xlu0 %2413
  %v2417 = vsel %vm967, %v2408, 0
  %v2419 = vsel %vm967, %v2410, 0
  %2421 = vmatprep.subr.mxu0 0.0
  %2422 = vmatpush1.msra.mxu0 0.0
  %2423 = vmatprep.subr.mxu0 0.0
  %2424 = vmatpush1.msra.mxu0 0.0
  %2425 = vmatprep.subr.mxu0 0.0
  %2426 = vmatpush1.msra.mxu0 0.0
  %2427 = vmatprep.subr.mxu0 0.0
  %2428 = vmatpush1.msra.mxu0 0.0
  %2429 = vmatprep.subr.mxu0 0.0
  %2430 = vmatpush1.msra.mxu0 0.0
  %2431 = vmatprep.subr.mxu0 0.0
  %2432 = vmatpush1.msra.mxu0 0.0
  %2433 = vmatprep.subr.mxu0 0.0
  %2434 = vmatpush1.msra.mxu0 0.0
  %2435 = vmatprep.subr.mxu0 0.0
  %2436 = vmatpush1.msra.mxu0 0.0
  %2437 = vmatprep.subr.mxu0 0.0
  %2438 = vmatpush1.msra.mxu0 0.0
  %2439 = vmatprep.subr.mxu0 0.0
  %2440 = vmatpush1.msra.mxu0 0.0
  %2441 = vmatprep.subr.mxu0 0.0
  %2442 = vmatpush1.msra.mxu0 0.0
  %2443 = vmatprep.subr.mxu0 0.0
  %2444 = vmatpush1.msra.mxu0 0.0
  %2445 = vmatprep.subr.mxu0 0.0
  %2446 = vmatpush1.msra.mxu0 0.0
  %2447 = vmatprep.subr.mxu0 0.0
  %2448 = vmatpush1.msra.mxu0 0.0
  %2449 = vmatprep.subr.mxu0 0.0
  %2450 = vmatpush1.msra.mxu0 %v2414
  %2451 = vmatprep.subr.mxu0 0.0
  %2452 = vmatpush1.msra.mxu0 %v2412
  %2453 = vmatprep.subr.mxu0 0.0
  %2454 = vmatpush2.msra.mxu0 0.0
  %2455 = vmatprep.subr.mxu0 0.0
  %2456 = vmatpush2.msra.mxu0 0.0
  %2457 = vmatprep.subr.mxu0 0.0
  %2458 = vmatpush2.msra.mxu0 0.0
  %2459 = vmatprep.subr.mxu0 0.0
  %2460 = vmatpush2.msra.mxu0 0.0
  %2461 = vmatprep.subr.mxu0 0.0
  %2462 = vmatpush2.msra.mxu0 0.0
  %2463 = vmatprep.subr.mxu0 0.0
  %2464 = vmatpush2.msra.mxu0 0.0
  %2465 = vmatprep.subr.mxu0 0.0
  %2466 = vmatpush2.msra.mxu0 0.0
  %2467 = vmatprep.subr.mxu0 0.0
  %2468 = vmatpush2.msra.mxu0 0.0
  %2469 = vmatprep.subr.mxu0 0.0
  %2470 = vmatpush2.msra.mxu0 0.0
  %2471 = vmatprep.subr.mxu0 0.0
  %2472 = vmatpush2.msra.mxu0 0.0
  %2473 = vmatprep.subr.mxu0 0.0
  %2474 = vmatpush2.msra.mxu0 0.0
  %2475 = vmatprep.subr.mxu0 0.0
  %2476 = vmatpush2.msra.mxu0 0.0
  %2477 = vmatprep.subr.mxu0 0.0
  %2478 = vmatpush2.msra.mxu0 0.0
  %2479 = vmatprep.subr.mxu0 0.0
  %2480 = vmatpush2.msra.mxu0 0.0
  %2481 = vmatprep.subr.mxu0 0.0
  %2482 = vmatpush2.msra.mxu0 0.0
  %2483 = vmatprep.subr.mxu0 0.0
  %2484 = vmatpush2.msra.mxu0 0.0
  %2485 = vmatprep.mubr.f32.mxu0 0.0
  %2486 = vmatmul.mubr.f32.gmra.mxu0 %v2417
  %v2487 = vpop.f32.mrf.mxu0
  %v2488 = vadd.f32 0.0, %v2487
  %v2489 = vpop.f32.mrf.mxu0
  %2490 = vmatprep.mubr.f32.mxu0 0.0
  %2491 = vmatmul.mubr.f32.gmra.mxu0 %v2419
  %v2492 = vpop.f32.mrf.mxu0
  %v2493 = vadd.f32 0.0, %v2492
  %v2494 = vpop.f32.mrf.mxu0
  %2495 = vdwg.mxu0
  %2498 = vrot.lane.b32.xlu0 %v2488, 9
  %v2499 = vpop.permute.xlu0 %2498
  %2500 = vrot.lane.b32.xlu0 %v2493, 9
  %v2501 = vpop.permute.xlu0 %2500
  %v2504 = vadd.f32 %v2405, %v2499
  %v2505 = vadd.f32 %v2406, %v2501
  %2506 = vrot.lane.b32.xlu0 %v1909, 32
  %v2507 = vpop.permute.xlu0 %2506
  %2508 = vrot.lane.b32.xlu0 %v1911, 32
  %v2509 = vpop.permute.xlu0 %2508
  %2510 = vrot.lane.b32.xlu0 %v2013, 123
  %v2511 = vpop.permute.xlu0 %2510
  %2512 = vrot.lane.b32.xlu0 %v2014, 123
  %v2513 = vpop.permute.xlu0 %2512
  %v2516 = vsel %vm967, %v2507, 0
  %v2518 = vsel %vm967, %v2509, 0
  %2520 = vmatprep.subr.mxu0 0.0
  %2521 = vmatpush1.msra.mxu0 0.0
  %2522 = vmatprep.subr.mxu0 0.0
  %2523 = vmatpush1.msra.mxu0 0.0
  %2524 = vmatprep.subr.mxu0 0.0
  %2525 = vmatpush1.msra.mxu0 0.0
  %2526 = vmatprep.subr.mxu0 0.0
  %2527 = vmatpush1.msra.mxu0 0.0
  %2528 = vmatprep.subr.mxu0 0.0
  %2529 = vmatpush1.msra.mxu0 0.0
  %2530 = vmatprep.subr.mxu0 0.0
  %2531 = vmatpush1.msra.mxu0 0.0
  %2532 = vmatprep.subr.mxu0 0.0
  %2533 = vmatpush1.msra.mxu0 0.0
  %2534 = vmatprep.subr.mxu0 0.0
  %2535 = vmatpush1.msra.mxu0 0.0
  %2536 = vmatprep.subr.mxu0 0.0
  %2537 = vmatpush1.msra.mxu0 0.0
  %2538 = vmatprep.subr.mxu0 0.0
  %2539 = vmatpush1.msra.mxu0 0.0
  %2540 = vmatprep.subr.mxu0 0.0
  %2541 = vmatpush1.msra.mxu0 0.0
  %2542 = vmatprep.subr.mxu0 0.0
  %2543 = vmatpush1.msra.mxu0 0.0
  %2544 = vmatprep.subr.mxu0 0.0
  %2545 = vmatpush1.msra.mxu0 0.0
  %2546 = vmatprep.subr.mxu0 0.0
  %2547 = vmatpush1.msra.mxu0 0.0
  %2548 = vmatprep.subr.mxu0 0.0
  %2549 = vmatpush1.msra.mxu0 %v2513
  %2550 = vmatprep.subr.mxu0 0.0
  %2551 = vmatpush1.msra.mxu0 %v2511
  %2552 = vmatprep.subr.mxu0 0.0
  %2553 = vmatpush2.msra.mxu0 0.0
  %2554 = vmatprep.subr.mxu0 0.0
  %2555 = vmatpush2.msra.mxu0 0.0
  %2556 = vmatprep.subr.mxu0 0.0
  %2557 = vmatpush2.msra.mxu0 0.0
  %2558 = vmatprep.subr.mxu0 0.0
  %2559 = vmatpush2.msra.mxu0 0.0
  %2560 = vmatprep.subr.mxu0 0.0
  %2561 = vmatpush2.msra.mxu0 0.0
  %2562 = vmatprep.subr.mxu0 0.0
  %2563 = vmatpush2.msra.mxu0 0.0
  %2564 = vmatprep.subr.mxu0 0.0
  %2565 = vmatpush2.msra.mxu0 0.0
  %2566 = vmatprep.subr.mxu0 0.0
  %2567 = vmatpush2.msra.mxu0 0.0
  %2568 = vmatprep.subr.mxu0 0.0
  %2569 = vmatpush2.msra.mxu0 0.0
  %2570 = vmatprep.subr.mxu0 0.0
  %2571 = vmatpush2.msra.mxu0 0.0
  %2572 = vmatprep.subr.mxu0 0.0
  %2573 = vmatpush2.msra.mxu0 0.0
  %2574 = vmatprep.subr.mxu0 0.0
  %2575 = vmatpush2.msra.mxu0 0.0
  %2576 = vmatprep.subr.mxu0 0.0
  %2577 = vmatpush2.msra.mxu0 0.0
  %2578 = vmatprep.subr.mxu0 0.0
  %2579 = vmatpush2.msra.mxu0 0.0
  %2580 = vmatprep.subr.mxu0 0.0
  %2581 = vmatpush2.msra.mxu0 0.0
  %2582 = vmatprep.subr.mxu0 0.0
  %2583 = vmatpush2.msra.mxu0 0.0
  %2584 = vmatprep.mubr.f32.mxu0 0.0
  %2585 = vmatmul.mubr.f32.gmra.mxu0 %v2516
  %v2586 = vpop.f32.mrf.mxu0
  %v2587 = vadd.f32 0.0, %v2586
  %v2588 = vpop.f32.mrf.mxu0
  %2589 = vmatprep.mubr.f32.mxu0 0.0
  %2590 = vmatmul.mubr.f32.gmra.mxu0 %v2518
  %v2591 = vpop.f32.mrf.mxu0
  %v2592 = vadd.f32 0.0, %v2591
  %v2593 = vpop.f32.mrf.mxu0
  %2594 = vdwg.mxu0
  %2597 = vrot.lane.b32.xlu0 %v2587, 9
  %v2598 = vpop.permute.xlu0 %2597
  %2599 = vrot.lane.b32.xlu0 %v2592, 9
  %v2600 = vpop.permute.xlu0 %2599
  %v2603 = vadd.f32 %v2504, %v2598
  %v2604 = vadd.f32 %v2505, %v2600
  %2605 = vrot.lane.b32.xlu0 %v1909, 16
  %v2606 = vpop.permute.xlu0 %2605
  %2607 = vrot.lane.b32.xlu0 %v1911, 16
  %v2608 = vpop.permute.xlu0 %2607
  %2609 = vrot.lane.b32.xlu0 %v2013, 122
  %v2610 = vpop.permute.xlu0 %2609
  %2611 = vrot.lane.b32.xlu0 %v2014, 122
  %v2612 = vpop.permute.xlu0 %2611
  %v2615 = vsel %vm967, %v2606, 0
  %v2617 = vsel %vm967, %v2608, 0
  %2619 = vmatprep.subr.mxu0 0.0
  %2620 = vmatpush1.msra.mxu0 0.0
  %2621 = vmatprep.subr.mxu0 0.0
  %2622 = vmatpush1.msra.mxu0 0.0
  %2623 = vmatprep.subr.mxu0 0.0
  %2624 = vmatpush1.msra.mxu0 0.0
  %2625 = vmatprep.subr.mxu0 0.0
  %2626 = vmatpush1.msra.mxu0 0.0
  %2627 = vmatprep.subr.mxu0 0.0
  %2628 = vmatpush1.msra.mxu0 0.0
  %2629 = vmatprep.subr.mxu0 0.0
  %2630 = vmatpush1.msra.mxu0 0.0
  %2631 = vmatprep.subr.mxu0 0.0
  %2632 = vmatpush1.msra.mxu0 0.0
  %2633 = vmatprep.subr.mxu0 0.0
  %2634 = vmatpush1.msra.mxu0 0.0
  %2635 = vmatprep.subr.mxu0 0.0
  %2636 = vmatpush1.msra.mxu0 0.0
  %2637 = vmatprep.subr.mxu0 0.0
  %2638 = vmatpush1.msra.mxu0 0.0
  %2639 = vmatprep.subr.mxu0 0.0
  %2640 = vmatpush1.msra.mxu0 0.0
  %2641 = vmatprep.subr.mxu0 0.0
  %2642 = vmatpush1.msra.mxu0 0.0
  %2643 = vmatprep.subr.mxu0 0.0
  %2644 = vmatpush1.msra.mxu0 0.0
  %2645 = vmatprep.subr.mxu0 0.0
  %2646 = vmatpush1.msra.mxu0 0.0
  %2647 = vmatprep.subr.mxu0 0.0
  %2648 = vmatpush1.msra.mxu0 %v2612
  %2649 = vmatprep.subr.mxu0 0.0
  %2650 = vmatpush1.msra.mxu0 %v2610
  %2651 = vmatprep.subr.mxu0 0.0
  %2652 = vmatpush2.msra.mxu0 0.0
  %2653 = vmatprep.subr.mxu0 0.0
  %2654 = vmatpush2.msra.mxu0 0.0
  %2655 = vmatprep.subr.mxu0 0.0
  %2656 = vmatpush2.msra.mxu0 0.0
  %2657 = vmatprep.subr.mxu0 0.0
  %2658 = vmatpush2.msra.mxu0 0.0
  %2659 = vmatprep.subr.mxu0 0.0
  %2660 = vmatpush2.msra.mxu0 0.0
  %2661 = vmatprep.subr.mxu0 0.0
  %2662 = vmatpush2.msra.mxu0 0.0
  %2663 = vmatprep.subr.mxu0 0.0
  %2664 = vmatpush2.msra.mxu0 0.0
  %2665 = vmatprep.subr.mxu0 0.0
  %2666 = vmatpush2.msra.mxu0 0.0
  %2667 = vmatprep.subr.mxu0 0.0
  %2668 = vmatpush2.msra.mxu0 0.0
  %2669 = vmatprep.subr.mxu0 0.0
  %2670 = vmatpush2.msra.mxu0 0.0
  %2671 = vmatprep.subr.mxu0 0.0
  %2672 = vmatpush2.msra.mxu0 0.0
  %2673 = vmatprep.subr.mxu0 0.0
  %2674 = vmatpush2.msra.mxu0 0.0
  %2675 = vmatprep.subr.mxu0 0.0
  %2676 = vmatpush2.msra.mxu0 0.0
  %2677 = vmatprep.subr.mxu0 0.0
  %2678 = vmatpush2.msra.mxu0 0.0
  %2679 = vmatprep.subr.mxu0 0.0
  %2680 = vmatpush2.msra.mxu0 0.0
  %2681 = vmatprep.subr.mxu0 0.0
  %2682 = vmatpush2.msra.mxu0 0.0
  %2683 = vmatprep.mubr.f32.mxu0 0.0
  %2684 = vmatmul.mubr.f32.gmra.mxu0 %v2615
  %v2685 = vpop.f32.mrf.mxu0
  %v2686 = vadd.f32 0.0, %v2685
  %v2687 = vpop.f32.mrf.mxu0
  %2688 = vmatprep.mubr.f32.mxu0 0.0
  %2689 = vmatmul.mubr.f32.gmra.mxu0 %v2617
  %v2690 = vpop.f32.mrf.mxu0
  %v2691 = vadd.f32 0.0, %v2690
  %v2692 = vpop.f32.mrf.mxu0
  %2693 = vdwg.mxu0
  %2696 = vrot.lane.b32.xlu0 %v2686, 9
  %v2697 = vpop.permute.xlu0 %2696
  %2698 = vrot.lane.b32.xlu0 %v2691, 9
  %v2699 = vpop.permute.xlu0 %2698
  %v2702 = vadd.f32 %v2603, %v2697
  %v2703 = vadd.f32 %v2604, %v2699
  %v2704 = vld [vmem:[%s3 + $0x30] sm:$0xff]
  %v2705 = vld [vmem:[%s3 + $0x68] sm:$0xff]
  %2706 = vrot.lane.b32.xlu0 %v2013, 121
  %v2707 = vpop.permute.xlu0 %2706
  %2708 = vrot.lane.b32.xlu0 %v2014, 121
  %v2709 = vpop.permute.xlu0 %2708
  %v2713 = vsel %vm967, %v2704, 0
  %v2716 = vsel %vm967, %v2705, 0
  %2718 = vmatprep.subr.mxu0 0.0
  %2719 = vmatpush1.msra.mxu0 0.0
  %2720 = vmatprep.subr.mxu0 0.0
  %2721 = vmatpush1.msra.mxu0 0.0
  %2722 = vmatprep.subr.mxu0 0.0
  %2723 = vmatpush1.msra.mxu0 0.0
  %2724 = vmatprep.subr.mxu0 0.0
  %2725 = vmatpush1.msra.mxu0 0.0
  %2726 = vmatprep.subr.mxu0 0.0
  %2727 = vmatpush1.msra.mxu0 0.0
  %2728 = vmatprep.subr.mxu0 0.0
  %2729 = vmatpush1.msra.mxu0 0.0
  %2730 = vmatprep.subr.mxu0 0.0
  %2731 = vmatpush1.msra.mxu0 0.0
  %2732 = vmatprep.subr.mxu0 0.0
  %2733 = vmatpush1.msra.mxu0 0.0
  %2734 = vmatprep.subr.mxu0 0.0
  %2735 = vmatpush1.msra.mxu0 0.0
  %2736 = vmatprep.subr.mxu0 0.0
  %2737 = vmatpush1.msra.mxu0 0.0
  %2738 = vmatprep.subr.mxu0 0.0
  %2739 = vmatpush1.msra.mxu0 0.0
  %2740 = vmatprep.subr.mxu0 0.0
  %2741 = vmatpush1.msra.mxu0 0.0
  %2742 = vmatprep.subr.mxu0 0.0
  %2743 = vmatpush1.msra.mxu0 0.0
  %2744 = vmatprep.subr.mxu0 0.0
  %2745 = vmatpush1.msra.mxu0 0.0
  %2746 = vmatprep.subr.mxu0 0.0
  %2747 = vmatpush1.msra.mxu0 %v2709
  %2748 = vmatprep.subr.mxu0 0.0
  %2749 = vmatpush1.msra.mxu0 %v2707
  %2750 = vmatprep.subr.mxu0 0.0
  %2751 = vmatpush2.msra.mxu0 0.0
  %2752 = vmatprep.subr.mxu0 0.0
  %2753 = vmatpush2.msra.mxu0 0.0
  %2754 = vmatprep.subr.mxu0 0.0
  %2755 = vmatpush2.msra.mxu0 0.0
  %2756 = vmatprep.subr.mxu0 0.0
  %2757 = vmatpush2.msra.mxu0 0.0
  %2758 = vmatprep.subr.mxu0 0.0
  %2759 = vmatpush2.msra.mxu0 0.0
  %2760 = vmatprep.subr.mxu0 0.0
  %2761 = vmatpush2.msra.mxu0 0.0
  %2762 = vmatprep.subr.mxu0 0.0
  %2763 = vmatpush2.msra.mxu0 0.0
  %2764 = vmatprep.subr.mxu0 0.0
  %2765 = vmatpush2.msra.mxu0 0.0
  %2766 = vmatprep.subr.mxu0 0.0
  %2767 = vmatpush2.msra.mxu0 0.0
  %2768 = vmatprep.subr.mxu0 0.0
  %2769 = vmatpush2.msra.mxu0 0.0
  %2770 = vmatprep.subr.mxu0 0.0
  %2771 = vmatpush2.msra.mxu0 0.0
  %2772 = vmatprep.subr.mxu0 0.0
  %2773 = vmatpush2.msra.mxu0 0.0
  %2774 = vmatprep.subr.mxu0 0.0
  %2775 = vmatpush2.msra.mxu0 0.0
  %2776 = vmatprep.subr.mxu0 0.0
  %2777 = vmatpush2.msra.mxu0 0.0
  %2778 = vmatprep.subr.mxu0 0.0
  %2779 = vmatpush2.msra.mxu0 0.0
  %2780 = vmatprep.subr.mxu0 0.0
  %2781 = vmatpush2.msra.mxu0 0.0
  %2782 = vmatprep.mubr.f32.mxu0 0.0
  %2783 = vmatmul.mubr.f32.gmra.mxu0 %v2713
  %v2784 = vpop.f32.mrf.mxu0
  %v2785 = vadd.f32 0.0, %v2784
  %v2786 = vpop.f32.mrf.mxu0
  %2787 = vmatprep.mubr.f32.mxu0 0.0
  %2788 = vmatmul.mubr.f32.gmra.mxu0 %v2716
  %v2789 = vpop.f32.mrf.mxu0
  %v2790 = vadd.f32 0.0, %v2789
  %v2791 = vpop.f32.mrf.mxu0
  %2792 = vdwg.mxu0
  %2795 = vrot.lane.b32.xlu0 %v2785, 9
  %v2796 = vpop.permute.xlu0 %2795
  %2797 = vrot.lane.b32.xlu0 %v2790, 9
  %v2798 = vpop.permute.xlu0 %2797
  %v2801 = vadd.f32 %v2702, %v2796
  %v2802 = vadd.f32 %v2703, %v2798
  %2803 = vrot.lane.b32.xlu0 %v2704, 112
  %v2804 = vpop.permute.xlu0 %2803
  %2805 = vrot.lane.b32.xlu0 %v2705, 112
  %v2806 = vpop.permute.xlu0 %2805
  %2807 = vrot.lane.b32.xlu0 %v2013, 120
  %v2808 = vpop.permute.xlu0 %2807
  %2809 = vrot.lane.b32.xlu0 %v2014, 120
  %v2810 = vpop.permute.xlu0 %2809
  %v2813 = vsel %vm967, %v2804, 0
  %v2815 = vsel %vm967, %v2806, 0
  %2817 = vmatprep.subr.mxu0 0.0
  %2818 = vmatpush1.msra.mxu0 0.0
  %2819 = vmatprep.subr.mxu0 0.0
  %2820 = vmatpush1.msra.mxu0 0.0
  %2821 = vmatprep.subr.mxu0 0.0
  %2822 = vmatpush1.msra.mxu0 0.0
  %2823 = vmatprep.subr.mxu0 0.0
  %2824 = vmatpush1.msra.mxu0 0.0
  %2825 = vmatprep.subr.mxu0 0.0
  %2826 = vmatpush1.msra.mxu0 0.0
  %2827 = vmatprep.subr.mxu0 0.0
  %2828 = vmatpush1.msra.mxu0 0.0
  %2829 = vmatprep.subr.mxu0 0.0
  %2830 = vmatpush1.msra.mxu0 0.0
  %2831 = vmatprep.subr.mxu0 0.0
  %2832 = vmatpush1.msra.mxu0 0.0
  %2833 = vmatprep.subr.mxu0 0.0
  %2834 = vmatpush1.msra.mxu0 0.0
  %2835 = vmatprep.subr.mxu0 0.0
  %2836 = vmatpush1.msra.mxu0 0.0
  %2837 = vmatprep.subr.mxu0 0.0
  %2838 = vmatpush1.msra.mxu0 0.0
  %2839 = vmatprep.subr.mxu0 0.0
  %2840 = vmatpush1.msra.mxu0 0.0
  %2841 = vmatprep.subr.mxu0 0.0
  %2842 = vmatpush1.msra.mxu0 0.0
  %2843 = vmatprep.subr.mxu0 0.0
  %2844 = vmatpush1.msra.mxu0 0.0
  %2845 = vmatprep.subr.mxu0 0.0
  %2846 = vmatpush1.msra.mxu0 %v2810
  %2847 = vmatprep.subr.mxu0 0.0
  %2848 = vmatpush1.msra.mxu0 %v2808
  %2849 = vmatprep.subr.mxu0 0.0
  %2850 = vmatpush2.msra.mxu0 0.0
  %2851 = vmatprep.subr.mxu0 0.0
  %2852 = vmatpush2.msra.mxu0 0.0
  %2853 = vmatprep.subr.mxu0 0.0
  %2854 = vmatpush2.msra.mxu0 0.0
  %2855 = vmatprep.subr.mxu0 0.0
  %2856 = vmatpush2.msra.mxu0 0.0
  %2857 = vmatprep.subr.mxu0 0.0
  %2858 = vmatpush2.msra.mxu0 0.0
  %2859 = vmatprep.subr.mxu0 0.0
  %2860 = vmatpush2.msra.mxu0 0.0
  %2861 = vmatprep.subr.mxu0 0.0
  %2862 = vmatpush2.msra.mxu0 0.0
  %2863 = vmatprep.subr.mxu0 0.0
  %2864 = vmatpush2.msra.mxu0 0.0
  %2865 = vmatprep.subr.mxu0 0.0
  %2866 = vmatpush2.msra.mxu0 0.0
  %2867 = vmatprep.subr.mxu0 0.0
  %2868 = vmatpush2.msra.mxu0 0.0
  %2869 = vmatprep.subr.mxu0 0.0
  %2870 = vmatpush2.msra.mxu0 0.0
  %2871 = vmatprep.subr.mxu0 0.0
  %2872 = vmatpush2.msra.mxu0 0.0
  %2873 = vmatprep.subr.mxu0 0.0
  %2874 = vmatpush2.msra.mxu0 0.0
  %2875 = vmatprep.subr.mxu0 0.0
  %2876 = vmatpush2.msra.mxu0 0.0
  %2877 = vmatprep.subr.mxu0 0.0
  %2878 = vmatpush2.msra.mxu0 0.0
  %2879 = vmatprep.subr.mxu0 0.0
  %2880 = vmatpush2.msra.mxu0 0.0
  %2881 = vmatprep.mubr.f32.mxu0 0.0
  %2882 = vmatmul.mubr.f32.gmra.mxu0 %v2813
  %v2883 = vpop.f32.mrf.mxu0
  %v2884 = vadd.f32 0.0, %v2883
  %v2885 = vpop.f32.mrf.mxu0
  %2886 = vmatprep.mubr.f32.mxu0 0.0
  %2887 = vmatmul.mubr.f32.gmra.mxu0 %v2815
  %v2888 = vpop.f32.mrf.mxu0
  %v2889 = vadd.f32 0.0, %v2888
  %v2890 = vpop.f32.mrf.mxu0
  %2891 = vdwg.mxu0
  %2894 = vrot.lane.b32.xlu0 %v2884, 9
  %v2895 = vpop.permute.xlu0 %2894
  %2896 = vrot.lane.b32.xlu0 %v2889, 9
  %v2897 = vpop.permute.xlu0 %2896
  %v2900 = vadd.f32 %v2801, %v2895
  %v2901 = vadd.f32 %v2802, %v2897
  %vm2902 = vcmp.ge.f32.partialorder %v2900, 0.0
  %vm2903 = vcmp.ge.f32.partialorder %v2901, 0.0
  %2904 = vrot.lane.b32.xlu0 %v20, 127
  %v2905 = vpop.permute.xlu0 %2904
  %2906 = vrot.lane.b32.xlu0 %v21, 127
  %v2907 = vpop.permute.xlu0 %2906
  %v2910 = vmul.f32 %v2900, %v2905
  %v2911 = vmul.f32 %v2901, %v2907
  %v2912 = vsel %vm2902, %v2900, %v2910
  %v2913 = vsel %vm2903, %v2901, %v2911
  %2914 = vrot.lane.b32.xlu0 %v123, 104
  %v2915 = vpop.permute.xlu0 %2914
  %2916 = vrot.lane.b32.xlu0 %v124, 104
  %v2917 = vpop.permute.xlu0 %2916
  %2920 = vrot.lane.b32.xlu0 %v2912, 119
  %v2921 = vpop.permute.xlu0 %2920
  %2922 = vrot.lane.b32.xlu0 %v2913, 119
  %v2923 = vpop.permute.xlu0 %2922
  %2926 = vrot.lane.b32.xlu0 %v20, 117
  %v2927 = vpop.permute.xlu0 %2926
  %2928 = vrot.lane.b32.xlu0 %v21, 117
  %v2929 = vpop.permute.xlu0 %2928
  %v2932 = vsel %vm967, %v2915, 0
  %v2934 = vsel %vm967, %v2917, 0
  %2936 = vmatprep.subr.mxu0 0.0
  %2937 = vmatpush1.msra.mxu0 0.0
  %2938 = vmatprep.subr.mxu0 0.0
  %2939 = vmatpush1.msra.mxu0 0.0
  %2940 = vmatprep.subr.mxu0 0.0
  %2941 = vmatpush1.msra.mxu0 0.0
  %2942 = vmatprep.subr.mxu0 0.0
  %2943 = vmatpush1.msra.mxu0 0.0
  %2944 = vmatprep.subr.mxu0 0.0
  %2945 = vmatpush1.msra.mxu0 0.0
  %2946 = vmatprep.subr.mxu0 0.0
  %2947 = vmatpush1.msra.mxu0 0.0
  %2948 = vmatprep.subr.mxu0 0.0
  %2949 = vmatpush1.msra.mxu0 0.0
  %2950 = vmatprep.subr.mxu0 0.0
  %2951 = vmatpush1.msra.mxu0 0.0
  %2952 = vmatprep.subr.mxu0 0.0
  %2953 = vmatpush1.msra.mxu0 0.0
  %2954 = vmatprep.subr.mxu0 0.0
  %2955 = vmatpush1.msra.mxu0 0.0
  %2956 = vmatprep.subr.mxu0 0.0
  %2957 = vmatpush1.msra.mxu0 0.0
  %2958 = vmatprep.subr.mxu0 0.0
  %2959 = vmatpush1.msra.mxu0 0.0
  %2960 = vmatprep.subr.mxu0 0.0
  %2961 = vmatpush1.msra.mxu0 0.0
  %2962 = vmatprep.subr.mxu0 0.0
  %2963 = vmatpush1.msra.mxu0 0.0
  %2964 = vmatprep.subr.mxu0 0.0
  %2965 = vmatpush1.msra.mxu0 %v2923
  %2966 = vmatprep.subr.mxu0 0.0
  %2967 = vmatpush1.msra.mxu0 %v2921
  %2968 = vmatprep.subr.mxu0 0.0
  %2969 = vmatpush2.msra.mxu0 0.0
  %2970 = vmatprep.subr.mxu0 0.0
  %2971 = vmatpush2.msra.mxu0 0.0
  %2972 = vmatprep.subr.mxu0 0.0
  %2973 = vmatpush2.msra.mxu0 0.0
  %2974 = vmatprep.subr.mxu0 0.0
  %2975 = vmatpush2.msra.mxu0 0.0
  %2976 = vmatprep.subr.mxu0 0.0
  %2977 = vmatpush2.msra.mxu0 0.0
  %2978 = vmatprep.subr.mxu0 0.0
  %2979 = vmatpush2.msra.mxu0 0.0
  %2980 = vmatprep.subr.mxu0 0.0
  %2981 = vmatpush2.msra.mxu0 0.0
  %2982 = vmatprep.subr.mxu0 0.0
  %2983 = vmatpush2.msra.mxu0 0.0
  %2984 = vmatprep.subr.mxu0 0.0
  %2985 = vmatpush2.msra.mxu0 0.0
  %2986 = vmatprep.subr.mxu0 0.0
  %2987 = vmatpush2.msra.mxu0 0.0
  %2988 = vmatprep.subr.mxu0 0.0
  %2989 = vmatpush2.msra.mxu0 0.0
  %2990 = vmatprep.subr.mxu0 0.0
  %2991 = vmatpush2.msra.mxu0 0.0
  %2992 = vmatprep.subr.mxu0 0.0
  %2993 = vmatpush2.msra.mxu0 0.0
  %2994 = vmatprep.subr.mxu0 0.0
  %2995 = vmatpush2.msra.mxu0 0.0
  %2996 = vmatprep.subr.mxu0 0.0
  %2997 = vmatpush2.msra.mxu0 0.0
  %2998 = vmatprep.subr.mxu0 0.0
  %2999 = vmatpush2.msra.mxu0 0.0
  %3000 = vmatprep.mubr.f32.mxu0 0.0
  %3001 = vmatmul.mubr.f32.gmra.mxu0 %v2932
  %v3002 = vpop.f32.mrf.mxu0
  %v3003 = vadd.f32 %v2927, %v3002
  %v3004 = vpop.f32.mrf.mxu0
  %3005 = vmatprep.mubr.f32.mxu0 0.0
  %3006 = vmatmul.mubr.f32.gmra.mxu0 %v2934
  %v3007 = vpop.f32.mrf.mxu0
  %v3008 = vadd.f32 %v2929, %v3007
  %v3009 = vpop.f32.mrf.mxu0
  %3010 = vdwg.mxu0
  %vm3011 = vcmp.ge.f32.partialorder %v3003, 0.0
  %vm3012 = vcmp.ge.f32.partialorder %v3008, 0.0
  %3013 = vrot.lane.b32.xlu0 %v20, 116
  %v3014 = vpop.permute.xlu0 %3013
  %3015 = vrot.lane.b32.xlu0 %v21, 116
  %v3016 = vpop.permute.xlu0 %3015
  %v3019 = vmul.f32 %v3003, %v3014
  %v3020 = vmul.f32 %v3008, %v3016
  %v3021 = vsel %vm3011, %v3003, %v3019
  %v3022 = vsel %vm3012, %v3008, %v3020
  %3023 = vrot.lane.b32.xlu0 %v123, 88
  %v3024 = vpop.permute.xlu0 %3023
  %3025 = vrot.lane.b32.xlu0 %v124, 88
  %v3026 = vpop.permute.xlu0 %3025
  %3027 = vrot.lane.b32.xlu0 %v20, 115
  %v3028 = vpop.permute.xlu0 %3027
  %3029 = vrot.lane.b32.xlu0 %v21, 115
  %v3030 = vpop.permute.xlu0 %3029
  %v3033 = vsel %vm967, %v3024, 0
  %v3035 = vsel %vm967, %v3026, 0
  %3037 = vmatprep.subr.mxu0 0.0
  %3038 = vmatpush1.msra.mxu0 0.0
  %3039 = vmatprep.subr.mxu0 0.0
  %3040 = vmatpush1.msra.mxu0 0.0
  %3041 = vmatprep.subr.mxu0 0.0
  %3042 = vmatpush1.msra.mxu0 0.0
  %3043 = vmatprep.subr.mxu0 0.0
  %3044 = vmatpush1.msra.mxu0 0.0
  %3045 = vmatprep.subr.mxu0 0.0
  %3046 = vmatpush1.msra.mxu0 0.0
  %3047 = vmatprep.subr.mxu0 0.0
  %3048 = vmatpush1.msra.mxu0 0.0
  %3049 = vmatprep.subr.mxu0 0.0
  %3050 = vmatpush1.msra.mxu0 0.0
  %3051 = vmatprep.subr.mxu0 0.0
  %3052 = vmatpush1.msra.mxu0 0.0
  %3053 = vmatprep.subr.mxu0 0.0
  %3054 = vmatpush1.msra.mxu0 0.0
  %3055 = vmatprep.subr.mxu0 0.0
  %3056 = vmatpush1.msra.mxu0 0.0
  %3057 = vmatprep.subr.mxu0 0.0
  %3058 = vmatpush1.msra.mxu0 0.0
  %3059 = vmatprep.subr.mxu0 0.0
  %3060 = vmatpush1.msra.mxu0 0.0
  %3061 = vmatprep.subr.mxu0 0.0
  %3062 = vmatpush1.msra.mxu0 0.0
  %3063 = vmatprep.subr.mxu0 0.0
  %3064 = vmatpush1.msra.mxu0 0.0
  %3065 = vmatprep.subr.mxu0 0.0
  %3066 = vmatpush1.msra.mxu0 %v3022
  %3067 = vmatprep.subr.mxu0 0.0
  %3068 = vmatpush1.msra.mxu0 %v3021
  %3069 = vmatprep.subr.mxu0 0.0
  %3070 = vmatpush2.msra.mxu0 0.0
  %3071 = vmatprep.subr.mxu0 0.0
  %3072 = vmatpush2.msra.mxu0 0.0
  %3073 = vmatprep.subr.mxu0 0.0
  %3074 = vmatpush2.msra.mxu0 0.0
  %3075 = vmatprep.subr.mxu0 0.0
  %3076 = vmatpush2.msra.mxu0 0.0
  %3077 = vmatprep.subr.mxu0 0.0
  %3078 = vmatpush2.msra.mxu0 0.0
  %3079 = vmatprep.subr.mxu0 0.0
  %3080 = vmatpush2.msra.mxu0 0.0
  %3081 = vmatprep.subr.mxu0 0.0
  %3082 = vmatpush2.msra.mxu0 0.0
  %3083 = vmatprep.subr.mxu0 0.0
  %3084 = vmatpush2.msra.mxu0 0.0
  %3085 = vmatprep.subr.mxu0 0.0
  %3086 = vmatpush2.msra.mxu0 0.0
  %3087 = vmatprep.subr.mxu0 0.0
  %3088 = vmatpush2.msra.mxu0 0.0
  %3089 = vmatprep.subr.mxu0 0.0
  %3090 = vmatpush2.msra.mxu0 0.0
  %3091 = vmatprep.subr.mxu0 0.0
  %3092 = vmatpush2.msra.mxu0 0.0
  %3093 = vmatprep.subr.mxu0 0.0
  %3094 = vmatpush2.msra.mxu0 0.0
  %3095 = vmatprep.subr.mxu0 0.0
  %3096 = vmatpush2.msra.mxu0 0.0
  %3097 = vmatprep.subr.mxu0 0.0
  %3098 = vmatpush2.msra.mxu0 0.0
  %3099 = vmatprep.subr.mxu0 0.0
  %3100 = vmatpush2.msra.mxu0 0.0
  %3101 = vmatprep.mubr.f32.mxu0 0.0
  %3102 = vmatmul.mubr.f32.gmra.mxu0 %v3033
  %v3103 = vpop.f32.mrf.mxu0
  %v3104 = vadd.f32 %v3028, %v3103
  %v3105 = vpop.f32.mrf.mxu0
  %3106 = vmatprep.mubr.f32.mxu0 0.0
  %3107 = vmatmul.mubr.f32.gmra.mxu0 %v3035
  %v3108 = vpop.f32.mrf.mxu0
  %v3109 = vadd.f32 %v3030, %v3108
  %v3110 = vpop.f32.mrf.mxu0
  %3111 = vdwg.mxu0
  %v3112 = vxor.u32 %v3104, 2147483648
  %v3113 = vxor.u32 %v3109, 2147483648
  %v3114 = vmul.f32 %v3112, 1.442695
  %v3115 = vpow.pop %v3114
  %v3116 = vmul.f32 %v3113, 1.442695
  %v3117 = vpow.pop %v3116
  %v3118 = vadd.f32 %v3115, 1.0
  %v3119 = vadd.f32 %v3117, 1.0
  %v3120 = vrcp.pop %v3118
  %v3121 = vmul.f32 1.0, %v3120
  %v3122 = vrcp.pop %v3119
  %v3123 = vmul.f32 1.0, %v3122
  %3125 = vset.pattern.permute.xlu0 0
  %3126 = vperm.xlu0 %3125, %v3121
  %v3127 = vpop.permute.xlu0 %3126
  %3130 = vset.pattern.permute.xlu0 0
  %3131 = vperm.xlu0 %3130, %v3123
  %v3132 = vpop.permute.xlu0 %3131
  %v3134 = vmul.f32 %v1144, %v3127
  %v3135 = vmul.f32 %v1145, %v3132
  %v3136 = vadd.f32 %v3134, %v283
  %v3137 = vadd.f32 %v3135, %v288
  %3140 = vrot.lane.b32.xlu0 %v3136, 64
  %v3141 = vpop.permute.xlu0 %3140
  %3142 = vrot.lane.b32.xlu0 %v3137, 64
  %v3143 = vpop.permute.xlu0 %3142
  %v3146 = vsel %vm1154, %v3136, %v3141
  %v3147 = vsel %vm1154, %v3137, %v3143
  %3148 = vst [vmem:[%s5] sm:$0xff] %v3146
  %3149 = vst [vmem:[%s5 + $0x8] sm:$0xff] %v3147
  // Predicated region
  $region22: #{discriminator_block_forward.1} parent=0 // pred_check
    _
  $region23: #{discriminator_block_forward.1} parent=0 // pred_check_branch
    %3151 = sbr.rel (0) target = $region25
  $region24: #{discriminator_block_forward.1} parent=0 // pred_region
    _
  $region25: #{discriminator_block_forward.1} parent=0 // pred_fallthru
    _
  // Predicated region
  $region26: #{discriminator_block_forward.1} parent=0 // pred_check
    _
  $region27: #{discriminator_block_forward.1} parent=0 // pred_check_branch
    %3153 = sbr.rel (0) target = $region29
  $region28: #{discriminator_block_forward.1} parent=0 // pred_region
    _
  $region29: #{discriminator_block_forward.1} parent=0 // pred_fallthru
    _

</llo_original>
